<compile_context>
chip_gen: v7x
topology: tpu7x:2x2x1
jax: 0.10.0
libtpu: 0.0.40
codegen_flags: <defaults>
</compile_context>

<pallas_src>
import jax
import jax.numpy as jnp
from jax.experimental import pallas as pl
from jax.experimental.pallas import tpu as pltpu

# ----- module-consistent sizes -----
B = 2            # batch
V = 8            # views per sequence
F_IN = 500       # FCNNEncoder num_inputs
F_PAD = 512      # padded input width (lane aligned)
HID = 256        # FCNNEncoder num_hidden
EMB = 128        # FCNNEncoder num_outputs == embedding_dim
C_HID1 = 256     # concept head fc1 width
C_HID2 = 64      # concept head fc2 width
C_HID2P = 128    # padded concept head fc2 width
NUM_S = 6        # supervised concepts
NUM_US = 5       # unsupervised concepts
NUM_EX = 3       # extra tabular features (fusion=True)
T_HID = 32       # t_hidden_dim
BN_EPS = 1e-5


def _full_spec(shape):
    nd = len(shape)
    return pl.BlockSpec(shape, lambda i, _nd=nd: (0,) * _nd)


# --------------------------------------------------------------------------
# Fused kernel: both FCNN encoders (shared layer 0), masked mean pooling,
# both concept heads, adversary MLP and TModel — all in VMEM, one launch.
# --------------------------------------------------------------------------
def fused_kernel(x_ref, segm_ref, ex_ref,
                 w0c_ref, b0c_ref,
                 sw1, sw2, swo, sc1, sc2, sc3, sbias,
                 uw1, uw2, uwo, uc1, uc2, uc3, ubias,
                 a1w, a2w, a3w, a4w, t1ws, t1wus, t1wex, t2w, hbias,
                 s_out_ref, us_out_ref, discr_ref, probs_ref, logits_ref):
    f32 = jnp.float32
    bf16 = jnp.bfloat16

    x = x_ref[...]                    # (B*V, 512) bf16 (zero padded cols 500:)
    segm = segm_ref[...]              # (B, B*V) f32, mask folded in
    ex = ex_ref[...]                  # (B, NUM_EX) f32

    # --- shared layer 0 for both encoders: W0 = [W0_sc | W0_usc] ---
    t0 = jnp.dot(x, w0c_ref[...], preferred_element_type=f32) + b0c_ref[...]
    t0 = jnp.maximum(t0, 0.0)         # ReLU; BN0 is folded into fc1 of each head

    # --- masked mean pooling helpers (f32 for precision) ---
    counts = jnp.sum(segm, axis=-1, keepdims=True)                     # (B, 1)
    inv_counts = pl.reciprocal(jnp.maximum(counts, 1.0), approx=True)  # EUP slot

    def encoder_tail(t, w1, w2, wo, c1, c2, c3, bias_ref, num_c):
        b = bias_ref[...]                                              # (6, 256)
        # deep layers (BN folded into weights/biases; dropout = identity)
        h = jnp.maximum(
            jnp.dot(t.astype(bf16), w1[...], preferred_element_type=f32) + b[0:1, :], 0.0)
        h = jnp.maximum(
            jnp.dot(h.astype(bf16), w2[...], preferred_element_type=f32) + b[1:2, :], 0.0)
        enc = jnp.dot(h.astype(bf16), wo[...], preferred_element_type=f32) + b[2:3, :EMB]
        # masked mean over views: joint = sum_v mask*enc / sum_v mask
        joint = jnp.dot(segm, enc, preferred_element_type=f32) * inv_counts   # (B, EMB)
        # concept head: fc1 -> relu -> fc2 -> relu -> fc3
        g = jnp.maximum(
            jnp.dot(joint.astype(bf16), c1[...], preferred_element_type=f32) + b[3:4, :], 0.0)
        g = jnp.maximum(
            jnp.dot(g.astype(bf16), c2[...], preferred_element_type=f32) + b[4:5, :C_HID2P], 0.0)
        return jnp.dot(g, c3[...], preferred_element_type=f32) + b[5:6, :num_c]

    s_logits = encoder_tail(t0[:, :HID], sw1, sw2, swo, sc1, sc2, sc3, sbias, NUM_S)
    us_logits = encoder_tail(t0[:, HID:], uw1, uw2, uwo, uc1, uc2, uc3, ubias, NUM_US)

    s_pred = jax.nn.sigmoid(s_logits)      # sc out_activation='sigmoid'
    us_pred = jnp.tanh(us_logits)          # usc out_activation='tanh'
    s_out_ref[...] = s_pred
    us_out_ref[...] = us_pred

    hb = hbias[...]                        # (6, 32)

    # --- Adversary (discriminator) on unsupervised concepts ---
    h = jnp.maximum(jnp.dot(us_pred, a1w[...], preferred_element_type=f32) + hb[0:1, :8], 0.0)
    h = jnp.maximum(jnp.dot(h, a2w[...], preferred_element_type=f32) + hb[1:2, :12], 0.0)
    h = jnp.maximum(jnp.dot(h, a3w[...], preferred_element_type=f32) + hb[2:3, :8], 0.0)
    discr_ref[...] = jax.nn.sigmoid(
        jnp.dot(h, a4w[...], preferred_element_type=f32) + hb[3:4, :NUM_S])

    # --- TModel (norm_bottleneck folded into t1w/t1b; fusion=True) ---
    h1 = (jnp.dot(s_pred, t1ws[...], preferred_element_type=f32)
          + jnp.dot(us_pred, t1wus[...], preferred_element_type=f32)
          + jnp.dot(ex, t1wex[...], preferred_element_type=f32)
          + hb[4:5, :T_HID])
    h1 = jnp.maximum(h1, 0.0)
    logits = jnp.dot(h1, t2w[...], preferred_element_type=f32) + hb[5:6, :1]
    logits_ref[...] = logits
    probs_ref[...] = jax.nn.sigmoid(logits)


def ssmvcbm_fused_forward(images_seq, mask, ex_feat, fused_params):
    x = images_seq.reshape(B * V, F_IN).astype(jnp.float32)
    x = jnp.pad(x, ((0, 0), (0, F_PAD - F_IN))).astype(jnp.bfloat16)   # (B*V, 512)
    maskf = mask.astype(jnp.float32).reshape(1, B * V)
    seg = jnp.repeat(jnp.eye(B, dtype=jnp.float32), V, axis=1)         # (B, B*V)
    segm = seg * maskf                                                 # mask folded in

    args = (x, segm, ex_feat.astype(jnp.float32)) + tuple(fused_params)
    out_shapes = (jax.ShapeDtypeStruct((B, NUM_S), jnp.float32),
                  jax.ShapeDtypeStruct((B, NUM_US), jnp.float32),
                  jax.ShapeDtypeStruct((B, NUM_S), jnp.float32),
                  jax.ShapeDtypeStruct((B, 1), jnp.float32),
                  jax.ShapeDtypeStruct((B, 1), jnp.float32))
    out_specs = tuple(_full_spec(s.shape) for s in out_shapes)

    s_pred, us_pred, discr, probs, logits = pl.pallas_call(
        fused_kernel,
        grid=(1,),
        in_specs=[_full_spec(a.shape) for a in args],
        out_specs=out_specs,
        out_shape=out_shapes,
        compiler_params=pltpu.CompilerParams(dimension_semantics=("arbitrary",)),
    )(*args)

    s_attn_weights = None    # attention=False
    us_attn_weights = None   # usc_attention=False
    return (s_pred, us_pred, s_attn_weights, us_attn_weights, discr, probs, logits)


# --------------------------------------------------------------------------
# Parameter construction (torch-Linear-like uniform init); weights as (in,out).
# --------------------------------------------------------------------------
def _linear(key, fan_in, fan_out):
    kw, kb = jax.random.split(key)
    bound = 1.0 / (fan_in ** 0.5)
    w = jax.random.uniform(kw, (fan_in, fan_out), jnp.float32, -bound, bound)
    b = jax.random.uniform(kb, (1, fan_out), jnp.float32, -bound, bound)
    return w, b


def _bn(key, n):
    k1, k2, k3 = jax.random.split(key, 3)
    gamma = 1.0 + 0.1 * jax.random.normal(k1, (1, n), jnp.float32)
    beta = 0.1 * jax.random.normal(k2, (1, n), jnp.float32)
    rmean = 0.1 * jax.random.normal(k3, (1, n), jnp.float32)
    rvar = jnp.ones((1, n), jnp.float32)
    scale = gamma / jnp.sqrt(rvar + BN_EPS)
    shift = beta - rmean * scale
    return scale, shift


def init_cmodel_params(key, num_concepts):
    ks = jax.random.split(key, 10)
    fc0_w, fc0_b = _linear(ks[0], F_IN, HID)
    bn0_s, bn0_h = _bn(ks[1], HID)
    fc1_w, fc1_b = _linear(ks[2], HID, HID)
    bn1_s, bn1_h = _bn(ks[3], HID)
    fc2_w, fc2_b = _linear(ks[4], HID, HID)
    bn2_s, bn2_h = _bn(ks[5], HID)
    out_w, out_b = _linear(ks[6], HID, EMB)
    cfc1_w, cfc1_b = _linear(ks[7], EMB, C_HID1)
    cfc2_w, cfc2_b = _linear(ks[8], C_HID1, C_HID2)
    cfc3_w, cfc3_b = _linear(ks[9], C_HID2, num_concepts)
    return [fc0_w, fc0_b, bn0_s, bn0_h, fc1_w, fc1_b, bn1_s, bn1_h,
            fc2_w, fc2_b, bn2_s, bn2_h, out_w, out_b,
            cfc1_w, cfc1_b, cfc2_w, cfc2_b, cfc3_w, cfc3_b]


def init_head_params(key):
    ks = jax.random.split(key, 7)
    a1w, a1b = _linear(ks[0], NUM_US, 8)
    a2w, a2b = _linear(ks[1], 8, 12)
    a3w, a3b = _linear(ks[2], 12, 8)
    a4w, a4b = _linear(ks[3], 8, NUM_S)
    bn_s, bn_h = _bn(ks[4], NUM_S + NUM_US)
    t1w, t1b = _linear(ks[5], NUM_S + NUM_US + NUM_EX, T_HID)
    t2w, t2b = _linear(ks[6], T_HID, 1)
    bns_s, bns_us = bn_s[:, :NUM_S], bn_s[:, NUM_S:]
    bnh_s, bnh_us = bn_h[:, :NUM_S], bn_h[:, NUM_S:]
    t1w_s = t1w[:NUM_S]
    t1w_us = t1w[NUM_S:NUM_S + NUM_US]
    t1w_ex = t1w[NUM_S + NUM_US:]
    return [a1w, a1b, a2w, a2b, a3w, a3b, a4w, a4b,
            bns_s, bnh_s, bns_us, bnh_us,
            t1w_s, t1w_us, t1w_ex, t1b, t2w, t2b]


# --------------------------------------------------------------------------
# Host-side folding / packing into fused-kernel arguments.
# --------------------------------------------------------------------------
def _pad_cols(a, n):
    return jnp.pad(a, ((0, 0), (0, n - a.shape[1])))


def _pad_rows(a, n):
    return jnp.pad(a, ((0, n - a.shape[0]), (0, 0)))


def _fold_cmodel(params):
    (fc0_w, fc0_b, bn0_s, bn0_h, fc1_w, fc1_b, bn1_s, bn1_h,
     fc2_w, fc2_b, bn2_s, bn2_h, out_w, out_b,
     cfc1_w, cfc1_b, cfc2_w, cfc2_b, cfc3_w, cfc3_b) = params
    bf16 = jnp.bfloat16

    # fold each BN (applied after ReLU) into the next linear layer
    w1f = bn0_s.T * fc1_w
    b1f = fc1_b + bn0_h @ fc1_w
    w2f = bn1_s.T * fc2_w
    b2f = fc2_b + bn1_h @ fc2_w
    wof = bn2_s.T * out_w
    bof = out_b + bn2_h @ out_w

    # lane padding: fc0 input 500->512, concept-head hidden 64->128 (zeros)
    w0p = _pad_rows(fc0_w, F_PAD)                       # (512, 256)
    c2p = _pad_cols(cfc2_w, C_HID2P)                    # (256, 128)
    cb2p = _pad_cols(cfc2_b, C_HID2P)                   # (1, 128)
    c3p = _pad_rows(cfc3_w, C_HID2P)                    # (128, C)

    bias_slab = jnp.concatenate([
        b1f,                                            # row 0: (256)
        b2f,                                            # row 1: (256)
        _pad_cols(bof, C_HID1),                         # row 2: out bias (128 valid)
        cfc1_b,                                         # row 3: (256)
        _pad_cols(cb2p, C_HID1),                        # row 4: cfc2 bias (128 valid)
        _pad_cols(cfc3_b, C_HID1),                      # row 5: cfc3 bias (C valid)
    ], axis=0)                                          # (6, 256) f32

    return (w0p, fc0_b,
            w1f.astype(bf16), w2f.astype(bf16), wof.astype(bf16),
            cfc1_w.astype(bf16), c2p.astype(bf16), c3p,
            bias_slab)


def _fold_head(params):
    (a1w, a1b, a2w, a2b, a3w, a3b, a4w, a4b,
     bns_s, bnh_s, bns_us, bnh_us,
     t1w_s, t1w_us, t1w_ex, t1b, t2w, t2b) = params

    # fold the bottleneck BN into TModel fc1
    t1w_s_f = bns_s.T * t1w_s
    t1w_us_f = bns_us.T * t1w_us
    t1b_f = t1b + bnh_s @ t1w_s + bnh_us @ t1w_us

    hbias = jnp.concatenate([
        _pad_cols(a1b, T_HID),                          # row 0 (8 valid)
        _pad_cols(a2b, T_HID),                          # row 1 (12 valid)
        _pad_cols(a3b, T_HID),                          # row 2 (8 valid)
        _pad_cols(a4b, T_HID),                          # row 3 (NUM_S valid)
        t1b_f,                                          # row 4 (32)
        _pad_cols(t2b, T_HID),                          # row 5 (1 valid)
    ], axis=0)                                          # (6, 32) f32

    return (a1w, a2w, a3w, a4w, t1w_s_f, t1w_us_f, t1w_ex, t2w, hbias)


def prepare_fused_params(sc_params, usc_params, head_params):
    bf16 = jnp.bfloat16
    sc = _fold_cmodel(sc_params)
    us = _fold_cmodel(usc_params)
    head = _fold_head(head_params)

    # shared layer 0: concatenate sc/usc fc0 along the output dim -> one matmul
    w0c = jnp.concatenate([sc[0], us[0]], axis=1).astype(bf16)   # (512, 512)
    b0c = jnp.concatenate([sc[1], us[1]], axis=1)                # (1, 512) f32

    return (w0c, b0c) + sc[2:] + us[2:] + head


# --------------------------------------------------------------------------
if __name__ == "__main__":
    key = jax.random.PRNGKey(0)
    k_imgs, k_ex, k_sc, k_usc, k_head = jax.random.split(key, 5)

    images_seq = jax.random.normal(k_imgs, (B, V, F_IN), jnp.float32)
    lengths = jnp.array([V, 5], dtype=jnp.int32)                 # batch 1 is padded
    mask = jnp.arange(V)[None, :] < lengths[:, None]             # (B, V) bool
    ex_feat = jax.random.normal(k_ex, (B, NUM_EX), jnp.float32)

    sc_params = init_cmodel_params(k_sc, NUM_S)
    usc_params = init_cmodel_params(k_usc, NUM_US)
    head_params = init_head_params(k_head)
    fused = prepare_fused_params(sc_params, usc_params, head_params)

    outs = ssmvcbm_fused_forward(images_seq, mask, ex_feat, fused)
    jax.block_until_ready([o for o in outs if o is not None])
    print("KERNEL_OK")
</pallas_src>

<mosaic_0001>
module attributes {stable_mosaic.version = 11 : i64} {
  func.func @fused_kernel(%arg0: i32, %arg1: memref<16x512xbf16, #tpu.memory_space<vmem>>, %arg2: memref<2x16xf32, #tpu.memory_space<vmem>>, %arg3: memref<2x3xf32, #tpu.memory_space<vmem>>, %arg4: memref<512x512xbf16, #tpu.memory_space<vmem>>, %arg5: memref<1x512xf32, #tpu.memory_space<vmem>>, %arg6: memref<256x256xbf16, #tpu.memory_space<vmem>>, %arg7: memref<256x256xbf16, #tpu.memory_space<vmem>>, %arg8: memref<256x128xbf16, #tpu.memory_space<vmem>>, %arg9: memref<128x256xbf16, #tpu.memory_space<vmem>>, %arg10: memref<256x128xbf16, #tpu.memory_space<vmem>>, %arg11: memref<128x6xf32, #tpu.memory_space<vmem>>, %arg12: memref<6x256xf32, #tpu.memory_space<vmem>>, %arg13: memref<256x256xbf16, #tpu.memory_space<vmem>>, %arg14: memref<256x256xbf16, #tpu.memory_space<vmem>>, %arg15: memref<256x128xbf16, #tpu.memory_space<vmem>>, %arg16: memref<128x256xbf16, #tpu.memory_space<vmem>>, %arg17: memref<256x128xbf16, #tpu.memory_space<vmem>>, %arg18: memref<128x5xf32, #tpu.memory_space<vmem>>, %arg19: memref<6x256xf32, #tpu.memory_space<vmem>>, %arg20: memref<5x8xf32, #tpu.memory_space<vmem>>, %arg21: memref<8x12xf32, #tpu.memory_space<vmem>>, %arg22: memref<12x8xf32, #tpu.memory_space<vmem>>, %arg23: memref<8x6xf32, #tpu.memory_space<vmem>>, %arg24: memref<6x32xf32, #tpu.memory_space<vmem>>, %arg25: memref<5x32xf32, #tpu.memory_space<vmem>>, %arg26: memref<3x32xf32, #tpu.memory_space<vmem>>, %arg27: memref<32x1xf32, #tpu.memory_space<vmem>>, %arg28: memref<6x32xf32, #tpu.memory_space<vmem>>, %arg29: memref<2x6xf32, #tpu.memory_space<vmem>>, %arg30: memref<2x5xf32, #tpu.memory_space<vmem>>, %arg31: memref<2x6xf32, #tpu.memory_space<vmem>>, %arg32: memref<2x1xf32, #tpu.memory_space<vmem>>, %arg33: memref<2x1xf32, #tpu.memory_space<vmem>>) attributes {dimension_semantics = [#tpu.dimension_semantics<arbitrary>], iteration_bounds = array<i64: 1>, scalar_prefetch = 0 : i64, scratch_operands = 0 : i64, tpu.core_type = #tpu.core_type<tc>, window_params = [{pipeline_mode = #tpu.pipeline_mode<synchronous>, transform_indices = @transform_0, window_bounds = array<i64: 16, 512>}, {pipeline_mode = #tpu.pipeline_mode<synchronous>, transform_indices = @transform_1, window_bounds = array<i64: 2, 16>}, {pipeline_mode = #tpu.pipeline_mode<synchronous>, transform_indices = @transform_2, window_bounds = array<i64: 2, 3>}, {pipeline_mode = #tpu.pipeline_mode<synchronous>, transform_indices = @transform_3, window_bounds = array<i64: 512, 512>}, {pipeline_mode = #tpu.pipeline_mode<synchronous>, transform_indices = @transform_4, window_bounds = array<i64: 1, 512>}, {pipeline_mode = #tpu.pipeline_mode<synchronous>, transform_indices = @transform_5, window_bounds = array<i64: 256, 256>}, {pipeline_mode = #tpu.pipeline_mode<synchronous>, transform_indices = @transform_6, window_bounds = array<i64: 256, 256>}, {pipeline_mode = #tpu.pipeline_mode<synchronous>, transform_indices = @transform_7, window_bounds = array<i64: 256, 128>}, {pipeline_mode = #tpu.pipeline_mode<synchronous>, transform_indices = @transform_8, window_bounds = array<i64: 128, 256>}, {pipeline_mode = #tpu.pipeline_mode<synchronous>, transform_indices = @transform_9, window_bounds = array<i64: 256, 128>}, {pipeline_mode = #tpu.pipeline_mode<synchronous>, transform_indices = @transform_10, window_bounds = array<i64: 128, 6>}, {pipeline_mode = #tpu.pipeline_mode<synchronous>, transform_indices = @transform_11, window_bounds = array<i64: 6, 256>}, {pipeline_mode = #tpu.pipeline_mode<synchronous>, transform_indices = @transform_12, window_bounds = array<i64: 256, 256>}, {pipeline_mode = #tpu.pipeline_mode<synchronous>, transform_indices = @transform_13, window_bounds = array<i64: 256, 256>}, {pipeline_mode = #tpu.pipeline_mode<synchronous>, transform_indices = @transform_14, window_bounds = array<i64: 256, 128>}, {pipeline_mode = #tpu.pipeline_mode<synchronous>, transform_indices = @transform_15, window_bounds = array<i64: 128, 256>}, {pipeline_mode = #tpu.pipeline_mode<synchronous>, transform_indices = @transform_16, window_bounds = array<i64: 256, 128>}, {pipeline_mode = #tpu.pipeline_mode<synchronous>, transform_indices = @transform_17, window_bounds = array<i64: 128, 5>}, {pipeline_mode = #tpu.pipeline_mode<synchronous>, transform_indices = @transform_18, window_bounds = array<i64: 6, 256>}, {pipeline_mode = #tpu.pipeline_mode<synchronous>, transform_indices = @transform_19, window_bounds = array<i64: 5, 8>}, {pipeline_mode = #tpu.pipeline_mode<synchronous>, transform_indices = @transform_20, window_bounds = array<i64: 8, 12>}, {pipeline_mode = #tpu.pipeline_mode<synchronous>, transform_indices = @transform_21, window_bounds = array<i64: 12, 8>}, {pipeline_mode = #tpu.pipeline_mode<synchronous>, transform_indices = @transform_22, window_bounds = array<i64: 8, 6>}, {pipeline_mode = #tpu.pipeline_mode<synchronous>, transform_indices = @transform_23, window_bounds = array<i64: 6, 32>}, {pipeline_mode = #tpu.pipeline_mode<synchronous>, transform_indices = @transform_24, window_bounds = array<i64: 5, 32>}, {pipeline_mode = #tpu.pipeline_mode<synchronous>, transform_indices = @transform_25, window_bounds = array<i64: 3, 32>}, {pipeline_mode = #tpu.pipeline_mode<synchronous>, transform_indices = @transform_26, window_bounds = array<i64: 32, 1>}, {pipeline_mode = #tpu.pipeline_mode<synchronous>, transform_indices = @transform_27, window_bounds = array<i64: 6, 32>}, {pipeline_mode = #tpu.pipeline_mode<synchronous>, transform_indices = @transform_28, window_bounds = array<i64: 2, 6>}, {pipeline_mode = #tpu.pipeline_mode<synchronous>, transform_indices = @transform_29, window_bounds = array<i64: 2, 5>}, {pipeline_mode = #tpu.pipeline_mode<synchronous>, transform_indices = @transform_30, window_bounds = array<i64: 2, 6>}, {pipeline_mode = #tpu.pipeline_mode<synchronous>, transform_indices = @transform_31, window_bounds = array<i64: 2, 1>}, {pipeline_mode = #tpu.pipeline_mode<synchronous>, transform_indices = @transform_32, window_bounds = array<i64: 2, 1>}]} {
    %c0 = arith.constant 0 : index
    %c0_0 = arith.constant 0 : index
    %0 = vector.load %arg1[%c0, %c0_0] : memref<16x512xbf16, #tpu.memory_space<vmem>>, vector<16x512xbf16>
    %c0_1 = arith.constant 0 : index
    %c0_2 = arith.constant 0 : index
    %1 = vector.load %arg2[%c0_1, %c0_2] : memref<2x16xf32, #tpu.memory_space<vmem>>, vector<2x16xf32>
    %c0_3 = arith.constant 0 : index
    %c0_4 = arith.constant 0 : index
    %2 = vector.load %arg3[%c0_3, %c0_4] : memref<2x3xf32, #tpu.memory_space<vmem>>, vector<2x3xf32>
    %c0_5 = arith.constant 0 : index
    %c0_6 = arith.constant 0 : index
    %3 = vector.load %arg4[%c0_5, %c0_6] : memref<512x512xbf16, #tpu.memory_space<vmem>>, vector<512x512xbf16>
    %cst = arith.constant dense<0.000000e+00> : vector<16x512xf32>
    %4 = tpu.matmul %0, %3, %cst {dimension_numbers = #tpu.dot_dimension_numbers<[1], [0], [0], [1], [0, 0, 1, 1], [], []>} : vector<16x512xbf16>, vector<512x512xbf16>, vector<16x512xf32> -> vector<16x512xf32>
    %c0_7 = arith.constant 0 : index
    %c0_8 = arith.constant 0 : index
    %5 = vector.load %arg5[%c0_7, %c0_8] : memref<1x512xf32, #tpu.memory_space<vmem>>, vector<1x512xf32>
    %6 = vector.broadcast %5 : vector<1x512xf32> to vector<16x512xf32>
    %7 = arith.addf %4, %6 : vector<16x512xf32>
    %cst_9 = arith.constant 0.000000e+00 : f32
    %8 = vector.broadcast %cst_9 : f32 to vector<16x512xf32>
    %9 = arith.maximumf %7, %8 : vector<16x512xf32>
    %cst_10 = arith.constant dense<0.000000e+00> : vector<2xf32>
    %10 = vector.multi_reduction <add>, %1, %cst_10 [1] : vector<2x16xf32> to vector<2xf32>
    %11 = vector.shape_cast %10 : vector<2xf32> to vector<2x1xf32>
    %cst_11 = arith.constant 1.000000e+00 : f32
    %12 = vector.broadcast %cst_11 : f32 to vector<2x1xf32>
    %13 = arith.maximumf %11, %12 : vector<2x1xf32>
    %14 = tpu.reciprocal %13 {approx = true} : vector<2x1xf32> -> vector<2x1xf32>
    %15 = vector.extract_strided_slice %9 {offsets = [0, 0], sizes = [16, 256], strides = [1, 1]} : vector<16x512xf32> to vector<16x256xf32>
    %c0_12 = arith.constant 0 : index
    %c0_13 = arith.constant 0 : index
    %16 = vector.load %arg12[%c0_12, %c0_13] : memref<6x256xf32, #tpu.memory_space<vmem>>, vector<6x256xf32>
    %17 = arith.truncf %15 : vector<16x256xf32> to vector<16x256xbf16>
    %c0_14 = arith.constant 0 : index
    %c0_15 = arith.constant 0 : index
    %18 = vector.load %arg6[%c0_14, %c0_15] : memref<256x256xbf16, #tpu.memory_space<vmem>>, vector<256x256xbf16>
    %cst_16 = arith.constant dense<0.000000e+00> : vector<16x256xf32>
    %19 = tpu.matmul %17, %18, %cst_16 {dimension_numbers = #tpu.dot_dimension_numbers<[1], [0], [0], [1], [0, 0, 1, 1], [], []>} : vector<16x256xbf16>, vector<256x256xbf16>, vector<16x256xf32> -> vector<16x256xf32>
    %20 = vector.extract_strided_slice %16 {offsets = [0, 0], sizes = [1, 256], strides = [1, 1]} : vector<6x256xf32> to vector<1x256xf32>
    %21 = vector.broadcast %20 : vector<1x256xf32> to vector<16x256xf32>
    %22 = arith.addf %19, %21 : vector<16x256xf32>
    %cst_17 = arith.constant 0.000000e+00 : f32
    %23 = vector.broadcast %cst_17 : f32 to vector<16x256xf32>
    %24 = arith.maximumf %22, %23 : vector<16x256xf32>
    %25 = arith.truncf %24 : vector<16x256xf32> to vector<16x256xbf16>
    %c0_18 = arith.constant 0 : index
    %c0_19 = arith.constant 0 : index
    %26 = vector.load %arg7[%c0_18, %c0_19] : memref<256x256xbf16, #tpu.memory_space<vmem>>, vector<256x256xbf16>
    %cst_20 = arith.constant dense<0.000000e+00> : vector<16x256xf32>
    %27 = tpu.matmul %25, %26, %cst_20 {dimension_numbers = #tpu.dot_dimension_numbers<[1], [0], [0], [1], [0, 0, 1, 1], [], []>} : vector<16x256xbf16>, vector<256x256xbf16>, vector<16x256xf32> -> vector<16x256xf32>
    %28 = vector.extract_strided_slice %16 {offsets = [1, 0], sizes = [1, 256], strides = [1, 1]} : vector<6x256xf32> to vector<1x256xf32>
    %29 = vector.broadcast %28 : vector<1x256xf32> to vector<16x256xf32>
    %30 = arith.addf %27, %29 : vector<16x256xf32>
    %cst_21 = arith.constant 0.000000e+00 : f32
    %31 = vector.broadcast %cst_21 : f32 to vector<16x256xf32>
    %32 = arith.maximumf %30, %31 : vector<16x256xf32>
    %33 = arith.truncf %32 : vector<16x256xf32> to vector<16x256xbf16>
    %c0_22 = arith.constant 0 : index
    %c0_23 = arith.constant 0 : index
    %34 = vector.load %arg8[%c0_22, %c0_23] : memref<256x128xbf16, #tpu.memory_space<vmem>>, vector<256x128xbf16>
    %cst_24 = arith.constant dense<0.000000e+00> : vector<16x128xf32>
    %35 = tpu.matmul %33, %34, %cst_24 {dimension_numbers = #tpu.dot_dimension_numbers<[1], [0], [0], [1], [0, 0, 1, 1], [], []>} : vector<16x256xbf16>, vector<256x128xbf16>, vector<16x128xf32> -> vector<16x128xf32>
    %36 = vector.extract_strided_slice %16 {offsets = [2, 0], sizes = [1, 128], strides = [1, 1]} : vector<6x256xf32> to vector<1x128xf32>
    %37 = vector.broadcast %36 : vector<1x128xf32> to vector<16x128xf32>
    %38 = arith.addf %35, %37 : vector<16x128xf32>
    %cst_25 = arith.constant dense<0.000000e+00> : vector<2x128xf32>
    %39 = tpu.matmul %1, %38, %cst_25 {dimension_numbers = #tpu.dot_dimension_numbers<[1], [0], [0], [1], [0, 0, 1, 1], [], []>} : vector<2x16xf32>, vector<16x128xf32>, vector<2x128xf32> -> vector<2x128xf32>
    %40 = vector.broadcast %14 : vector<2x1xf32> to vector<2x128xf32>
    %41 = arith.mulf %39, %40 : vector<2x128xf32>
    %42 = arith.truncf %41 : vector<2x128xf32> to vector<2x128xbf16>
    %c0_26 = arith.constant 0 : index
    %c0_27 = arith.constant 0 : index
    %43 = vector.load %arg9[%c0_26, %c0_27] : memref<128x256xbf16, #tpu.memory_space<vmem>>, vector<128x256xbf16>
    %cst_28 = arith.constant dense<0.000000e+00> : vector<2x256xf32>
    %44 = tpu.matmul %42, %43, %cst_28 {dimension_numbers = #tpu.dot_dimension_numbers<[1], [0], [0], [1], [0, 0, 1, 1], [], []>} : vector<2x128xbf16>, vector<128x256xbf16>, vector<2x256xf32> -> vector<2x256xf32>
    %45 = vector.extract_strided_slice %16 {offsets = [3, 0], sizes = [1, 256], strides = [1, 1]} : vector<6x256xf32> to vector<1x256xf32>
    %46 = vector.broadcast %45 : vector<1x256xf32> to vector<2x256xf32>
    %47 = arith.addf %44, %46 : vector<2x256xf32>
    %cst_29 = arith.constant 0.000000e+00 : f32
    %48 = vector.broadcast %cst_29 : f32 to vector<2x256xf32>
    %49 = arith.maximumf %47, %48 : vector<2x256xf32>
    %50 = arith.truncf %49 : vector<2x256xf32> to vector<2x256xbf16>
    %c0_30 = arith.constant 0 : index
    %c0_31 = arith.constant 0 : index
    %51 = vector.load %arg10[%c0_30, %c0_31] : memref<256x128xbf16, #tpu.memory_space<vmem>>, vector<256x128xbf16>
    %cst_32 = arith.constant dense<0.000000e+00> : vector<2x128xf32>
    %52 = tpu.matmul %50, %51, %cst_32 {dimension_numbers = #tpu.dot_dimension_numbers<[1], [0], [0], [1], [0, 0, 1, 1], [], []>} : vector<2x256xbf16>, vector<256x128xbf16>, vector<2x128xf32> -> vector<2x128xf32>
    %53 = vector.extract_strided_slice %16 {offsets = [4, 0], sizes = [1, 128], strides = [1, 1]} : vector<6x256xf32> to vector<1x128xf32>
    %54 = vector.broadcast %53 : vector<1x128xf32> to vector<2x128xf32>
    %55 = arith.addf %52, %54 : vector<2x128xf32>
    %cst_33 = arith.constant 0.000000e+00 : f32
    %56 = vector.broadcast %cst_33 : f32 to vector<2x128xf32>
    %57 = arith.maximumf %55, %56 : vector<2x128xf32>
    %c0_34 = arith.constant 0 : index
    %c0_35 = arith.constant 0 : index
    %58 = vector.load %arg11[%c0_34, %c0_35] : memref<128x6xf32, #tpu.memory_space<vmem>>, vector<128x6xf32>
    %cst_36 = arith.constant dense<0.000000e+00> : vector<2x6xf32>
    %59 = tpu.matmul %57, %58, %cst_36 {dimension_numbers = #tpu.dot_dimension_numbers<[1], [0], [0], [1], [0, 0, 1, 1], [], []>} : vector<2x128xf32>, vector<128x6xf32>, vector<2x6xf32> -> vector<2x6xf32>
    %60 = vector.extract_strided_slice %16 {offsets = [5, 0], sizes = [1, 6], strides = [1, 1]} : vector<6x256xf32> to vector<1x6xf32>
    %61 = vector.broadcast %60 : vector<1x6xf32> to vector<2x6xf32>
    %62 = arith.addf %59, %61 : vector<2x6xf32>
    %63 = vector.extract_strided_slice %9 {offsets = [0, 256], sizes = [16, 256], strides = [1, 1]} : vector<16x512xf32> to vector<16x256xf32>
    %c0_37 = arith.constant 0 : index
    %c0_38 = arith.constant 0 : index
    %64 = vector.load %arg19[%c0_37, %c0_38] : memref<6x256xf32, #tpu.memory_space<vmem>>, vector<6x256xf32>
    %65 = arith.truncf %63 : vector<16x256xf32> to vector<16x256xbf16>
    %c0_39 = arith.constant 0 : index
    %c0_40 = arith.constant 0 : index
    %66 = vector.load %arg13[%c0_39, %c0_40] : memref<256x256xbf16, #tpu.memory_space<vmem>>, vector<256x256xbf16>
    %cst_41 = arith.constant dense<0.000000e+00> : vector<16x256xf32>
    %67 = tpu.matmul %65, %66, %cst_41 {dimension_numbers = #tpu.dot_dimension_numbers<[1], [0], [0], [1], [0, 0, 1, 1], [], []>} : vector<16x256xbf16>, vector<256x256xbf16>, vector<16x256xf32> -> vector<16x256xf32>
    %68 = vector.extract_strided_slice %64 {offsets = [0, 0], sizes = [1, 256], strides = [1, 1]} : vector<6x256xf32> to vector<1x256xf32>
    %69 = vector.broadcast %68 : vector<1x256xf32> to vector<16x256xf32>
    %70 = arith.addf %67, %69 : vector<16x256xf32>
    %cst_42 = arith.constant 0.000000e+00 : f32
    %71 = vector.broadcast %cst_42 : f32 to vector<16x256xf32>
    %72 = arith.maximumf %70, %71 : vector<16x256xf32>
    %73 = arith.truncf %72 : vector<16x256xf32> to vector<16x256xbf16>
    %c0_43 = arith.constant 0 : index
    %c0_44 = arith.constant 0 : index
    %74 = vector.load %arg14[%c0_43, %c0_44] : memref<256x256xbf16, #tpu.memory_space<vmem>>, vector<256x256xbf16>
    %cst_45 = arith.constant dense<0.000000e+00> : vector<16x256xf32>
    %75 = tpu.matmul %73, %74, %cst_45 {dimension_numbers = #tpu.dot_dimension_numbers<[1], [0], [0], [1], [0, 0, 1, 1], [], []>} : vector<16x256xbf16>, vector<256x256xbf16>, vector<16x256xf32> -> vector<16x256xf32>
    %76 = vector.extract_strided_slice %64 {offsets = [1, 0], sizes = [1, 256], strides = [1, 1]} : vector<6x256xf32> to vector<1x256xf32>
    %77 = vector.broadcast %76 : vector<1x256xf32> to vector<16x256xf32>
    %78 = arith.addf %75, %77 : vector<16x256xf32>
    %cst_46 = arith.constant 0.000000e+00 : f32
    %79 = vector.broadcast %cst_46 : f32 to vector<16x256xf32>
    %80 = arith.maximumf %78, %79 : vector<16x256xf32>
    %81 = arith.truncf %80 : vector<16x256xf32> to vector<16x256xbf16>
    %c0_47 = arith.constant 0 : index
    %c0_48 = arith.constant 0 : index
    %82 = vector.load %arg15[%c0_47, %c0_48] : memref<256x128xbf16, #tpu.memory_space<vmem>>, vector<256x128xbf16>
    %cst_49 = arith.constant dense<0.000000e+00> : vector<16x128xf32>
    %83 = tpu.matmul %81, %82, %cst_49 {dimension_numbers = #tpu.dot_dimension_numbers<[1], [0], [0], [1], [0, 0, 1, 1], [], []>} : vector<16x256xbf16>, vector<256x128xbf16>, vector<16x128xf32> -> vector<16x128xf32>
    %84 = vector.extract_strided_slice %64 {offsets = [2, 0], sizes = [1, 128], strides = [1, 1]} : vector<6x256xf32> to vector<1x128xf32>
    %85 = vector.broadcast %84 : vector<1x128xf32> to vector<16x128xf32>
    %86 = arith.addf %83, %85 : vector<16x128xf32>
    %cst_50 = arith.constant dense<0.000000e+00> : vector<2x128xf32>
    %87 = tpu.matmul %1, %86, %cst_50 {dimension_numbers = #tpu.dot_dimension_numbers<[1], [0], [0], [1], [0, 0, 1, 1], [], []>} : vector<2x16xf32>, vector<16x128xf32>, vector<2x128xf32> -> vector<2x128xf32>
    %88 = vector.broadcast %14 : vector<2x1xf32> to vector<2x128xf32>
    %89 = arith.mulf %87, %88 : vector<2x128xf32>
    %90 = arith.truncf %89 : vector<2x128xf32> to vector<2x128xbf16>
    %c0_51 = arith.constant 0 : index
    %c0_52 = arith.constant 0 : index
    %91 = vector.load %arg16[%c0_51, %c0_52] : memref<128x256xbf16, #tpu.memory_space<vmem>>, vector<128x256xbf16>
    %cst_53 = arith.constant dense<0.000000e+00> : vector<2x256xf32>
    %92 = tpu.matmul %90, %91, %cst_53 {dimension_numbers = #tpu.dot_dimension_numbers<[1], [0], [0], [1], [0, 0, 1, 1], [], []>} : vector<2x128xbf16>, vector<128x256xbf16>, vector<2x256xf32> -> vector<2x256xf32>
    %93 = vector.extract_strided_slice %64 {offsets = [3, 0], sizes = [1, 256], strides = [1, 1]} : vector<6x256xf32> to vector<1x256xf32>
    %94 = vector.broadcast %93 : vector<1x256xf32> to vector<2x256xf32>
    %95 = arith.addf %92, %94 : vector<2x256xf32>
    %cst_54 = arith.constant 0.000000e+00 : f32
    %96 = vector.broadcast %cst_54 : f32 to vector<2x256xf32>
    %97 = arith.maximumf %95, %96 : vector<2x256xf32>
    %98 = arith.truncf %97 : vector<2x256xf32> to vector<2x256xbf16>
    %c0_55 = arith.constant 0 : index
    %c0_56 = arith.constant 0 : index
    %99 = vector.load %arg17[%c0_55, %c0_56] : memref<256x128xbf16, #tpu.memory_space<vmem>>, vector<256x128xbf16>
    %cst_57 = arith.constant dense<0.000000e+00> : vector<2x128xf32>
    %100 = tpu.matmul %98, %99, %cst_57 {dimension_numbers = #tpu.dot_dimension_numbers<[1], [0], [0], [1], [0, 0, 1, 1], [], []>} : vector<2x256xbf16>, vector<256x128xbf16>, vector<2x128xf32> -> vector<2x128xf32>
    %101 = vector.extract_strided_slice %64 {offsets = [4, 0], sizes = [1, 128], strides = [1, 1]} : vector<6x256xf32> to vector<1x128xf32>
    %102 = vector.broadcast %101 : vector<1x128xf32> to vector<2x128xf32>
    %103 = arith.addf %100, %102 : vector<2x128xf32>
    %cst_58 = arith.constant 0.000000e+00 : f32
    %104 = vector.broadcast %cst_58 : f32 to vector<2x128xf32>
    %105 = arith.maximumf %103, %104 : vector<2x128xf32>
    %c0_59 = arith.constant 0 : index
    %c0_60 = arith.constant 0 : index
    %106 = vector.load %arg18[%c0_59, %c0_60] : memref<128x5xf32, #tpu.memory_space<vmem>>, vector<128x5xf32>
    %cst_61 = arith.constant dense<0.000000e+00> : vector<2x5xf32>
    %107 = tpu.matmul %105, %106, %cst_61 {dimension_numbers = #tpu.dot_dimension_numbers<[1], [0], [0], [1], [0, 0, 1, 1], [], []>} : vector<2x128xf32>, vector<128x5xf32>, vector<2x5xf32> -> vector<2x5xf32>
    %108 = vector.extract_strided_slice %64 {offsets = [5, 0], sizes = [1, 5], strides = [1, 1]} : vector<6x256xf32> to vector<1x5xf32>
    %109 = vector.broadcast %108 : vector<1x5xf32> to vector<2x5xf32>
    %110 = arith.addf %107, %109 : vector<2x5xf32>
    %111 = arith.negf %62 : vector<2x6xf32>
    %112 = math.exp %111 : vector<2x6xf32>
    %cst_62 = arith.constant 1.000000e+00 : f32
    %113 = vector.broadcast %cst_62 : f32 to vector<2x6xf32>
    %114 = arith.addf %113, %112 : vector<2x6xf32>
    %115 = arith.divf %113, %114 : vector<2x6xf32>
    %116 = math.tanh %110 : vector<2x5xf32>
    %c0_63 = arith.constant 0 : index
    %c0_64 = arith.constant 0 : index
    %117 = vector.load %arg29[%c0_63, %c0_64] : memref<2x6xf32, #tpu.memory_space<vmem>>, vector<2x6xf32>
    tpu.vector_store %arg29[%c0_63, %c0_64], %115 {strides = array<i32>} : memref<2x6xf32, #tpu.memory_space<vmem>>, vector<2x6xf32>,
    %c0_65 = arith.constant 0 : index
    %c0_66 = arith.constant 0 : index
    %118 = vector.load %arg30[%c0_65, %c0_66] : memref<2x5xf32, #tpu.memory_space<vmem>>, vector<2x5xf32>
    tpu.vector_store %arg30[%c0_65, %c0_66], %116 {strides = array<i32>} : memref<2x5xf32, #tpu.memory_space<vmem>>, vector<2x5xf32>,
    %c0_67 = arith.constant 0 : index
    %c0_68 = arith.constant 0 : index
    %119 = vector.load %arg28[%c0_67, %c0_68] : memref<6x32xf32, #tpu.memory_space<vmem>>, vector<6x32xf32>
    %c0_69 = arith.constant 0 : index
    %c0_70 = arith.constant 0 : index
    %120 = vector.load %arg20[%c0_69, %c0_70] : memref<5x8xf32, #tpu.memory_space<vmem>>, vector<5x8xf32>
    %cst_71 = arith.constant dense<0.000000e+00> : vector<2x8xf32>
    %121 = tpu.matmul %116, %120, %cst_71 {dimension_numbers = #tpu.dot_dimension_numbers<[1], [0], [0], [1], [0, 0, 1, 1], [], []>} : vector<2x5xf32>, vector<5x8xf32>, vector<2x8xf32> -> vector<2x8xf32>
    %122 = vector.extract_strided_slice %119 {offsets = [0, 0], sizes = [1, 8], strides = [1, 1]} : vector<6x32xf32> to vector<1x8xf32>
    %123 = vector.broadcast %122 : vector<1x8xf32> to vector<2x8xf32>
    %124 = arith.addf %121, %123 : vector<2x8xf32>
    %cst_72 = arith.constant 0.000000e+00 : f32
    %125 = vector.broadcast %cst_72 : f32 to vector<2x8xf32>
    %126 = arith.maximumf %124, %125 : vector<2x8xf32>
    %c0_73 = arith.constant 0 : index
    %c0_74 = arith.constant 0 : index
    %127 = vector.load %arg21[%c0_73, %c0_74] : memref<8x12xf32, #tpu.memory_space<vmem>>, vector<8x12xf32>
    %cst_75 = arith.constant dense<0.000000e+00> : vector<2x12xf32>
    %128 = tpu.matmul %126, %127, %cst_75 {dimension_numbers = #tpu.dot_dimension_numbers<[1], [0], [0], [1], [0, 0, 1, 1], [], []>} : vector<2x8xf32>, vector<8x12xf32>, vector<2x12xf32> -> vector<2x12xf32>
    %129 = vector.extract_strided_slice %119 {offsets = [1, 0], sizes = [1, 12], strides = [1, 1]} : vector<6x32xf32> to vector<1x12xf32>
    %130 = vector.broadcast %129 : vector<1x12xf32> to vector<2x12xf32>
    %131 = arith.addf %128, %130 : vector<2x12xf32>
    %cst_76 = arith.constant 0.000000e+00 : f32
    %132 = vector.broadcast %cst_76 : f32 to vector<2x12xf32>
    %133 = arith.maximumf %131, %132 : vector<2x12xf32>
    %c0_77 = arith.constant 0 : index
    %c0_78 = arith.constant 0 : index
    %134 = vector.load %arg22[%c0_77, %c0_78] : memref<12x8xf32, #tpu.memory_space<vmem>>, vector<12x8xf32>
    %cst_79 = arith.constant dense<0.000000e+00> : vector<2x8xf32>
    %135 = tpu.matmul %133, %134, %cst_79 {dimension_numbers = #tpu.dot_dimension_numbers<[1], [0], [0], [1], [0, 0, 1, 1], [], []>} : vector<2x12xf32>, vector<12x8xf32>, vector<2x8xf32> -> vector<2x8xf32>
    %136 = vector.extract_strided_slice %119 {offsets = [2, 0], sizes = [1, 8], strides = [1, 1]} : vector<6x32xf32> to vector<1x8xf32>
    %137 = vector.broadcast %136 : vector<1x8xf32> to vector<2x8xf32>
    %138 = arith.addf %135, %137 : vector<2x8xf32>
    %cst_80 = arith.constant 0.000000e+00 : f32
    %139 = vector.broadcast %cst_80 : f32 to vector<2x8xf32>
    %140 = arith.maximumf %138, %139 : vector<2x8xf32>
    %c0_81 = arith.constant 0 : index
    %c0_82 = arith.constant 0 : index
    %141 = vector.load %arg23[%c0_81, %c0_82] : memref<8x6xf32, #tpu.memory_space<vmem>>, vector<8x6xf32>
    %cst_83 = arith.constant dense<0.000000e+00> : vector<2x6xf32>
    %142 = tpu.matmul %140, %141, %cst_83 {dimension_numbers = #tpu.dot_dimension_numbers<[1], [0], [0], [1], [0, 0, 1, 1], [], []>} : vector<2x8xf32>, vector<8x6xf32>, vector<2x6xf32> -> vector<2x6xf32>
    %143 = vector.extract_strided_slice %119 {offsets = [3, 0], sizes = [1, 6], strides = [1, 1]} : vector<6x32xf32> to vector<1x6xf32>
    %144 = vector.broadcast %143 : vector<1x6xf32> to vector<2x6xf32>
    %145 = arith.addf %142, %144 : vector<2x6xf32>
    %146 = arith.negf %145 : vector<2x6xf32>
    %147 = math.exp %146 : vector<2x6xf32>
    %cst_84 = arith.constant 1.000000e+00 : f32
    %148 = vector.broadcast %cst_84 : f32 to vector<2x6xf32>
    %149 = arith.addf %148, %147 : vector<2x6xf32>
    %150 = arith.divf %148, %149 : vector<2x6xf32>
    %c0_85 = arith.constant 0 : index
    %c0_86 = arith.constant 0 : index
    %151 = vector.load %arg31[%c0_85, %c0_86] : memref<2x6xf32, #tpu.memory_space<vmem>>, vector<2x6xf32>
    tpu.vector_store %arg31[%c0_85, %c0_86], %150 {strides = array<i32>} : memref<2x6xf32, #tpu.memory_space<vmem>>, vector<2x6xf32>,
    %c0_87 = arith.constant 0 : index
    %c0_88 = arith.constant 0 : index
    %152 = vector.load %arg24[%c0_87, %c0_88] : memref<6x32xf32, #tpu.memory_space<vmem>>, vector<6x32xf32>
    %cst_89 = arith.constant dense<0.000000e+00> : vector<2x32xf32>
    %153 = tpu.matmul %115, %152, %cst_89 {dimension_numbers = #tpu.dot_dimension_numbers<[1], [0], [0], [1], [0, 0, 1, 1], [], []>} : vector<2x6xf32>, vector<6x32xf32>, vector<2x32xf32> -> vector<2x32xf32>
    %c0_90 = arith.constant 0 : index
    %c0_91 = arith.constant 0 : index
    %154 = vector.load %arg25[%c0_90, %c0_91] : memref<5x32xf32, #tpu.memory_space<vmem>>, vector<5x32xf32>
    %cst_92 = arith.constant dense<0.000000e+00> : vector<2x32xf32>
    %155 = tpu.matmul %116, %154, %cst_92 {dimension_numbers = #tpu.dot_dimension_numbers<[1], [0], [0], [1], [0, 0, 1, 1], [], []>} : vector<2x5xf32>, vector<5x32xf32>, vector<2x32xf32> -> vector<2x32xf32>
    %156 = arith.addf %153, %155 : vector<2x32xf32>
    %c0_93 = arith.constant 0 : index
    %c0_94 = arith.constant 0 : index
    %157 = vector.load %arg26[%c0_93, %c0_94] : memref<3x32xf32, #tpu.memory_space<vmem>>, vector<3x32xf32>
    %cst_95 = arith.constant dense<0.000000e+00> : vector<2x32xf32>
    %158 = tpu.matmul %2, %157, %cst_95 {dimension_numbers = #tpu.dot_dimension_numbers<[1], [0], [0], [1], [0, 0, 1, 1], [], []>} : vector<2x3xf32>, vector<3x32xf32>, vector<2x32xf32> -> vector<2x32xf32>
    %159 = arith.addf %156, %158 : vector<2x32xf32>
    %160 = vector.extract_strided_slice %119 {offsets = [4, 0], sizes = [1, 32], strides = [1, 1]} : vector<6x32xf32> to vector<1x32xf32>
    %161 = vector.broadcast %160 : vector<1x32xf32> to vector<2x32xf32>
    %162 = arith.addf %159, %161 : vector<2x32xf32>
    %cst_96 = arith.constant 0.000000e+00 : f32
    %163 = vector.broadcast %cst_96 : f32 to vector<2x32xf32>
    %164 = arith.maximumf %162, %163 : vector<2x32xf32>
    %c0_97 = arith.constant 0 : index
    %c0_98 = arith.constant 0 : index
    %165 = vector.load %arg27[%c0_97, %c0_98] : memref<32x1xf32, #tpu.memory_space<vmem>>, vector<32x1xf32>
    %cst_99 = arith.constant dense<0.000000e+00> : vector<2x1xf32>
    %166 = tpu.matmul %164, %165, %cst_99 {dimension_numbers = #tpu.dot_dimension_numbers<[1], [0], [0], [1], [0, 0, 1, 1], [], []>} : vector<2x32xf32>, vector<32x1xf32>, vector<2x1xf32> -> vector<2x1xf32>
    %167 = vector.extract_strided_slice %119 {offsets = [5, 0], sizes = [1, 1], strides = [1, 1]} : vector<6x32xf32> to vector<1x1xf32>
    %168 = vector.broadcast %167 : vector<1x1xf32> to vector<2x1xf32>
    %169 = arith.addf %166, %168 : vector<2x1xf32>
    %c0_100 = arith.constant 0 : index
    %c0_101 = arith.constant 0 : index
    %170 = vector.load %arg33[%c0_100, %c0_101] : memref<2x1xf32, #tpu.memory_space<vmem>>, vector<2x1xf32>
    tpu.vector_store %arg33[%c0_100, %c0_101], %169 {strides = array<i32>} : memref<2x1xf32, #tpu.memory_space<vmem>>, vector<2x1xf32>,
    %171 = arith.negf %169 : vector<2x1xf32>
    %172 = math.exp %171 : vector<2x1xf32>
    %cst_102 = arith.constant 1.000000e+00 : f32
    %173 = vector.broadcast %cst_102 : f32 to vector<2x1xf32>
    %174 = arith.addf %173, %172 : vector<2x1xf32>
    %175 = arith.divf %173, %174 : vector<2x1xf32>
    %c0_103 = arith.constant 0 : index
    %c0_104 = arith.constant 0 : index
    %176 = vector.load %arg32[%c0_103, %c0_104] : memref<2x1xf32, #tpu.memory_space<vmem>>, vector<2x1xf32>
    tpu.vector_store %arg32[%c0_103, %c0_104], %175 {strides = array<i32>} : memref<2x1xf32, #tpu.memory_space<vmem>>, vector<2x1xf32>,
    return
  }
  func.func @transform_0(%arg0: i32) -> (i32, i32) {
    %c0_i32 = arith.constant 0 : i32
    %c0_i32_0 = arith.constant 0 : i32
    %c0_i32_1 = arith.constant 0 : i32
    return %c0_i32, %c0_i32_0 : i32, i32
  }
  func.func @transform_1(%arg0: i32) -> (i32, i32) {
    %c0_i32 = arith.constant 0 : i32
    %c0_i32_0 = arith.constant 0 : i32
    %c0_i32_1 = arith.constant 0 : i32
    return %c0_i32, %c0_i32_0 : i32, i32
  }
  func.func @transform_2(%arg0: i32) -> (i32, i32) {
    %c0_i32 = arith.constant 0 : i32
    %c0_i32_0 = arith.constant 0 : i32
    %c0_i32_1 = arith.constant 0 : i32
    return %c0_i32, %c0_i32_0 : i32, i32
  }
  func.func @transform_3(%arg0: i32) -> (i32, i32) {
    %c0_i32 = arith.constant 0 : i32
    %c0_i32_0 = arith.constant 0 : i32
    %c0_i32_1 = arith.constant 0 : i32
    return %c0_i32, %c0_i32_0 : i32, i32
  }
  func.func @transform_4(%arg0: i32) -> (i32, i32) {
    %c0_i32 = arith.constant 0 : i32
    %c0_i32_0 = arith.constant 0 : i32
    %c0_i32_1 = arith.constant 0 : i32
    return %c0_i32, %c0_i32_0 : i32, i32
  }
  func.func @transform_5(%arg0: i32) -> (i32, i32) {
    %c0_i32 = arith.constant 0 : i32
    %c0_i32_0 = arith.constant 0 : i32
    %c0_i32_1 = arith.constant 0 : i32
    return %c0_i32, %c0_i32_0 : i32, i32
  }
  func.func @transform_6(%arg0: i32) -> (i32, i32) {
    %c0_i32 = arith.constant 0 : i32
    %c0_i32_0 = arith.constant 0 : i32
    %c0_i32_1 = arith.constant 0 : i32
    return %c0_i32, %c0_i32_0 : i32, i32
  }
  func.func @transform_7(%arg0: i32) -> (i32, i32) {
    %c0_i32 = arith.constant 0 : i32
    %c0_i32_0 = arith.constant 0 : i32
    %c0_i32_1 = arith.constant 0 : i32
    return %c0_i32, %c0_i32_0 : i32, i32
  }
  func.func @transform_8(%arg0: i32) -> (i32, i32) {
    %c0_i32 = arith.constant 0 : i32
    %c0_i32_0 = arith.constant 0 : i32
    %c0_i32_1 = arith.constant 0 : i32
    return %c0_i32, %c0_i32_0 : i32, i32
  }
  func.func @transform_9(%arg0: i32) -> (i32, i32) {
    %c0_i32 = arith.constant 0 : i32
    %c0_i32_0 = arith.constant 0 : i32
    %c0_i32_1 = arith.constant 0 : i32
    return %c0_i32, %c0_i32_0 : i32, i32
  }
  func.func @transform_10(%arg0: i32) -> (i32, i32) {
    %c0_i32 = arith.constant 0 : i32
    %c0_i32_0 = arith.constant 0 : i32
    %c0_i32_1 = arith.constant 0 : i32
    return %c0_i32, %c0_i32_0 : i32, i32
  }
  func.func @transform_11(%arg0: i32) -> (i32, i32) {
    %c0_i32 = arith.constant 0 : i32
    %c0_i32_0 = arith.constant 0 : i32
    %c0_i32_1 = arith.constant 0 : i32
    return %c0_i32, %c0_i32_0 : i32, i32
  }
  func.func @transform_12(%arg0: i32) -> (i32, i32) {
    %c0_i32 = arith.constant 0 : i32
    %c0_i32_0 = arith.constant 0 : i32
    %c0_i32_1 = arith.constant 0 : i32
    return %c0_i32, %c0_i32_0 : i32, i32
  }
  func.func @transform_13(%arg0: i32) -> (i32, i32) {
    %c0_i32 = arith.constant 0 : i32
    %c0_i32_0 = arith.constant 0 : i32
    %c0_i32_1 = arith.constant 0 : i32
    return %c0_i32, %c0_i32_0 : i32, i32
  }
  func.func @transform_14(%arg0: i32) -> (i32, i32) {
    %c0_i32 = arith.constant 0 : i32
    %c0_i32_0 = arith.constant 0 : i32
    %c0_i32_1 = arith.constant 0 : i32
    return %c0_i32, %c0_i32_0 : i32, i32
  }
  func.func @transform_15(%arg0: i32) -> (i32, i32) {
    %c0_i32 = arith.constant 0 : i32
    %c0_i32_0 = arith.constant 0 : i32
    %c0_i32_1 = arith.constant 0 : i32
    return %c0_i32, %c0_i32_0 : i32, i32
  }
  func.func @transform_16(%arg0: i32) -> (i32, i32) {
    %c0_i32 = arith.constant 0 : i32
    %c0_i32_0 = arith.constant 0 : i32
    %c0_i32_1 = arith.constant 0 : i32
    return %c0_i32, %c0_i32_0 : i32, i32
  }
  func.func @transform_17(%arg0: i32) -> (i32, i32) {
    %c0_i32 = arith.constant 0 : i32
    %c0_i32_0 = arith.constant 0 : i32
    %c0_i32_1 = arith.constant 0 : i32
    return %c0_i32, %c0_i32_0 : i32, i32
  }
  func.func @transform_18(%arg0: i32) -> (i32, i32) {
    %c0_i32 = arith.constant 0 : i32
    %c0_i32_0 = arith.constant 0 : i32
    %c0_i32_1 = arith.constant 0 : i32
    return %c0_i32, %c0_i32_0 : i32, i32
  }
  func.func @transform_19(%arg0: i32) -> (i32, i32) {
    %c0_i32 = arith.constant 0 : i32
    %c0_i32_0 = arith.constant 0 : i32
    %c0_i32_1 = arith.constant 0 : i32
    return %c0_i32, %c0_i32_0 : i32, i32
  }
  func.func @transform_20(%arg0: i32) -> (i32, i32) {
    %c0_i32 = arith.constant 0 : i32
    %c0_i32_0 = arith.constant 0 : i32
    %c0_i32_1 = arith.constant 0 : i32
    return %c0_i32, %c0_i32_0 : i32, i32
  }
  func.func @transform_21(%arg0: i32) -> (i32, i32) {
    %c0_i32 = arith.constant 0 : i32
    %c0_i32_0 = arith.constant 0 : i32
    %c0_i32_1 = arith.constant 0 : i32
    return %c0_i32, %c0_i32_0 : i32, i32
  }
  func.func @transform_22(%arg0: i32) -> (i32, i32) {
    %c0_i32 = arith.constant 0 : i32
    %c0_i32_0 = arith.constant 0 : i32
    %c0_i32_1 = arith.constant 0 : i32
    return %c0_i32, %c0_i32_0 : i32, i32
  }
  func.func @transform_23(%arg0: i32) -> (i32, i32) {
    %c0_i32 = arith.constant 0 : i32
    %c0_i32_0 = arith.constant 0 : i32
    %c0_i32_1 = arith.constant 0 : i32
    return %c0_i32, %c0_i32_0 : i32, i32
  }
  func.func @transform_24(%arg0: i32) -> (i32, i32) {
    %c0_i32 = arith.constant 0 : i32
    %c0_i32_0 = arith.constant 0 : i32
    %c0_i32_1 = arith.constant 0 : i32
    return %c0_i32, %c0_i32_0 : i32, i32
  }
  func.func @transform_25(%arg0: i32) -> (i32, i32) {
    %c0_i32 = arith.constant 0 : i32
    %c0_i32_0 = arith.constant 0 : i32
    %c0_i32_1 = arith.constant 0 : i32
    return %c0_i32, %c0_i32_0 : i32, i32
  }
  func.func @transform_26(%arg0: i32) -> (i32, i32) {
    %c0_i32 = arith.constant 0 : i32
    %c0_i32_0 = arith.constant 0 : i32
    %c0_i32_1 = arith.constant 0 : i32
    return %c0_i32, %c0_i32_0 : i32, i32
  }
  func.func @transform_27(%arg0: i32) -> (i32, i32) {
    %c0_i32 = arith.constant 0 : i32
    %c0_i32_0 = arith.constant 0 : i32
    %c0_i32_1 = arith.constant 0 : i32
    return %c0_i32, %c0_i32_0 : i32, i32
  }
  func.func @transform_28(%arg0: i32) -> (i32, i32) {
    %c0_i32 = arith.constant 0 : i32
    %c0_i32_0 = arith.constant 0 : i32
    %c0_i32_1 = arith.constant 0 : i32
    return %c0_i32, %c0_i32_0 : i32, i32
  }
  func.func @transform_29(%arg0: i32) -> (i32, i32) {
    %c0_i32 = arith.constant 0 : i32
    %c0_i32_0 = arith.constant 0 : i32
    %c0_i32_1 = arith.constant 0 : i32
    return %c0_i32, %c0_i32_0 : i32, i32
  }
  func.func @transform_30(%arg0: i32) -> (i32, i32) {
    %c0_i32 = arith.constant 0 : i32
    %c0_i32_0 = arith.constant 0 : i32
    %c0_i32_1 = arith.constant 0 : i32
    return %c0_i32, %c0_i32_0 : i32, i32
  }
  func.func @transform_31(%arg0: i32) -> (i32, i32) {
    %c0_i32 = arith.constant 0 : i32
    %c0_i32_0 = arith.constant 0 : i32
    %c0_i32_1 = arith.constant 0 : i32
    return %c0_i32, %c0_i32_0 : i32, i32
  }
  func.func @transform_32(%arg0: i32) -> (i32, i32) {
    %c0_i32 = arith.constant 0 : i32
    %c0_i32_0 = arith.constant 0 : i32
    %c0_i32_1 = arith.constant 0 : i32
    return %c0_i32, %c0_i32_0 : i32, i32
  }
}

</mosaic_0001>

<llo_original>
// kernel: tpu_custom_call.1
$region0: #{tpu_custom_call.1}
  #allocation0 [shape = 'u32[]', space=smem, size = 0x4, offset = 0x4, fixed_abs, tag = 'smem constant byte address 0x4 - core index']
  #allocation1 [shape = 'u32[144,128]{1,0:T(1,128)}', space=vmem, size = 0x12000, scoped, tag = 'internal scratch']
  %s0 = inlined_call_operand.smem [shape: u32[33], index: -1, kind: input, shape index: {}]
  %s1 = sld [smem:[%s0]]
  %s2 = scalar_lea.smem %s0, 1
  %s3 = sld [smem:[%s2]]
  %s4 = scalar_lea.smem %s0, 2
  %s5 = sld [smem:[%s4]]
  %s6 = scalar_lea.smem %s0, 3
  %s7 = sld [smem:[%s6]]
  %s8 = scalar_lea.smem %s0, 4
  %s9 = sld [smem:[%s8]]
  %s10 = scalar_lea.smem %s0, 5
  %s11 = sld [smem:[%s10]]
  %s12 = scalar_lea.smem %s0, 6
  %s13 = sld [smem:[%s12]]
  %s14 = scalar_lea.smem %s0, 7
  %s15 = sld [smem:[%s14]]
  %s16 = scalar_lea.smem %s0, 8
  %s17 = sld [smem:[%s16]]
  %s18 = scalar_lea.smem %s0, 9
  %s19 = sld [smem:[%s18]]
  %s20 = scalar_lea.smem %s0, 10
  %s21 = sld [smem:[%s20]]
  %s22 = scalar_lea.smem %s0, 11
  %s23 = sld [smem:[%s22]]
  %s24 = scalar_lea.smem %s0, 12
  %s25 = sld [smem:[%s24]]
  %s26 = scalar_lea.smem %s0, 13
  %s27 = sld [smem:[%s26]]
  %s28 = scalar_lea.smem %s0, 14
  %s29 = sld [smem:[%s28]]
  %s30 = scalar_lea.smem %s0, 15
  %s31 = sld [smem:[%s30]]
  %s32 = scalar_lea.smem %s0, 16
  %s33 = sld [smem:[%s32]]
  %s34 = scalar_lea.smem %s0, 17
  %s35 = sld [smem:[%s34]]
  %s36 = scalar_lea.smem %s0, 18
  %s37 = sld [smem:[%s36]]
  %s38 = scalar_lea.smem %s0, 19
  %s39 = sld [smem:[%s38]]
  %s40 = scalar_lea.smem %s0, 20
  %s41 = sld [smem:[%s40]]
  %s42 = scalar_lea.smem %s0, 21
  %s43 = sld [smem:[%s42]]
  %s44 = scalar_lea.smem %s0, 22
  %s45 = sld [smem:[%s44]]
  %s46 = scalar_lea.smem %s0, 23
  %s47 = sld [smem:[%s46]]
  %s48 = scalar_lea.smem %s0, 24
  %s49 = sld [smem:[%s48]]
  %s50 = scalar_lea.smem %s0, 25
  %s51 = sld [smem:[%s50]]
  %s52 = scalar_lea.smem %s0, 26
  %s53 = sld [smem:[%s52]]
  %s54 = scalar_lea.smem %s0, 27
  %s55 = sld [smem:[%s54]]
  %s56 = scalar_lea.smem %s0, 28
  %s57 = sld [smem:[%s56]]
  %s58 = scalar_lea.smem %s0, 29
  %s59 = sld [smem:[%s58]]
  %s60 = scalar_lea.smem %s0, 30
  %s61 = sld [smem:[%s60]]
  %s62 = scalar_lea.smem %s0, 31
  %s63 = sld [smem:[%s62]]
  %s64 = scalar_lea.smem %s0, 32
  %s65 = sld [smem:[%s64]]
  %66 = xla_tuple %s57, %s59, %s61, %s63, %s65
  %s67 = sld [smem:[#allocation0]]
  $region218: #{tpu_custom_call.1} parent=0
    _
  %s69 = ssub.s32 1, %s67
  %s70 = scalar_select 0, %s69, %s67
  $region1: #{tpu_custom_call.1} parent=0
    #allocation2 [shape = 'u8[16384]{0}', space=vmem, size = 0x4000, scoped, tag = 'input window, operand 0, single buffered']
    #allocation3 [shape = 's32[1]{0}', space=sflag, size = 0x4, scoped, tag = 'scoped memory for tpu_custom_call.1']
    #allocation4 [shape = 's32[1]{0}', space=sflag, size = 0x4, scoped, tag = 'scoped memory for tpu_custom_call.1']
    #allocation5 [shape = 'u8[1024]{0}', space=vmem, size = 0x400, scoped, tag = 'input window, operand 2, single buffered']
    #allocation6 [shape = 's32[1]{0}', space=sflag, size = 0x4, scoped, tag = 'scoped memory for tpu_custom_call.1']
    #allocation7 [shape = 'u8[524288]{0}', space=vmem, size = 0x80000, scoped, tag = 'input window, operand 3, single buffered']
    #allocation8 [shape = 'u8[2048]{0}', space=vmem, size = 0x800, scoped, tag = 'input window, operand 4, single buffered']
    #allocation9 [shape = 's32[1]{0}', space=sflag, size = 0x4, scoped, tag = 'scoped memory for tpu_custom_call.1']
    #allocation10 [shape = 'u8[131072]{0}', space=vmem, size = 0x20000, scoped, tag = 'input window, operand 6, single buffered']
    #allocation11 [shape = 'u8[65536]{0}', space=vmem, size = 0x10000, scoped, tag = 'input window, operand 7, single buffered']
    #allocation12 [shape = 's32[1]{0}', space=sflag, size = 0x4, scoped, tag = 'scoped memory for tpu_custom_call.1']
    #allocation13 [shape = 'u8[65536]{0}', space=vmem, size = 0x10000, scoped, tag = 'input window, operand 8, single buffered']
    #allocation14 [shape = 'u8[65536]{0}', space=vmem, size = 0x10000, scoped, tag = 'input window, operand 9, single buffered']
    #allocation15 [shape = 's32[1]{0}', space=sflag, size = 0x4, scoped, tag = 'scoped memory for tpu_custom_call.1']
    #allocation16 [shape = 'u8[8192]{0}', space=vmem, size = 0x2000, scoped, tag = 'input window, operand 11, single buffered']
    #allocation17 [shape = 'u8[131072]{0}', space=vmem, size = 0x20000, scoped, tag = 'input window, operand 12, single buffered']
    #allocation18 [shape = 's32[1]{0}', space=sflag, size = 0x4, scoped, tag = 'scoped memory for tpu_custom_call.1']
    #allocation19 [shape = 'u8[131072]{0}', space=vmem, size = 0x20000, scoped, tag = 'input window, operand 13, single buffered']
    #allocation20 [shape = 'u8[65536]{0}', space=vmem, size = 0x10000, scoped, tag = 'input window, operand 14, single buffered']
    #allocation21 [shape = 's32[1]{0}', space=sflag, size = 0x4, scoped, tag = 'scoped memory for tpu_custom_call.1']
    #allocation22 [shape = 'u8[65536]{0}', space=vmem, size = 0x10000, scoped, tag = 'input window, operand 15, single buffered']
    #allocation23 [shape = 'u8[8192]{0}', space=vmem, size = 0x2000, scoped, tag = 'input window, operand 18, single buffered']
    #allocation24 [shape = 's32[1]{0}', space=sflag, size = 0x4, scoped, tag = 'scoped memory for tpu_custom_call.1']
    #allocation25 [shape = 'u8[4096]{0}', space=vmem, size = 0x1000, scoped, tag = 'input window, operand 23, single buffered']
    #allocation26 [shape = 'u8[2048]{0}', space=vmem, size = 0x800, scoped, tag = 'input window, operand 25, single buffered']
    #allocation27 [shape = 's32[1]{0}', space=sflag, size = 0x4, scoped, tag = 'scoped memory for tpu_custom_call.1']
    #allocation28 [shape = 'u8[1024]{0}', space=vmem, size = 0x400, scoped, tag = 'output window, operand 0, single buffered']
    #allocation29 [shape = 'u8[1024]{0}', space=vmem, size = 0x400, scoped, tag = 'output window, operand 1, single buffered']
    #allocation30 [shape = 's32[1]{0}', space=sflag, size = 0x4, scoped, tag = 'scoped memory for tpu_custom_call.1']
    #allocation31 [shape = 'u8[1024]{0}', space=vmem, size = 0x400, scoped, tag = 'output window, operand 2, single buffered']
    %71 = vsyncpa [#allocation3], 0
    %72 = vsyncpa [#allocation6], 0
    %73 = vsyncpa [#allocation9], 0
    %74 = vsyncpa [#allocation12], 0
    %75 = vsyncpa [#allocation15], 0
    %76 = vsyncpa [#allocation18], 0
    %77 = vsyncpa [#allocation21], 0
    %78 = vsyncpa [#allocation24], 0
    %79 = vsyncpa [#allocation27], 0
    %80 = vsyncpa [#allocation4], 0
    %81 = vsyncpa [#allocation30], 0
    // Predicated region
    $region2: #{tpu_custom_call.1} parent=1 // pred_check
      _
    $region3: #{tpu_custom_call.1} parent=1 // pred_check_branch
      %83 = sbr.rel (0) target = $region5
    $region4: #{tpu_custom_call.1} parent=1 // pred_region
      %s85 = ssub.s32 512, 512
      %86 = vsyncadd [#allocation3], %s85
      %s87 = sshll.u32 [#allocation2], 4
      %s88 = int_to_ptr.vmem [resolvable:$true] %s87
      %93 = dma.hbm_to_vmem [thread:$0]  %s1, 512, %s88, [#allocation3], 256, 256, 16
    $region5: #{tpu_custom_call.1} parent=1 // pred_fallthru
      _
    // Predicated region
    $region6: #{tpu_custom_call.1} parent=1 // pred_check
      _
    $region7: #{tpu_custom_call.1} parent=1 // pred_check_branch
      %95 = sbr.rel (0) target = $region9
    $region8: #{tpu_custom_call.1} parent=1 // pred_region
      _
    $region9: #{tpu_custom_call.1} parent=1 // pred_fallthru
      _
    // Predicated region
    $region10: #{tpu_custom_call.1} parent=1 // pred_check
      _
    $region11: #{tpu_custom_call.1} parent=1 // pred_check_branch
      %97 = sbr.rel (0) target = $region13
    $region12: #{tpu_custom_call.1} parent=1 // pred_region
      %s99 = ssub.s32 32, 32
      %100 = vsyncadd [#allocation6], %s99
      %s102 = sshll.u32 [#allocation5], 4
      %s103 = int_to_ptr.vmem [resolvable:$true] %s102
      %105 = dma.hbm_to_vmem [thread:$0]  %s5, 32, %s103, [#allocation6]
    $region13: #{tpu_custom_call.1} parent=1 // pred_fallthru
      _
    // Predicated region
    $region14: #{tpu_custom_call.1} parent=1 // pred_check
      _
    $region15: #{tpu_custom_call.1} parent=1 // pred_check_branch
      %107 = sbr.rel (0) target = $region17
    $region16: #{tpu_custom_call.1} parent=1 // pred_region
      %s109 = ssub.s32 16384, 16384
      %110 = vsyncadd [#allocation6], %s109
      %s111 = sshll.u32 [#allocation7], 4
      %s112 = int_to_ptr.vmem [resolvable:$true] %s111
      %117 = dma.hbm_to_vmem [thread:$0]  %s7, 16384, %s112, [#allocation6], 256, 256, 16
    $region17: #{tpu_custom_call.1} parent=1 // pred_fallthru
      _
    // Predicated region
    $region18: #{tpu_custom_call.1} parent=1 // pred_check
      _
    $region19: #{tpu_custom_call.1} parent=1 // pred_check_branch
      %119 = sbr.rel (0) target = $region21
    $region20: #{tpu_custom_call.1} parent=1 // pred_region
      %s121 = ssub.s32 64, 64
      %122 = vsyncadd [#allocation9], %s121
      %s124 = sshll.u32 [#allocation8], 4
      %s125 = int_to_ptr.vmem [resolvable:$true] %s124
      %127 = dma.hbm_to_vmem [thread:$0]  %s9, 64, %s125, [#allocation9]
    $region21: #{tpu_custom_call.1} parent=1 // pred_fallthru
      _
    // Predicated region
    $region22: #{tpu_custom_call.1} parent=1 // pred_check
      _
    $region23: #{tpu_custom_call.1} parent=1 // pred_check_branch
      %129 = sbr.rel (0) target = $region25
    $region24: #{tpu_custom_call.1} parent=1 // pred_region
      _
    $region25: #{tpu_custom_call.1} parent=1 // pred_fallthru
      _
    // Predicated region
    $region26: #{tpu_custom_call.1} parent=1 // pred_check
      _
    $region27: #{tpu_custom_call.1} parent=1 // pred_check_branch
      %131 = sbr.rel (0) target = $region29
    $region28: #{tpu_custom_call.1} parent=1 // pred_region
      %s133 = ssub.s32 4096, 4096
      %134 = vsyncadd [#allocation9], %s133
      %s135 = sshll.u32 [#allocation10], 4
      %s136 = int_to_ptr.vmem [resolvable:$true] %s135
      %141 = dma.hbm_to_vmem [thread:$0]  %s13, 4096, %s136, [#allocation9], 128, 128, 8
    $region29: #{tpu_custom_call.1} parent=1 // pred_fallthru
      _
    // Predicated region
    $region30: #{tpu_custom_call.1} parent=1 // pred_check
      _
    $region31: #{tpu_custom_call.1} parent=1 // pred_check_branch
      %143 = sbr.rel (0) target = $region33
    $region32: #{tpu_custom_call.1} parent=1 // pred_region
      %s145 = ssub.s32 2048, 2048
      %146 = vsyncadd [#allocation12], %s145
      %s147 = sshll.u32 [#allocation11], 4
      %s148 = int_to_ptr.vmem [resolvable:$true] %s147
      %153 = dma.hbm_to_vmem [thread:$0]  %s15, 2048, %s148, [#allocation12], 64, 64, 4
    $region33: #{tpu_custom_call.1} parent=1 // pred_fallthru
      _
    // Predicated region
    $region34: #{tpu_custom_call.1} parent=1 // pred_check
      _
    $region35: #{tpu_custom_call.1} parent=1 // pred_check_branch
      %155 = sbr.rel (0) target = $region37
    $region36: #{tpu_custom_call.1} parent=1 // pred_region
      %s157 = ssub.s32 2048, 2048
      %158 = vsyncadd [#allocation12], %s157
      %s159 = sshll.u32 [#allocation13], 4
      %s160 = int_to_ptr.vmem [resolvable:$true] %s159
      %165 = dma.hbm_to_vmem [thread:$0]  %s17, 2048, %s160, [#allocation12], 128, 128, 8
    $region37: #{tpu_custom_call.1} parent=1 // pred_fallthru
      _
    // Predicated region
    $region38: #{tpu_custom_call.1} parent=1 // pred_check
      _
    $region39: #{tpu_custom_call.1} parent=1 // pred_check_branch
      %167 = sbr.rel (0) target = $region41
    $region40: #{tpu_custom_call.1} parent=1 // pred_region
      %s169 = ssub.s32 2048, 2048
      %170 = vsyncadd [#allocation15], %s169
      %s171 = sshll.u32 [#allocation14], 4
      %s172 = int_to_ptr.vmem [resolvable:$true] %s171
      %177 = dma.hbm_to_vmem [thread:$0]  %s19, 2048, %s172, [#allocation15], 64, 64, 4
    $region41: #{tpu_custom_call.1} parent=1 // pred_fallthru
      _
    // Predicated region
    $region42: #{tpu_custom_call.1} parent=1 // pred_check
      _
    $region43: #{tpu_custom_call.1} parent=1 // pred_check_branch
      %179 = sbr.rel (0) target = $region45
    $region44: #{tpu_custom_call.1} parent=1 // pred_region
      _
    $region45: #{tpu_custom_call.1} parent=1 // pred_fallthru
      _
    // Predicated region
    $region46: #{tpu_custom_call.1} parent=1 // pred_check
      _
    $region47: #{tpu_custom_call.1} parent=1 // pred_check_branch
      %181 = sbr.rel (0) target = $region49
    $region48: #{tpu_custom_call.1} parent=1 // pred_region
      %s183 = ssub.s32 256, 256
      %184 = vsyncadd [#allocation15], %s183
      %s186 = sshll.u32 [#allocation16], 4
      %s187 = int_to_ptr.vmem [resolvable:$true] %s186
      %189 = dma.hbm_to_vmem [thread:$0]  %s23, 256, %s187, [#allocation15]
    $region49: #{tpu_custom_call.1} parent=1 // pred_fallthru
      _
    // Predicated region
    $region50: #{tpu_custom_call.1} parent=1 // pred_check
      _
    $region51: #{tpu_custom_call.1} parent=1 // pred_check_branch
      %191 = sbr.rel (0) target = $region53
    $region52: #{tpu_custom_call.1} parent=1 // pred_region
      %s193 = ssub.s32 4096, 4096
      %194 = vsyncadd [#allocation18], %s193
      %s195 = sshll.u32 [#allocation17], 4
      %s196 = int_to_ptr.vmem [resolvable:$true] %s195
      %201 = dma.hbm_to_vmem [thread:$0]  %s25, 4096, %s196, [#allocation18], 128, 128, 8
    $region53: #{tpu_custom_call.1} parent=1 // pred_fallthru
      _
    // Predicated region
    $region54: #{tpu_custom_call.1} parent=1 // pred_check
      _
    $region55: #{tpu_custom_call.1} parent=1 // pred_check_branch
      %203 = sbr.rel (0) target = $region57
    $region56: #{tpu_custom_call.1} parent=1 // pred_region
      %s205 = ssub.s32 4096, 4096
      %206 = vsyncadd [#allocation18], %s205
      %s207 = sshll.u32 [#allocation19], 4
      %s208 = int_to_ptr.vmem [resolvable:$true] %s207
      %213 = dma.hbm_to_vmem [thread:$0]  %s27, 4096, %s208, [#allocation18], 128, 128, 8
    $region57: #{tpu_custom_call.1} parent=1 // pred_fallthru
      _
    // Predicated region
    $region58: #{tpu_custom_call.1} parent=1 // pred_check
      _
    $region59: #{tpu_custom_call.1} parent=1 // pred_check_branch
      %215 = sbr.rel (0) target = $region61
    $region60: #{tpu_custom_call.1} parent=1 // pred_region
      %s217 = ssub.s32 2048, 2048
      %218 = vsyncadd [#allocation21], %s217
      %s219 = sshll.u32 [#allocation20], 4
      %s220 = int_to_ptr.vmem [resolvable:$true] %s219
      %225 = dma.hbm_to_vmem [thread:$0]  %s29, 2048, %s220, [#allocation21], 64, 64, 4
    $region61: #{tpu_custom_call.1} parent=1 // pred_fallthru
      _
    // Predicated region
    $region62: #{tpu_custom_call.1} parent=1 // pred_check
      _
    $region63: #{tpu_custom_call.1} parent=1 // pred_check_branch
      %227 = sbr.rel (0) target = $region65
    $region64: #{tpu_custom_call.1} parent=1 // pred_region
      %s229 = ssub.s32 2048, 2048
      %230 = vsyncadd [#allocation21], %s229
      %s231 = sshll.u32 [#allocation22], 4
      %s232 = int_to_ptr.vmem [resolvable:$true] %s231
      %237 = dma.hbm_to_vmem [thread:$0]  %s31, 2048, %s232, [#allocation21], 128, 128, 8
    $region65: #{tpu_custom_call.1} parent=1 // pred_fallthru
      _
    // Predicated region
    $region66: #{tpu_custom_call.1} parent=1 // pred_check
      _
    $region67: #{tpu_custom_call.1} parent=1 // pred_check_branch
      %239 = sbr.rel (0) target = $region69
    $region68: #{tpu_custom_call.1} parent=1 // pred_region
      _
    $region69: #{tpu_custom_call.1} parent=1 // pred_fallthru
      _
    // Predicated region
    $region70: #{tpu_custom_call.1} parent=1 // pred_check
      _
    $region71: #{tpu_custom_call.1} parent=1 // pred_check_branch
      %241 = sbr.rel (0) target = $region73
    $region72: #{tpu_custom_call.1} parent=1 // pred_region
      _
    $region73: #{tpu_custom_call.1} parent=1 // pred_fallthru
      _
    // Predicated region
    $region74: #{tpu_custom_call.1} parent=1 // pred_check
      _
    $region75: #{tpu_custom_call.1} parent=1 // pred_check_branch
      %243 = sbr.rel (0) target = $region77
    $region76: #{tpu_custom_call.1} parent=1 // pred_region
      %s245 = ssub.s32 256, 256
      %246 = vsyncadd [#allocation24], %s245
      %s248 = sshll.u32 [#allocation23], 4
      %s249 = int_to_ptr.vmem [resolvable:$true] %s248
      %251 = dma.hbm_to_vmem [thread:$0]  %s37, 256, %s249, [#allocation24]
    $region77: #{tpu_custom_call.1} parent=1 // pred_fallthru
      _
    // Predicated region
    $region78: #{tpu_custom_call.1} parent=1 // pred_check
      _
    $region79: #{tpu_custom_call.1} parent=1 // pred_check_branch
      %253 = sbr.rel (0) target = $region81
    $region80: #{tpu_custom_call.1} parent=1 // pred_region
      _
    $region81: #{tpu_custom_call.1} parent=1 // pred_fallthru
      _
    // Predicated region
    $region82: #{tpu_custom_call.1} parent=1 // pred_check
      _
    $region83: #{tpu_custom_call.1} parent=1 // pred_check_branch
      %255 = sbr.rel (0) target = $region85
    $region84: #{tpu_custom_call.1} parent=1 // pred_region
      _
    $region85: #{tpu_custom_call.1} parent=1 // pred_fallthru
      _
    // Predicated region
    $region86: #{tpu_custom_call.1} parent=1 // pred_check
      _
    $region87: #{tpu_custom_call.1} parent=1 // pred_check_branch
      %257 = sbr.rel (0) target = $region89
    $region88: #{tpu_custom_call.1} parent=1 // pred_region
      _
    $region89: #{tpu_custom_call.1} parent=1 // pred_fallthru
      _
    // Predicated region
    $region90: #{tpu_custom_call.1} parent=1 // pred_check
      _
    $region91: #{tpu_custom_call.1} parent=1 // pred_check_branch
      %259 = sbr.rel (0) target = $region93
    $region92: #{tpu_custom_call.1} parent=1 // pred_region
      _
    $region93: #{tpu_custom_call.1} parent=1 // pred_fallthru
      _
    // Predicated region
    $region94: #{tpu_custom_call.1} parent=1 // pred_check
      _
    $region95: #{tpu_custom_call.1} parent=1 // pred_check_branch
      %261 = sbr.rel (0) target = $region97
    $region96: #{tpu_custom_call.1} parent=1 // pred_region
      %s263 = ssub.s32 128, 128
      %264 = vsyncadd [#allocation24], %s263
      %s266 = sshll.u32 [#allocation25], 4
      %s267 = int_to_ptr.vmem [resolvable:$true] %s266
      %269 = dma.hbm_to_vmem [thread:$0]  %s47, 128, %s267, [#allocation24]
    $region97: #{tpu_custom_call.1} parent=1 // pred_fallthru
      _
    // Predicated region
    $region98: #{tpu_custom_call.1} parent=1 // pred_check
      _
    $region99: #{tpu_custom_call.1} parent=1 // pred_check_branch
      %271 = sbr.rel (0) target = $region101
    $region100: #{tpu_custom_call.1} parent=1 // pred_region
      _
    $region101: #{tpu_custom_call.1} parent=1 // pred_fallthru
      _
    // Predicated region
    $region102: #{tpu_custom_call.1} parent=1 // pred_check
      _
    $region103: #{tpu_custom_call.1} parent=1 // pred_check_branch
      %273 = sbr.rel (0) target = $region105
    $region104: #{tpu_custom_call.1} parent=1 // pred_region
      %s275 = ssub.s32 64, 64
      %276 = vsyncadd [#allocation27], %s275
      %s278 = sshll.u32 [#allocation26], 4
      %s279 = int_to_ptr.vmem [resolvable:$true] %s278
      %281 = dma.hbm_to_vmem [thread:$0]  %s51, 64, %s279, [#allocation27]
    $region105: #{tpu_custom_call.1} parent=1 // pred_fallthru
      _
    // Predicated region
    $region106: #{tpu_custom_call.1} parent=1 // pred_check
      _
    $region107: #{tpu_custom_call.1} parent=1 // pred_check_branch
      %283 = sbr.rel (0) target = $region109
    $region108: #{tpu_custom_call.1} parent=1 // pred_region
      _
    $region109: #{tpu_custom_call.1} parent=1 // pred_fallthru
      _
    // Predicated region
    $region110: #{tpu_custom_call.1} parent=1 // pred_check
      _
    $region111: #{tpu_custom_call.1} parent=1 // pred_check_branch
      %285 = sbr.rel (0) target = $region113
    $region112: #{tpu_custom_call.1} parent=1 // pred_region
      _
    $region113: #{tpu_custom_call.1} parent=1 // pred_fallthru
      _
    // Predicated region
    $region114: #{tpu_custom_call.1} parent=1 // pred_check
      _
    $region115: #{tpu_custom_call.1} parent=1 // pred_check_branch
      %287 = sbr.rel (0) target = $region117
    $region116: #{tpu_custom_call.1} parent=1 // pred_region
      %288 = dma.done [#allocation3], 512
    $region117: #{tpu_custom_call.1} parent=1 // pred_fallthru
      _
    // Predicated region
    $region118: #{tpu_custom_call.1} parent=1 // pred_check
      _
    $region119: #{tpu_custom_call.1} parent=1 // pred_check_branch
      %290 = sbr.rel (0) target = $region121
    $region120: #{tpu_custom_call.1} parent=1 // pred_region
      %291 = dma.done [#allocation6], 32
    $region121: #{tpu_custom_call.1} parent=1 // pred_fallthru
      _
    // Predicated region
    $region122: #{tpu_custom_call.1} parent=1 // pred_check
      _
    $region123: #{tpu_custom_call.1} parent=1 // pred_check_branch
      %293 = sbr.rel (0) target = $region125
    $region124: #{tpu_custom_call.1} parent=1 // pred_region
      %294 = dma.done [#allocation6], 16384
    $region125: #{tpu_custom_call.1} parent=1 // pred_fallthru
      _
    // Predicated region
    $region126: #{tpu_custom_call.1} parent=1 // pred_check
      _
    $region127: #{tpu_custom_call.1} parent=1 // pred_check_branch
      %296 = sbr.rel (0) target = $region129
    $region128: #{tpu_custom_call.1} parent=1 // pred_region
      %297 = dma.done [#allocation9], 64
    $region129: #{tpu_custom_call.1} parent=1 // pred_fallthru
      _
    // Predicated region
    $region130: #{tpu_custom_call.1} parent=1 // pred_check
      _
    $region131: #{tpu_custom_call.1} parent=1 // pred_check_branch
      %299 = sbr.rel (0) target = $region133
    $region132: #{tpu_custom_call.1} parent=1 // pred_region
      %300 = dma.done [#allocation9], 4096
    $region133: #{tpu_custom_call.1} parent=1 // pred_fallthru
      _
    // Predicated region
    $region134: #{tpu_custom_call.1} parent=1 // pred_check
      _
    $region135: #{tpu_custom_call.1} parent=1 // pred_check_branch
      %302 = sbr.rel (0) target = $region137
    $region136: #{tpu_custom_call.1} parent=1 // pred_region
      %303 = dma.done [#allocation12], 2048
    $region137: #{tpu_custom_call.1} parent=1 // pred_fallthru
      _
    // Predicated region
    $region138: #{tpu_custom_call.1} parent=1 // pred_check
      _
    $region139: #{tpu_custom_call.1} parent=1 // pred_check_branch
      %305 = sbr.rel (0) target = $region141
    $region140: #{tpu_custom_call.1} parent=1 // pred_region
      %306 = dma.done [#allocation12], 2048
    $region141: #{tpu_custom_call.1} parent=1 // pred_fallthru
      _
    // Predicated region
    $region142: #{tpu_custom_call.1} parent=1 // pred_check
      _
    $region143: #{tpu_custom_call.1} parent=1 // pred_check_branch
      %308 = sbr.rel (0) target = $region145
    $region144: #{tpu_custom_call.1} parent=1 // pred_region
      %309 = dma.done [#allocation15], 2048
    $region145: #{tpu_custom_call.1} parent=1 // pred_fallthru
      _
    // Predicated region
    $region146: #{tpu_custom_call.1} parent=1 // pred_check
      _
    $region147: #{tpu_custom_call.1} parent=1 // pred_check_branch
      %311 = sbr.rel (0) target = $region149
    $region148: #{tpu_custom_call.1} parent=1 // pred_region
      %312 = dma.done [#allocation15], 256
    $region149: #{tpu_custom_call.1} parent=1 // pred_fallthru
      _
    // Predicated region
    $region150: #{tpu_custom_call.1} parent=1 // pred_check
      _
    $region151: #{tpu_custom_call.1} parent=1 // pred_check_branch
      %314 = sbr.rel (0) target = $region153
    $region152: #{tpu_custom_call.1} parent=1 // pred_region
      %315 = dma.done [#allocation18], 4096
    $region153: #{tpu_custom_call.1} parent=1 // pred_fallthru
      _
    // Predicated region
    $region154: #{tpu_custom_call.1} parent=1 // pred_check
      _
    $region155: #{tpu_custom_call.1} parent=1 // pred_check_branch
      %317 = sbr.rel (0) target = $region157
    $region156: #{tpu_custom_call.1} parent=1 // pred_region
      %318 = dma.done [#allocation18], 4096
    $region157: #{tpu_custom_call.1} parent=1 // pred_fallthru
      _
    // Predicated region
    $region158: #{tpu_custom_call.1} parent=1 // pred_check
      _
    $region159: #{tpu_custom_call.1} parent=1 // pred_check_branch
      %320 = sbr.rel (0) target = $region161
    $region160: #{tpu_custom_call.1} parent=1 // pred_region
      %321 = dma.done [#allocation21], 2048
    $region161: #{tpu_custom_call.1} parent=1 // pred_fallthru
      _
    // Predicated region
    $region162: #{tpu_custom_call.1} parent=1 // pred_check
      _
    $region163: #{tpu_custom_call.1} parent=1 // pred_check_branch
      %323 = sbr.rel (0) target = $region165
    $region164: #{tpu_custom_call.1} parent=1 // pred_region
      %324 = dma.done [#allocation21], 2048
    $region165: #{tpu_custom_call.1} parent=1 // pred_fallthru
      _
    // Predicated region
    $region166: #{tpu_custom_call.1} parent=1 // pred_check
      _
    $region167: #{tpu_custom_call.1} parent=1 // pred_check_branch
      %326 = sbr.rel (0) target = $region169
    $region168: #{tpu_custom_call.1} parent=1 // pred_region
      %327 = dma.done [#allocation24], 256
    $region169: #{tpu_custom_call.1} parent=1 // pred_fallthru
      _
    // Predicated region
    $region170: #{tpu_custom_call.1} parent=1 // pred_check
      _
    $region171: #{tpu_custom_call.1} parent=1 // pred_check_branch
      %329 = sbr.rel (0) target = $region173
    $region172: #{tpu_custom_call.1} parent=1 // pred_region
      %330 = dma.done [#allocation24], 128
    $region173: #{tpu_custom_call.1} parent=1 // pred_fallthru
      _
    // Predicated region
    $region174: #{tpu_custom_call.1} parent=1 // pred_check
      _
    $region175: #{tpu_custom_call.1} parent=1 // pred_check_branch
      %332 = sbr.rel (0) target = $region177
    $region176: #{tpu_custom_call.1} parent=1 // pred_region
      %333 = dma.done [#allocation27], 64
    $region177: #{tpu_custom_call.1} parent=1 // pred_fallthru
      _
    %v335 = vld [vmem:[#allocation2] sm:$0xff]
    %v336 = vld [vmem:[#allocation2 + $0x8] sm:$0xff]
    %v337 = vld [vmem:[#allocation2 + $0x10] sm:$0xff]
    %v338 = vld [vmem:[#allocation2 + $0x18] sm:$0xff]
    %v339 = vld [vmem:[%s3] sm:$0x3]
    %v340 = vld [vmem:[#allocation5] sm:$0x3]
    %v341 = vld [vmem:[#allocation7] sm:$0xff]
    %v342 = vld [vmem:[#allocation7 + $0x8] sm:$0xff]
    %v343 = vld [vmem:[#allocation7 + $0x10] sm:$0xff]
    %v344 = vld [vmem:[#allocation7 + $0x18] sm:$0xff]
    %v345 = vld [vmem:[#allocation7 + $0x20] sm:$0xff]
    %v346 = vld [vmem:[#allocation7 + $0x28] sm:$0xff]
    %v347 = vld [vmem:[#allocation7 + $0x30] sm:$0xff]
    %v348 = vld [vmem:[#allocation7 + $0x38] sm:$0xff]
    %v349 = vld [vmem:[#allocation7 + $0x40] sm:$0xff]
    %v350 = vld [vmem:[#allocation7 + $0x48] sm:$0xff]
    %v351 = vld [vmem:[#allocation7 + $0x50] sm:$0xff]
    %v352 = vld [vmem:[#allocation7 + $0x58] sm:$0xff]
    %v353 = vld [vmem:[#allocation7 + $0x60] sm:$0xff]
    %v354 = vld [vmem:[#allocation7 + $0x68] sm:$0xff]
    %v355 = vld [vmem:[#allocation7 + $0x70] sm:$0xff]
    %v356 = vld [vmem:[#allocation7 + $0x78] sm:$0xff]
    %v357 = vld [vmem:[#allocation7 + $0x80] sm:$0xff]
    %v358 = vld [vmem:[#allocation7 + $0x88] sm:$0xff]
    %v359 = vld [vmem:[#allocation7 + $0x90] sm:$0xff]
    %v360 = vld [vmem:[#allocation7 + $0x98] sm:$0xff]
    %v361 = vld [vmem:[#allocation7 + $0xa0] sm:$0xff]
    %v362 = vld [vmem:[#allocation7 + $0xa8] sm:$0xff]
    %v363 = vld [vmem:[#allocation7 + $0xb0] sm:$0xff]
    %v364 = vld [vmem:[#allocation7 + $0xb8] sm:$0xff]
    %v365 = vld [vmem:[#allocation7 + $0xc0] sm:$0xff]
    %v366 = vld [vmem:[#allocation7 + $0xc8] sm:$0xff]
    %v367 = vld [vmem:[#allocation7 + $0xd0] sm:$0xff]
    %v368 = vld [vmem:[#allocation7 + $0xd8] sm:$0xff]
    %v369 = vld [vmem:[#allocation7 + $0xe0] sm:$0xff]
    %v370 = vld [vmem:[#allocation7 + $0xe8] sm:$0xff]
    %v371 = vld [vmem:[#allocation7 + $0xf0] sm:$0xff]
    %v372 = vld [vmem:[#allocation7 + $0xf8] sm:$0xff]
    %v373 = vld [vmem:[#allocation7 + $0x100] sm:$0xff]
    %v374 = vld [vmem:[#allocation7 + $0x108] sm:$0xff]
    %v375 = vld [vmem:[#allocation7 + $0x110] sm:$0xff]
    %v376 = vld [vmem:[#allocation7 + $0x118] sm:$0xff]
    %v377 = vld [vmem:[#allocation7 + $0x120] sm:$0xff]
    %v378 = vld [vmem:[#allocation7 + $0x128] sm:$0xff]
    %v379 = vld [vmem:[#allocation7 + $0x130] sm:$0xff]
    %v380 = vld [vmem:[#allocation7 + $0x138] sm:$0xff]
    %v381 = vld [vmem:[#allocation7 + $0x140] sm:$0xff]
    %v382 = vld [vmem:[#allocation7 + $0x148] sm:$0xff]
    %v383 = vld [vmem:[#allocation7 + $0x150] sm:$0xff]
    %v384 = vld [vmem:[#allocation7 + $0x158] sm:$0xff]
    %v385 = vld [vmem:[#allocation7 + $0x160] sm:$0xff]
    %v386 = vld [vmem:[#allocation7 + $0x168] sm:$0xff]
    %v387 = vld [vmem:[#allocation7 + $0x170] sm:$0xff]
    %v388 = vld [vmem:[#allocation7 + $0x178] sm:$0xff]
    %v389 = vld [vmem:[#allocation7 + $0x180] sm:$0xff]
    %v390 = vld [vmem:[#allocation7 + $0x188] sm:$0xff]
    %v391 = vld [vmem:[#allocation7 + $0x190] sm:$0xff]
    %v392 = vld [vmem:[#allocation7 + $0x198] sm:$0xff]
    %v393 = vld [vmem:[#allocation7 + $0x1a0] sm:$0xff]
    %v394 = vld [vmem:[#allocation7 + $0x1a8] sm:$0xff]
    %v395 = vld [vmem:[#allocation7 + $0x1b0] sm:$0xff]
    %v396 = vld [vmem:[#allocation7 + $0x1b8] sm:$0xff]
    %v397 = vld [vmem:[#allocation7 + $0x1c0] sm:$0xff]
    %v398 = vld [vmem:[#allocation7 + $0x1c8] sm:$0xff]
    %v399 = vld [vmem:[#allocation7 + $0x1d0] sm:$0xff]
    %v400 = vld [vmem:[#allocation7 + $0x1d8] sm:$0xff]
    %v401 = vld [vmem:[#allocation7 + $0x1e0] sm:$0xff]
    %v402 = vld [vmem:[#allocation7 + $0x1e8] sm:$0xff]
    %v403 = vld [vmem:[#allocation7 + $0x1f0] sm:$0xff]
    %v404 = vld [vmem:[#allocation7 + $0x1f8] sm:$0xff]
    %v405 = vld [vmem:[#allocation7 + $0x200] sm:$0xff]
    %v406 = vld [vmem:[#allocation7 + $0x208] sm:$0xff]
    %v407 = vld [vmem:[#allocation7 + $0x210] sm:$0xff]
    %v408 = vld [vmem:[#allocation7 + $0x218] sm:$0xff]
    %v409 = vld [vmem:[#allocation7 + $0x220] sm:$0xff]
    %v410 = vld [vmem:[#allocation7 + $0x228] sm:$0xff]
    %v411 = vld [vmem:[#allocation7 + $0x230] sm:$0xff]
    %v412 = vld [vmem:[#allocation7 + $0x238] sm:$0xff]
    %v413 = vld [vmem:[#allocation7 + $0x240] sm:$0xff]
    %v414 = vld [vmem:[#allocation7 + $0x248] sm:$0xff]
    %v415 = vld [vmem:[#allocation7 + $0x250] sm:$0xff]
    %v416 = vld [vmem:[#allocation7 + $0x258] sm:$0xff]
    %v417 = vld [vmem:[#allocation7 + $0x260] sm:$0xff]
    %v418 = vld [vmem:[#allocation7 + $0x268] sm:$0xff]
    %v419 = vld [vmem:[#allocation7 + $0x270] sm:$0xff]
    %v420 = vld [vmem:[#allocation7 + $0x278] sm:$0xff]
    %v421 = vld [vmem:[#allocation7 + $0x280] sm:$0xff]
    %v422 = vld [vmem:[#allocation7 + $0x288] sm:$0xff]
    %v423 = vld [vmem:[#allocation7 + $0x290] sm:$0xff]
    %v424 = vld [vmem:[#allocation7 + $0x298] sm:$0xff]
    %v425 = vld [vmem:[#allocation7 + $0x2a0] sm:$0xff]
    %v426 = vld [vmem:[#allocation7 + $0x2a8] sm:$0xff]
    %v427 = vld [vmem:[#allocation7 + $0x2b0] sm:$0xff]
    %v428 = vld [vmem:[#allocation7 + $0x2b8] sm:$0xff]
    %v429 = vld [vmem:[#allocation7 + $0x2c0] sm:$0xff]
    %v430 = vld [vmem:[#allocation7 + $0x2c8] sm:$0xff]
    %v431 = vld [vmem:[#allocation7 + $0x2d0] sm:$0xff]
    %v432 = vld [vmem:[#allocation7 + $0x2d8] sm:$0xff]
    %v433 = vld [vmem:[#allocation7 + $0x2e0] sm:$0xff]
    %v434 = vld [vmem:[#allocation7 + $0x2e8] sm:$0xff]
    %v435 = vld [vmem:[#allocation7 + $0x2f0] sm:$0xff]
    %v436 = vld [vmem:[#allocation7 + $0x2f8] sm:$0xff]
    %v437 = vld [vmem:[#allocation7 + $0x300] sm:$0xff]
    %v438 = vld [vmem:[#allocation7 + $0x308] sm:$0xff]
    %v439 = vld [vmem:[#allocation7 + $0x310] sm:$0xff]
    %v440 = vld [vmem:[#allocation7 + $0x318] sm:$0xff]
    %v441 = vld [vmem:[#allocation7 + $0x320] sm:$0xff]
    %v442 = vld [vmem:[#allocation7 + $0x328] sm:$0xff]
    %v443 = vld [vmem:[#allocation7 + $0x330] sm:$0xff]
    %v444 = vld [vmem:[#allocation7 + $0x338] sm:$0xff]
    %v445 = vld [vmem:[#allocation7 + $0x340] sm:$0xff]
    %v446 = vld [vmem:[#allocation7 + $0x348] sm:$0xff]
    %v447 = vld [vmem:[#allocation7 + $0x350] sm:$0xff]
    %v448 = vld [vmem:[#allocation7 + $0x358] sm:$0xff]
    %v449 = vld [vmem:[#allocation7 + $0x360] sm:$0xff]
    %v450 = vld [vmem:[#allocation7 + $0x368] sm:$0xff]
    %v451 = vld [vmem:[#allocation7 + $0x370] sm:$0xff]
    %v452 = vld [vmem:[#allocation7 + $0x378] sm:$0xff]
    %v453 = vld [vmem:[#allocation7 + $0x380] sm:$0xff]
    %v454 = vld [vmem:[#allocation7 + $0x388] sm:$0xff]
    %v455 = vld [vmem:[#allocation7 + $0x390] sm:$0xff]
    %v456 = vld [vmem:[#allocation7 + $0x398] sm:$0xff]
    %v457 = vld [vmem:[#allocation7 + $0x3a0] sm:$0xff]
    %v458 = vld [vmem:[#allocation7 + $0x3a8] sm:$0xff]
    %v459 = vld [vmem:[#allocation7 + $0x3b0] sm:$0xff]
    %v460 = vld [vmem:[#allocation7 + $0x3b8] sm:$0xff]
    %v461 = vld [vmem:[#allocation7 + $0x3c0] sm:$0xff]
    %v462 = vld [vmem:[#allocation7 + $0x3c8] sm:$0xff]
    %v463 = vld [vmem:[#allocation7 + $0x3d0] sm:$0xff]
    %v464 = vld [vmem:[#allocation7 + $0x3d8] sm:$0xff]
    %v465 = vld [vmem:[#allocation7 + $0x3e0] sm:$0xff]
    %v466 = vld [vmem:[#allocation7 + $0x3e8] sm:$0xff]
    %v467 = vld [vmem:[#allocation7 + $0x3f0] sm:$0xff]
    %v468 = vld [vmem:[#allocation7 + $0x3f8] sm:$0xff]
    %v469 = vld [vmem:[#allocation8] sm:$0xf]
    %v471 = vlaneseq
    %v472 = vshrl.u32 %v471, 7
    %v473 = vsub.s32 0, %v472
    %v474 = vrot.slane %v469, %v473
    %v475 = vlaneseq
    %v476 = vshrl.u32 %v475, 7
    %v477 = vsub.s32 1, %v476
    %v478 = vrot.slane %v469, %v477
    %v479 = vlaneseq
    %v480 = vshrl.u32 %v479, 7
    %v481 = vsub.s32 2, %v480
    %v482 = vrot.slane %v469, %v481
    %v483 = vlaneseq
    %v484 = vshrl.u32 %v483, 7
    %v485 = vsub.s32 3, %v484
    %v486 = vrot.slane %v469, %v485
    %v495 = vunpack.c.l.b16 %v335
    %v496 = vunpack.c.h.b16 %v335
    %v497 = vunpack.c.l.b16 %v336
    %v498 = vunpack.c.h.b16 %v336
    %v499 = vunpack.c.l.b16 %v337
    %v500 = vunpack.c.h.b16 %v337
    %v501 = vunpack.c.l.b16 %v338
    %v502 = vunpack.c.h.b16 %v338
    %v503 = vpack.c.b16 %v499, %v495
    %v504 = vpack.c.b16 %v500, %v496
    %v505 = vpack.c.b16 %v501, %v497
    %v506 = vpack.c.b16 %v502, %v498
    %v639 = vunpack.c.l.b16 %v341
    %v640 = vunpack.c.h.b16 %v341
    %v641 = vunpack.c.l.b16 %v342
    %v642 = vunpack.c.h.b16 %v342
    %v643 = vunpack.c.l.b16 %v343
    %v644 = vunpack.c.h.b16 %v343
    %v645 = vunpack.c.l.b16 %v344
    %v646 = vunpack.c.h.b16 %v344
    %v647 = vunpack.c.l.b16 %v345
    %v648 = vunpack.c.h.b16 %v345
    %v649 = vunpack.c.l.b16 %v346
    %v650 = vunpack.c.h.b16 %v346
    %v651 = vunpack.c.l.b16 %v347
    %v652 = vunpack.c.h.b16 %v347
    %v653 = vunpack.c.l.b16 %v348
    %v654 = vunpack.c.h.b16 %v348
    %v655 = vunpack.c.l.b16 %v349
    %v656 = vunpack.c.h.b16 %v349
    %v657 = vunpack.c.l.b16 %v350
    %v658 = vunpack.c.h.b16 %v350
    %v659 = vunpack.c.l.b16 %v351
    %v660 = vunpack.c.h.b16 %v351
    %v661 = vunpack.c.l.b16 %v352
    %v662 = vunpack.c.h.b16 %v352
    %v663 = vunpack.c.l.b16 %v353
    %v664 = vunpack.c.h.b16 %v353
    %v665 = vunpack.c.l.b16 %v354
    %v666 = vunpack.c.h.b16 %v354
    %v667 = vunpack.c.l.b16 %v355
    %v668 = vunpack.c.h.b16 %v355
    %v669 = vunpack.c.l.b16 %v356
    %v670 = vunpack.c.h.b16 %v356
    %v671 = vunpack.c.l.b16 %v357
    %v672 = vunpack.c.h.b16 %v357
    %v673 = vunpack.c.l.b16 %v358
    %v674 = vunpack.c.h.b16 %v358
    %v675 = vunpack.c.l.b16 %v359
    %v676 = vunpack.c.h.b16 %v359
    %v677 = vunpack.c.l.b16 %v360
    %v678 = vunpack.c.h.b16 %v360
    %v679 = vunpack.c.l.b16 %v361
    %v680 = vunpack.c.h.b16 %v361
    %v681 = vunpack.c.l.b16 %v362
    %v682 = vunpack.c.h.b16 %v362
    %v683 = vunpack.c.l.b16 %v363
    %v684 = vunpack.c.h.b16 %v363
    %v685 = vunpack.c.l.b16 %v364
    %v686 = vunpack.c.h.b16 %v364
    %v687 = vunpack.c.l.b16 %v365
    %v688 = vunpack.c.h.b16 %v365
    %v689 = vunpack.c.l.b16 %v366
    %v690 = vunpack.c.h.b16 %v366
    %v691 = vunpack.c.l.b16 %v367
    %v692 = vunpack.c.h.b16 %v367
    %v693 = vunpack.c.l.b16 %v368
    %v694 = vunpack.c.h.b16 %v368
    %v695 = vunpack.c.l.b16 %v369
    %v696 = vunpack.c.h.b16 %v369
    %v697 = vunpack.c.l.b16 %v370
    %v698 = vunpack.c.h.b16 %v370
    %v699 = vunpack.c.l.b16 %v371
    %v700 = vunpack.c.h.b16 %v371
    %v701 = vunpack.c.l.b16 %v372
    %v702 = vunpack.c.h.b16 %v372
    %v703 = vunpack.c.l.b16 %v373
    %v704 = vunpack.c.h.b16 %v373
    %v705 = vunpack.c.l.b16 %v374
    %v706 = vunpack.c.h.b16 %v374
    %v707 = vunpack.c.l.b16 %v375
    %v708 = vunpack.c.h.b16 %v375
    %v709 = vunpack.c.l.b16 %v376
    %v710 = vunpack.c.h.b16 %v376
    %v711 = vunpack.c.l.b16 %v377
    %v712 = vunpack.c.h.b16 %v377
    %v713 = vunpack.c.l.b16 %v378
    %v714 = vunpack.c.h.b16 %v378
    %v715 = vunpack.c.l.b16 %v379
    %v716 = vunpack.c.h.b16 %v379
    %v717 = vunpack.c.l.b16 %v380
    %v718 = vunpack.c.h.b16 %v380
    %v719 = vunpack.c.l.b16 %v381
    %v720 = vunpack.c.h.b16 %v381
    %v721 = vunpack.c.l.b16 %v382
    %v722 = vunpack.c.h.b16 %v382
    %v723 = vunpack.c.l.b16 %v383
    %v724 = vunpack.c.h.b16 %v383
    %v725 = vunpack.c.l.b16 %v384
    %v726 = vunpack.c.h.b16 %v384
    %v727 = vunpack.c.l.b16 %v385
    %v728 = vunpack.c.h.b16 %v385
    %v729 = vunpack.c.l.b16 %v386
    %v730 = vunpack.c.h.b16 %v386
    %v731 = vunpack.c.l.b16 %v387
    %v732 = vunpack.c.h.b16 %v387
    %v733 = vunpack.c.l.b16 %v388
    %v734 = vunpack.c.h.b16 %v388
    %v735 = vunpack.c.l.b16 %v389
    %v736 = vunpack.c.h.b16 %v389
    %v737 = vunpack.c.l.b16 %v390
    %v738 = vunpack.c.h.b16 %v390
    %v739 = vunpack.c.l.b16 %v391
    %v740 = vunpack.c.h.b16 %v391
    %v741 = vunpack.c.l.b16 %v392
    %v742 = vunpack.c.h.b16 %v392
    %v743 = vunpack.c.l.b16 %v393
    %v744 = vunpack.c.h.b16 %v393
    %v745 = vunpack.c.l.b16 %v394
    %v746 = vunpack.c.h.b16 %v394
    %v747 = vunpack.c.l.b16 %v395
    %v748 = vunpack.c.h.b16 %v395
    %v749 = vunpack.c.l.b16 %v396
    %v750 = vunpack.c.h.b16 %v396
    %v751 = vunpack.c.l.b16 %v397
    %v752 = vunpack.c.h.b16 %v397
    %v753 = vunpack.c.l.b16 %v398
    %v754 = vunpack.c.h.b16 %v398
    %v755 = vunpack.c.l.b16 %v399
    %v756 = vunpack.c.h.b16 %v399
    %v757 = vunpack.c.l.b16 %v400
    %v758 = vunpack.c.h.b16 %v400
    %v759 = vunpack.c.l.b16 %v401
    %v760 = vunpack.c.h.b16 %v401
    %v761 = vunpack.c.l.b16 %v402
    %v762 = vunpack.c.h.b16 %v402
    %v763 = vunpack.c.l.b16 %v403
    %v764 = vunpack.c.h.b16 %v403
    %v765 = vunpack.c.l.b16 %v404
    %v766 = vunpack.c.h.b16 %v404
    %v767 = vunpack.c.l.b16 %v405
    %v768 = vunpack.c.h.b16 %v405
    %v769 = vunpack.c.l.b16 %v406
    %v770 = vunpack.c.h.b16 %v406
    %v771 = vunpack.c.l.b16 %v407
    %v772 = vunpack.c.h.b16 %v407
    %v773 = vunpack.c.l.b16 %v408
    %v774 = vunpack.c.h.b16 %v408
    %v775 = vunpack.c.l.b16 %v409
    %v776 = vunpack.c.h.b16 %v409
    %v777 = vunpack.c.l.b16 %v410
    %v778 = vunpack.c.h.b16 %v410
    %v779 = vunpack.c.l.b16 %v411
    %v780 = vunpack.c.h.b16 %v411
    %v781 = vunpack.c.l.b16 %v412
    %v782 = vunpack.c.h.b16 %v412
    %v783 = vunpack.c.l.b16 %v413
    %v784 = vunpack.c.h.b16 %v413
    %v785 = vunpack.c.l.b16 %v414
    %v786 = vunpack.c.h.b16 %v414
    %v787 = vunpack.c.l.b16 %v415
    %v788 = vunpack.c.h.b16 %v415
    %v789 = vunpack.c.l.b16 %v416
    %v790 = vunpack.c.h.b16 %v416
    %v791 = vunpack.c.l.b16 %v417
    %v792 = vunpack.c.h.b16 %v417
    %v793 = vunpack.c.l.b16 %v418
    %v794 = vunpack.c.h.b16 %v418
    %v795 = vunpack.c.l.b16 %v419
    %v796 = vunpack.c.h.b16 %v419
    %v797 = vunpack.c.l.b16 %v420
    %v798 = vunpack.c.h.b16 %v420
    %v799 = vunpack.c.l.b16 %v421
    %v800 = vunpack.c.h.b16 %v421
    %v801 = vunpack.c.l.b16 %v422
    %v802 = vunpack.c.h.b16 %v422
    %v803 = vunpack.c.l.b16 %v423
    %v804 = vunpack.c.h.b16 %v423
    %v805 = vunpack.c.l.b16 %v424
    %v806 = vunpack.c.h.b16 %v424
    %v807 = vunpack.c.l.b16 %v425
    %v808 = vunpack.c.h.b16 %v425
    %v809 = vunpack.c.l.b16 %v426
    %v810 = vunpack.c.h.b16 %v426
    %v811 = vunpack.c.l.b16 %v427
    %v812 = vunpack.c.h.b16 %v427
    %v813 = vunpack.c.l.b16 %v428
    %v814 = vunpack.c.h.b16 %v428
    %v815 = vunpack.c.l.b16 %v429
    %v816 = vunpack.c.h.b16 %v429
    %v817 = vunpack.c.l.b16 %v430
    %v818 = vunpack.c.h.b16 %v430
    %v819 = vunpack.c.l.b16 %v431
    %v820 = vunpack.c.h.b16 %v431
    %v821 = vunpack.c.l.b16 %v432
    %v822 = vunpack.c.h.b16 %v432
    %v823 = vunpack.c.l.b16 %v433
    %v824 = vunpack.c.h.b16 %v433
    %v825 = vunpack.c.l.b16 %v434
    %v826 = vunpack.c.h.b16 %v434
    %v827 = vunpack.c.l.b16 %v435
    %v828 = vunpack.c.h.b16 %v435
    %v829 = vunpack.c.l.b16 %v436
    %v830 = vunpack.c.h.b16 %v436
    %v831 = vunpack.c.l.b16 %v437
    %v832 = vunpack.c.h.b16 %v437
    %v833 = vunpack.c.l.b16 %v438
    %v834 = vunpack.c.h.b16 %v438
    %v835 = vunpack.c.l.b16 %v439
    %v836 = vunpack.c.h.b16 %v439
    %v837 = vunpack.c.l.b16 %v440
    %v838 = vunpack.c.h.b16 %v440
    %v839 = vunpack.c.l.b16 %v441
    %v840 = vunpack.c.h.b16 %v441
    %v841 = vunpack.c.l.b16 %v442
    %v842 = vunpack.c.h.b16 %v442
    %v843 = vunpack.c.l.b16 %v443
    %v844 = vunpack.c.h.b16 %v443
    %v845 = vunpack.c.l.b16 %v444
    %v846 = vunpack.c.h.b16 %v444
    %v847 = vunpack.c.l.b16 %v445
    %v848 = vunpack.c.h.b16 %v445
    %v849 = vunpack.c.l.b16 %v446
    %v850 = vunpack.c.h.b16 %v446
    %v851 = vunpack.c.l.b16 %v447
    %v852 = vunpack.c.h.b16 %v447
    %v853 = vunpack.c.l.b16 %v448
    %v854 = vunpack.c.h.b16 %v448
    %v855 = vunpack.c.l.b16 %v449
    %v856 = vunpack.c.h.b16 %v449
    %v857 = vunpack.c.l.b16 %v450
    %v858 = vunpack.c.h.b16 %v450
    %v859 = vunpack.c.l.b16 %v451
    %v860 = vunpack.c.h.b16 %v451
    %v861 = vunpack.c.l.b16 %v452
    %v862 = vunpack.c.h.b16 %v452
    %v863 = vunpack.c.l.b16 %v453
    %v864 = vunpack.c.h.b16 %v453
    %v865 = vunpack.c.l.b16 %v454
    %v866 = vunpack.c.h.b16 %v454
    %v867 = vunpack.c.l.b16 %v455
    %v868 = vunpack.c.h.b16 %v455
    %v869 = vunpack.c.l.b16 %v456
    %v870 = vunpack.c.h.b16 %v456
    %v871 = vunpack.c.l.b16 %v457
    %v872 = vunpack.c.h.b16 %v457
    %v873 = vunpack.c.l.b16 %v458
    %v874 = vunpack.c.h.b16 %v458
    %v875 = vunpack.c.l.b16 %v459
    %v876 = vunpack.c.h.b16 %v459
    %v877 = vunpack.c.l.b16 %v460
    %v878 = vunpack.c.h.b16 %v460
    %v879 = vunpack.c.l.b16 %v461
    %v880 = vunpack.c.h.b16 %v461
    %v881 = vunpack.c.l.b16 %v462
    %v882 = vunpack.c.h.b16 %v462
    %v883 = vunpack.c.l.b16 %v463
    %v884 = vunpack.c.h.b16 %v463
    %v885 = vunpack.c.l.b16 %v464
    %v886 = vunpack.c.h.b16 %v464
    %v887 = vunpack.c.l.b16 %v465
    %v888 = vunpack.c.h.b16 %v465
    %v889 = vunpack.c.l.b16 %v466
    %v890 = vunpack.c.h.b16 %v466
    %v891 = vunpack.c.l.b16 %v467
    %v892 = vunpack.c.h.b16 %v467
    %v893 = vunpack.c.l.b16 %v468
    %v894 = vunpack.c.h.b16 %v468
    %v895 = vpack.c.b16 %v643, %v639
    %v896 = vpack.c.b16 %v644, %v640
    %v897 = vpack.c.b16 %v645, %v641
    %v898 = vpack.c.b16 %v646, %v642
    %v899 = vpack.c.b16 %v651, %v647
    %v900 = vpack.c.b16 %v652, %v648
    %v901 = vpack.c.b16 %v653, %v649
    %v902 = vpack.c.b16 %v654, %v650
    %v903 = vpack.c.b16 %v659, %v655
    %v904 = vpack.c.b16 %v660, %v656
    %v905 = vpack.c.b16 %v661, %v657
    %v906 = vpack.c.b16 %v662, %v658
    %v907 = vpack.c.b16 %v667, %v663
    %v908 = vpack.c.b16 %v668, %v664
    %v909 = vpack.c.b16 %v669, %v665
    %v910 = vpack.c.b16 %v670, %v666
    %v911 = vpack.c.b16 %v675, %v671
    %v912 = vpack.c.b16 %v676, %v672
    %v913 = vpack.c.b16 %v677, %v673
    %v914 = vpack.c.b16 %v678, %v674
    %v915 = vpack.c.b16 %v683, %v679
    %v916 = vpack.c.b16 %v684, %v680
    %v917 = vpack.c.b16 %v685, %v681
    %v918 = vpack.c.b16 %v686, %v682
    %v919 = vpack.c.b16 %v691, %v687
    %v920 = vpack.c.b16 %v692, %v688
    %v921 = vpack.c.b16 %v693, %v689
    %v922 = vpack.c.b16 %v694, %v690
    %v923 = vpack.c.b16 %v699, %v695
    %v924 = vpack.c.b16 %v700, %v696
    %v925 = vpack.c.b16 %v701, %v697
    %v926 = vpack.c.b16 %v702, %v698
    %v927 = vpack.c.b16 %v707, %v703
    %v928 = vpack.c.b16 %v708, %v704
    %v929 = vpack.c.b16 %v709, %v705
    %v930 = vpack.c.b16 %v710, %v706
    %v931 = vpack.c.b16 %v715, %v711
    %v932 = vpack.c.b16 %v716, %v712
    %v933 = vpack.c.b16 %v717, %v713
    %v934 = vpack.c.b16 %v718, %v714
    %v935 = vpack.c.b16 %v723, %v719
    %v936 = vpack.c.b16 %v724, %v720
    %v937 = vpack.c.b16 %v725, %v721
    %v938 = vpack.c.b16 %v726, %v722
    %v939 = vpack.c.b16 %v731, %v727
    %v940 = vpack.c.b16 %v732, %v728
    %v941 = vpack.c.b16 %v733, %v729
    %v942 = vpack.c.b16 %v734, %v730
    %v943 = vpack.c.b16 %v739, %v735
    %v944 = vpack.c.b16 %v740, %v736
    %v945 = vpack.c.b16 %v741, %v737
    %v946 = vpack.c.b16 %v742, %v738
    %v947 = vpack.c.b16 %v747, %v743
    %v948 = vpack.c.b16 %v748, %v744
    %v949 = vpack.c.b16 %v749, %v745
    %v950 = vpack.c.b16 %v750, %v746
    %v951 = vpack.c.b16 %v755, %v751
    %v952 = vpack.c.b16 %v756, %v752
    %v953 = vpack.c.b16 %v757, %v753
    %v954 = vpack.c.b16 %v758, %v754
    %v955 = vpack.c.b16 %v763, %v759
    %v956 = vpack.c.b16 %v764, %v760
    %v957 = vpack.c.b16 %v765, %v761
    %v958 = vpack.c.b16 %v766, %v762
    %v959 = vpack.c.b16 %v771, %v767
    %v960 = vpack.c.b16 %v772, %v768
    %v961 = vpack.c.b16 %v773, %v769
    %v962 = vpack.c.b16 %v774, %v770
    %v963 = vpack.c.b16 %v779, %v775
    %v964 = vpack.c.b16 %v780, %v776
    %v965 = vpack.c.b16 %v781, %v777
    %v966 = vpack.c.b16 %v782, %v778
    %v967 = vpack.c.b16 %v787, %v783
    %v968 = vpack.c.b16 %v788, %v784
    %v969 = vpack.c.b16 %v789, %v785
    %v970 = vpack.c.b16 %v790, %v786
    %v971 = vpack.c.b16 %v795, %v791
    %v972 = vpack.c.b16 %v796, %v792
    %v973 = vpack.c.b16 %v797, %v793
    %v974 = vpack.c.b16 %v798, %v794
    %v975 = vpack.c.b16 %v803, %v799
    %v976 = vpack.c.b16 %v804, %v800
    %v977 = vpack.c.b16 %v805, %v801
    %v978 = vpack.c.b16 %v806, %v802
    %v979 = vpack.c.b16 %v811, %v807
    %v980 = vpack.c.b16 %v812, %v808
    %v981 = vpack.c.b16 %v813, %v809
    %v982 = vpack.c.b16 %v814, %v810
    %v983 = vpack.c.b16 %v819, %v815
    %v984 = vpack.c.b16 %v820, %v816
    %v985 = vpack.c.b16 %v821, %v817
    %v986 = vpack.c.b16 %v822, %v818
    %v987 = vpack.c.b16 %v827, %v823
    %v988 = vpack.c.b16 %v828, %v824
    %v989 = vpack.c.b16 %v829, %v825
    %v990 = vpack.c.b16 %v830, %v826
    %v991 = vpack.c.b16 %v835, %v831
    %v992 = vpack.c.b16 %v836, %v832
    %v993 = vpack.c.b16 %v837, %v833
    %v994 = vpack.c.b16 %v838, %v834
    %v995 = vpack.c.b16 %v843, %v839
    %v996 = vpack.c.b16 %v844, %v840
    %v997 = vpack.c.b16 %v845, %v841
    %v998 = vpack.c.b16 %v846, %v842
    %v999 = vpack.c.b16 %v851, %v847
    %v1000 = vpack.c.b16 %v852, %v848
    %v1001 = vpack.c.b16 %v853, %v849
    %v1002 = vpack.c.b16 %v854, %v850
    %v1003 = vpack.c.b16 %v859, %v855
    %v1004 = vpack.c.b16 %v860, %v856
    %v1005 = vpack.c.b16 %v861, %v857
    %v1006 = vpack.c.b16 %v862, %v858
    %v1007 = vpack.c.b16 %v867, %v863
    %v1008 = vpack.c.b16 %v868, %v864
    %v1009 = vpack.c.b16 %v869, %v865
    %v1010 = vpack.c.b16 %v870, %v866
    %v1011 = vpack.c.b16 %v875, %v871
    %v1012 = vpack.c.b16 %v876, %v872
    %v1013 = vpack.c.b16 %v877, %v873
    %v1014 = vpack.c.b16 %v878, %v874
    %v1015 = vpack.c.b16 %v883, %v879
    %v1016 = vpack.c.b16 %v884, %v880
    %v1017 = vpack.c.b16 %v885, %v881
    %v1018 = vpack.c.b16 %v886, %v882
    %v1019 = vpack.c.b16 %v891, %v887
    %v1020 = vpack.c.b16 %v892, %v888
    %v1021 = vpack.c.b16 %v893, %v889
    %v1022 = vpack.c.b16 %v894, %v890
    %1151 = vmatprep.subr.bf16.mxu0 %v896
    %1152 = vmatpush1.bf16.msra.mxu0 %v895
    %1153 = vmatprep.subr.bf16.mxu0 %v900
    %1154 = vmatpush1.bf16.msra.mxu0 %v899
    %1155 = vmatprep.subr.bf16.mxu0 %v904
    %1156 = vmatpush1.bf16.msra.mxu0 %v903
    %1157 = vmatprep.subr.bf16.mxu0 %v908
    %1158 = vmatpush1.bf16.msra.mxu0 %v907
    %1159 = vmatprep.subr.bf16.mxu0 %v912
    %1160 = vmatpush1.bf16.msra.mxu0 %v911
    %1161 = vmatprep.subr.bf16.mxu0 %v916
    %1162 = vmatpush1.bf16.msra.mxu0 %v915
    %1163 = vmatprep.subr.bf16.mxu0 %v920
    %1164 = vmatpush1.bf16.msra.mxu0 %v919
    %1165 = vmatprep.subr.bf16.mxu0 %v924
    %1166 = vmatpush1.bf16.msra.mxu0 %v923
    %1167 = vmatprep.subr.bf16.mxu0 %v928
    %1168 = vmatpush1.bf16.msra.mxu0 %v927
    %1169 = vmatprep.subr.bf16.mxu0 %v932
    %1170 = vmatpush1.bf16.msra.mxu0 %v931
    %1171 = vmatprep.subr.bf16.mxu0 %v936
    %1172 = vmatpush1.bf16.msra.mxu0 %v935
    %1173 = vmatprep.subr.bf16.mxu0 %v940
    %1174 = vmatpush1.bf16.msra.mxu0 %v939
    %1175 = vmatprep.subr.bf16.mxu0 %v944
    %1176 = vmatpush1.bf16.msra.mxu0 %v943
    %1177 = vmatprep.subr.bf16.mxu0 %v948
    %1178 = vmatpush1.bf16.msra.mxu0 %v947
    %1179 = vmatprep.subr.bf16.mxu0 %v952
    %1180 = vmatpush1.bf16.msra.mxu0 %v951
    %1181 = vmatprep.subr.bf16.mxu0 %v956
    %1182 = vmatpush1.bf16.msra.mxu0 %v955
    %1183 = vmatprep.mubr.bf16.mxu0 %v504
    %1184 = vmatmul.mubr.bf16.gmra.mrb[0].mxu0 %v503
    %v1185 = vpop.f32.mrb[0].mxu0
    %v1186 = vadd.f32 %v474, %v1185
    %v1187 = vpop.f32.mrb[0].mxu0
    %v1188 = vadd.f32 %v478, %v1187
    %v1189 = vpop.f32.mrb[0].mxu0
    %v1190 = vadd.f32 %v474, %v1189
    %v1191 = vpop.f32.mrb[0].mxu0
    %v1192 = vadd.f32 %v478, %v1191
    %1193 = vdwg.mxu0
    %1194 = vmatprep.subr.bf16.mxu0 %v960
    %1195 = vmatpush1.bf16.msra.mxu0 %v959
    %1196 = vmatprep.subr.bf16.mxu0 %v964
    %1197 = vmatpush1.bf16.msra.mxu0 %v963
    %1198 = vmatprep.subr.bf16.mxu0 %v968
    %1199 = vmatpush1.bf16.msra.mxu0 %v967
    %1200 = vmatprep.subr.bf16.mxu0 %v972
    %1201 = vmatpush1.bf16.msra.mxu0 %v971
    %1202 = vmatprep.subr.bf16.mxu0 %v976
    %1203 = vmatpush1.bf16.msra.mxu0 %v975
    %1204 = vmatprep.subr.bf16.mxu0 %v980
    %1205 = vmatpush1.bf16.msra.mxu0 %v979
    %1206 = vmatprep.subr.bf16.mxu0 %v984
    %1207 = vmatpush1.bf16.msra.mxu0 %v983
    %1208 = vmatprep.subr.bf16.mxu0 %v988
    %1209 = vmatpush1.bf16.msra.mxu0 %v987
    %1210 = vmatprep.subr.bf16.mxu0 %v992
    %1211 = vmatpush1.bf16.msra.mxu0 %v991
    %1212 = vmatprep.subr.bf16.mxu0 %v996
    %1213 = vmatpush1.bf16.msra.mxu0 %v995
    %1214 = vmatprep.subr.bf16.mxu0 %v1000
    %1215 = vmatpush1.bf16.msra.mxu0 %v999
    %1216 = vmatprep.subr.bf16.mxu0 %v1004
    %1217 = vmatpush1.bf16.msra.mxu0 %v1003
    %1218 = vmatprep.subr.bf16.mxu0 %v1008
    %1219 = vmatpush1.bf16.msra.mxu0 %v1007
    %1220 = vmatprep.subr.bf16.mxu0 %v1012
    %1221 = vmatpush1.bf16.msra.mxu0 %v1011
    %1222 = vmatprep.subr.bf16.mxu0 %v1016
    %1223 = vmatpush1.bf16.msra.mxu0 %v1015
    %1224 = vmatprep.subr.bf16.mxu0 %v1020
    %1225 = vmatpush1.bf16.msra.mxu0 %v1019
    %1226 = vmatprep.mubr.bf16.mxu0 %v506
    %1227 = vmatmul.mubr.bf16.gmra.mrb[0].mxu0 %v505
    %v1228 = vpop.f32.mrb[0].mxu0
    %v1229 = vadd.f32 %v1186, %v1228
    %v1230 = vpop.f32.mrb[0].mxu0
    %v1231 = vadd.f32 %v1188, %v1230
    %v1232 = vpop.f32.mrb[0].mxu0
    %v1233 = vadd.f32 %v1190, %v1232
    %v1234 = vpop.f32.mrb[0].mxu0
    %v1235 = vadd.f32 %v1192, %v1234
    %1236 = vdwg.mxu0
    %1237 = vmatprep.subr.bf16.mxu0 %v898
    %1238 = vmatpush1.bf16.msra.mxu0 %v897
    %1239 = vmatprep.subr.bf16.mxu0 %v902
    %1240 = vmatpush1.bf16.msra.mxu0 %v901
    %1241 = vmatprep.subr.bf16.mxu0 %v906
    %1242 = vmatpush1.bf16.msra.mxu0 %v905
    %1243 = vmatprep.subr.bf16.mxu0 %v910
    %1244 = vmatpush1.bf16.msra.mxu0 %v909
    %1245 = vmatprep.subr.bf16.mxu0 %v914
    %1246 = vmatpush1.bf16.msra.mxu0 %v913
    %1247 = vmatprep.subr.bf16.mxu0 %v918
    %1248 = vmatpush1.bf16.msra.mxu0 %v917
    %1249 = vmatprep.subr.bf16.mxu0 %v922
    %1250 = vmatpush1.bf16.msra.mxu0 %v921
    %1251 = vmatprep.subr.bf16.mxu0 %v926
    %1252 = vmatpush1.bf16.msra.mxu0 %v925
    %1253 = vmatprep.subr.bf16.mxu0 %v930
    %1254 = vmatpush1.bf16.msra.mxu0 %v929
    %1255 = vmatprep.subr.bf16.mxu0 %v934
    %1256 = vmatpush1.bf16.msra.mxu0 %v933
    %1257 = vmatprep.subr.bf16.mxu0 %v938
    %1258 = vmatpush1.bf16.msra.mxu0 %v937
    %1259 = vmatprep.subr.bf16.mxu0 %v942
    %1260 = vmatpush1.bf16.msra.mxu0 %v941
    %1261 = vmatprep.subr.bf16.mxu0 %v946
    %1262 = vmatpush1.bf16.msra.mxu0 %v945
    %1263 = vmatprep.subr.bf16.mxu0 %v950
    %1264 = vmatpush1.bf16.msra.mxu0 %v949
    %1265 = vmatprep.subr.bf16.mxu0 %v954
    %1266 = vmatpush1.bf16.msra.mxu0 %v953
    %1267 = vmatprep.subr.bf16.mxu0 %v958
    %1268 = vmatpush1.bf16.msra.mxu0 %v957
    %1269 = vmatprep.mubr.bf16.mxu0 %v504
    %1270 = vmatmul.mubr.bf16.gmra.mrb[0].mxu0 %v503
    %v1271 = vpop.f32.mrb[0].mxu0
    %v1272 = vadd.f32 %v482, %v1271
    %v1273 = vpop.f32.mrb[0].mxu0
    %v1274 = vadd.f32 %v486, %v1273
    %v1275 = vpop.f32.mrb[0].mxu0
    %v1276 = vadd.f32 %v482, %v1275
    %v1277 = vpop.f32.mrb[0].mxu0
    %v1278 = vadd.f32 %v486, %v1277
    %1279 = vdwg.mxu0
    %1280 = vmatprep.subr.bf16.mxu0 %v962
    %1281 = vmatpush1.bf16.msra.mxu0 %v961
    %1282 = vmatprep.subr.bf16.mxu0 %v966
    %1283 = vmatpush1.bf16.msra.mxu0 %v965
    %1284 = vmatprep.subr.bf16.mxu0 %v970
    %1285 = vmatpush1.bf16.msra.mxu0 %v969
    %1286 = vmatprep.subr.bf16.mxu0 %v974
    %1287 = vmatpush1.bf16.msra.mxu0 %v973
    %1288 = vmatprep.subr.bf16.mxu0 %v978
    %1289 = vmatpush1.bf16.msra.mxu0 %v977
    %1290 = vmatprep.subr.bf16.mxu0 %v982
    %1291 = vmatpush1.bf16.msra.mxu0 %v981
    %1292 = vmatprep.subr.bf16.mxu0 %v986
    %1293 = vmatpush1.bf16.msra.mxu0 %v985
    %1294 = vmatprep.subr.bf16.mxu0 %v990
    %1295 = vmatpush1.bf16.msra.mxu0 %v989
    %1296 = vmatprep.subr.bf16.mxu0 %v994
    %1297 = vmatpush1.bf16.msra.mxu0 %v993
    %1298 = vmatprep.subr.bf16.mxu0 %v998
    %1299 = vmatpush1.bf16.msra.mxu0 %v997
    %1300 = vmatprep.subr.bf16.mxu0 %v1002
    %1301 = vmatpush1.bf16.msra.mxu0 %v1001
    %1302 = vmatprep.subr.bf16.mxu0 %v1006
    %1303 = vmatpush1.bf16.msra.mxu0 %v1005
    %1304 = vmatprep.subr.bf16.mxu0 %v1010
    %1305 = vmatpush1.bf16.msra.mxu0 %v1009
    %1306 = vmatprep.subr.bf16.mxu0 %v1014
    %1307 = vmatpush1.bf16.msra.mxu0 %v1013
    %1308 = vmatprep.subr.bf16.mxu0 %v1018
    %1309 = vmatpush1.bf16.msra.mxu0 %v1017
    %1310 = vmatprep.subr.bf16.mxu0 %v1022
    %1311 = vmatpush1.bf16.msra.mxu0 %v1021
    %1312 = vmatprep.mubr.bf16.mxu0 %v506
    %1313 = vmatmul.mubr.bf16.gmra.mrb[0].mxu0 %v505
    %v1314 = vpop.f32.mrb[0].mxu0
    %v1315 = vadd.f32 %v1272, %v1314
    %v1316 = vpop.f32.mrb[0].mxu0
    %v1317 = vadd.f32 %v1274, %v1316
    %v1318 = vpop.f32.mrb[0].mxu0
    %v1319 = vadd.f32 %v1276, %v1318
    %v1320 = vpop.f32.mrb[0].mxu0
    %v1321 = vadd.f32 %v1278, %v1320
    %1322 = vdwg.mxu0
    %v1323 = vmax.f32 %v1229, 0.0
    %v1324 = vmax.f32 %v1231, 0.0
    %v1325 = vmax.f32 %v1315, 0.0
    %v1326 = vmax.f32 %v1317, 0.0
    %v1327 = vmax.f32 %v1233, 0.0
    %v1328 = vmax.f32 %v1235, 0.0
    %v1329 = vmax.f32 %v1319, 0.0
    %v1330 = vmax.f32 %v1321, 0.0
    %vm1331 = vcmask 123904
    %v1332 = vsel %vm1331, %v339, 0.0
    %1333 = vadd.xlane.f32.xlu0 %v1332
    %v1334 = vpop.xlane.xlu0 %1333
    %v1335 = vmax.f32 %v1334, 1.0
    %v1336 = vrcp.pop %v1335
    %v1337 = vld [vmem:[#allocation16] sm:$0x3f]
    %v1338 = vld [vmem:[#allocation16 + $0x8] sm:$0x3f]
    %v1339 = vpack.c.bf16 %v1327, %v1323
    %v1340 = vpack.c.bf16 %v1328, %v1324
    %v1341 = vld [vmem:[%s11] sm:$0xff]
    %v1342 = vld [vmem:[%s11 + $0x8] sm:$0xff]
    %v1343 = vld [vmem:[%s11 + $0x10] sm:$0xff]
    %v1344 = vld [vmem:[%s11 + $0x18] sm:$0xff]
    %v1345 = vld [vmem:[%s11 + $0x20] sm:$0xff]
    %v1346 = vld [vmem:[%s11 + $0x28] sm:$0xff]
    %v1347 = vld [vmem:[%s11 + $0x30] sm:$0xff]
    %v1348 = vld [vmem:[%s11 + $0x38] sm:$0xff]
    %v1349 = vld [vmem:[%s11 + $0x40] sm:$0xff]
    %v1350 = vld [vmem:[%s11 + $0x48] sm:$0xff]
    %v1351 = vld [vmem:[%s11 + $0x50] sm:$0xff]
    %v1352 = vld [vmem:[%s11 + $0x58] sm:$0xff]
    %v1353 = vld [vmem:[%s11 + $0x60] sm:$0xff]
    %v1354 = vld [vmem:[%s11 + $0x68] sm:$0xff]
    %v1355 = vld [vmem:[%s11 + $0x70] sm:$0xff]
    %v1356 = vld [vmem:[%s11 + $0x78] sm:$0xff]
    %v1357 = vld [vmem:[%s11 + $0x80] sm:$0xff]
    %v1358 = vld [vmem:[%s11 + $0x88] sm:$0xff]
    %v1359 = vld [vmem:[%s11 + $0x90] sm:$0xff]
    %v1360 = vld [vmem:[%s11 + $0x98] sm:$0xff]
    %v1361 = vld [vmem:[%s11 + $0xa0] sm:$0xff]
    %v1362 = vld [vmem:[%s11 + $0xa8] sm:$0xff]
    %v1363 = vld [vmem:[%s11 + $0xb0] sm:$0xff]
    %v1364 = vld [vmem:[%s11 + $0xb8] sm:$0xff]
    %v1365 = vld [vmem:[%s11 + $0xc0] sm:$0xff]
    %v1366 = vld [vmem:[%s11 + $0xc8] sm:$0xff]
    %v1367 = vld [vmem:[%s11 + $0xd0] sm:$0xff]
    %v1368 = vld [vmem:[%s11 + $0xd8] sm:$0xff]
    %v1369 = vld [vmem:[%s11 + $0xe0] sm:$0xff]
    %v1370 = vld [vmem:[%s11 + $0xe8] sm:$0xff]
    %v1371 = vld [vmem:[%s11 + $0xf0] sm:$0xff]
    %v1372 = vld [vmem:[%s11 + $0xf8] sm:$0xff]
    %v1373 = vlaneseq
    %v1374 = vshrl.u32 %v1373, 7
    %v1375 = vsub.s32 0, %v1374
    %v1376 = vrot.slane %v1337, %v1375
    %v1377 = vlaneseq
    %v1378 = vshrl.u32 %v1377, 7
    %v1379 = vsub.s32 0, %v1378
    %v1380 = vrot.slane %v1338, %v1379
    %v1413 = vunpack.c.l.b16 %v1341
    %v1414 = vunpack.c.h.b16 %v1341
    %v1415 = vunpack.c.l.b16 %v1342
    %v1416 = vunpack.c.h.b16 %v1342
    %v1417 = vunpack.c.l.b16 %v1343
    %v1418 = vunpack.c.h.b16 %v1343
    %v1419 = vunpack.c.l.b16 %v1344
    %v1420 = vunpack.c.h.b16 %v1344
    %v1421 = vunpack.c.l.b16 %v1345
    %v1422 = vunpack.c.h.b16 %v1345
    %v1423 = vunpack.c.l.b16 %v1346
    %v1424 = vunpack.c.h.b16 %v1346
    %v1425 = vunpack.c.l.b16 %v1347
    %v1426 = vunpack.c.h.b16 %v1347
    %v1427 = vunpack.c.l.b16 %v1348
    %v1428 = vunpack.c.h.b16 %v1348
    %v1429 = vunpack.c.l.b16 %v1349
    %v1430 = vunpack.c.h.b16 %v1349
    %v1431 = vunpack.c.l.b16 %v1350
    %v1432 = vunpack.c.h.b16 %v1350
    %v1433 = vunpack.c.l.b16 %v1351
    %v1434 = vunpack.c.h.b16 %v1351
    %v1435 = vunpack.c.l.b16 %v1352
    %v1436 = vunpack.c.h.b16 %v1352
    %v1437 = vunpack.c.l.b16 %v1353
    %v1438 = vunpack.c.h.b16 %v1353
    %v1439 = vunpack.c.l.b16 %v1354
    %v1440 = vunpack.c.h.b16 %v1354
    %v1441 = vunpack.c.l.b16 %v1355
    %v1442 = vunpack.c.h.b16 %v1355
    %v1443 = vunpack.c.l.b16 %v1356
    %v1444 = vunpack.c.h.b16 %v1356
    %v1445 = vunpack.c.l.b16 %v1357
    %v1446 = vunpack.c.h.b16 %v1357
    %v1447 = vunpack.c.l.b16 %v1358
    %v1448 = vunpack.c.h.b16 %v1358
    %v1449 = vunpack.c.l.b16 %v1359
    %v1450 = vunpack.c.h.b16 %v1359
    %v1451 = vunpack.c.l.b16 %v1360
    %v1452 = vunpack.c.h.b16 %v1360
    %v1453 = vunpack.c.l.b16 %v1361
    %v1454 = vunpack.c.h.b16 %v1361
    %v1455 = vunpack.c.l.b16 %v1362
    %v1456 = vunpack.c.h.b16 %v1362
    %v1457 = vunpack.c.l.b16 %v1363
    %v1458 = vunpack.c.h.b16 %v1363
    %v1459 = vunpack.c.l.b16 %v1364
    %v1460 = vunpack.c.h.b16 %v1364
    %v1461 = vunpack.c.l.b16 %v1365
    %v1462 = vunpack.c.h.b16 %v1365
    %v1463 = vunpack.c.l.b16 %v1366
    %v1464 = vunpack.c.h.b16 %v1366
    %v1465 = vunpack.c.l.b16 %v1367
    %v1466 = vunpack.c.h.b16 %v1367
    %v1467 = vunpack.c.l.b16 %v1368
    %v1468 = vunpack.c.h.b16 %v1368
    %v1469 = vunpack.c.l.b16 %v1369
    %v1470 = vunpack.c.h.b16 %v1369
    %v1471 = vunpack.c.l.b16 %v1370
    %v1472 = vunpack.c.h.b16 %v1370
    %v1473 = vunpack.c.l.b16 %v1371
    %v1474 = vunpack.c.h.b16 %v1371
    %v1475 = vunpack.c.l.b16 %v1372
    %v1476 = vunpack.c.h.b16 %v1372
    %v1477 = vpack.c.b16 %v1415, %v1413
    %v1478 = vpack.c.b16 %v1416, %v1414
    %v1479 = vpack.c.b16 %v1419, %v1417
    %v1480 = vpack.c.b16 %v1420, %v1418
    %v1481 = vpack.c.b16 %v1423, %v1421
    %v1482 = vpack.c.b16 %v1424, %v1422
    %v1483 = vpack.c.b16 %v1427, %v1425
    %v1484 = vpack.c.b16 %v1428, %v1426
    %v1485 = vpack.c.b16 %v1431, %v1429
    %v1486 = vpack.c.b16 %v1432, %v1430
    %v1487 = vpack.c.b16 %v1435, %v1433
    %v1488 = vpack.c.b16 %v1436, %v1434
    %v1489 = vpack.c.b16 %v1439, %v1437
    %v1490 = vpack.c.b16 %v1440, %v1438
    %v1491 = vpack.c.b16 %v1443, %v1441
    %v1492 = vpack.c.b16 %v1444, %v1442
    %v1493 = vpack.c.b16 %v1447, %v1445
    %v1494 = vpack.c.b16 %v1448, %v1446
    %v1495 = vpack.c.b16 %v1451, %v1449
    %v1496 = vpack.c.b16 %v1452, %v1450
    %v1497 = vpack.c.b16 %v1455, %v1453
    %v1498 = vpack.c.b16 %v1456, %v1454
    %v1499 = vpack.c.b16 %v1459, %v1457
    %v1500 = vpack.c.b16 %v1460, %v1458
    %v1501 = vpack.c.b16 %v1463, %v1461
    %v1502 = vpack.c.b16 %v1464, %v1462
    %v1503 = vpack.c.b16 %v1467, %v1465
    %v1504 = vpack.c.b16 %v1468, %v1466
    %v1505 = vpack.c.b16 %v1471, %v1469
    %v1506 = vpack.c.b16 %v1472, %v1470
    %v1507 = vpack.c.b16 %v1475, %v1473
    %v1508 = vpack.c.b16 %v1476, %v1474
    %1541 = vmatprep.subr.bf16.mxu0 %v1478
    %1542 = vmatpush1.bf16.msra.mxu0 %v1477
    %1543 = vmatprep.subr.bf16.mxu0 %v1480
    %1544 = vmatpush1.bf16.msra.mxu0 %v1479
    %1545 = vmatprep.subr.bf16.mxu0 %v1482
    %1546 = vmatpush1.bf16.msra.mxu0 %v1481
    %1547 = vmatprep.subr.bf16.mxu0 %v1484
    %1548 = vmatpush1.bf16.msra.mxu0 %v1483
    %1549 = vmatprep.subr.bf16.mxu0 %v1486
    %1550 = vmatpush1.bf16.msra.mxu0 %v1485
    %1551 = vmatprep.subr.bf16.mxu0 %v1488
    %1552 = vmatpush1.bf16.msra.mxu0 %v1487
    %1553 = vmatprep.subr.bf16.mxu0 %v1490
    %1554 = vmatpush1.bf16.msra.mxu0 %v1489
    %1555 = vmatprep.subr.bf16.mxu0 %v1492
    %1556 = vmatpush1.bf16.msra.mxu0 %v1491
    %1557 = vmatprep.subr.bf16.mxu0 %v1494
    %1558 = vmatpush1.bf16.msra.mxu0 %v1493
    %1559 = vmatprep.subr.bf16.mxu0 %v1496
    %1560 = vmatpush1.bf16.msra.mxu0 %v1495
    %1561 = vmatprep.subr.bf16.mxu0 %v1498
    %1562 = vmatpush1.bf16.msra.mxu0 %v1497
    %1563 = vmatprep.subr.bf16.mxu0 %v1500
    %1564 = vmatpush1.bf16.msra.mxu0 %v1499
    %1565 = vmatprep.subr.bf16.mxu0 %v1502
    %1566 = vmatpush1.bf16.msra.mxu0 %v1501
    %1567 = vmatprep.subr.bf16.mxu0 %v1504
    %1568 = vmatpush1.bf16.msra.mxu0 %v1503
    %1569 = vmatprep.subr.bf16.mxu0 %v1506
    %1570 = vmatpush1.bf16.msra.mxu0 %v1505
    %1571 = vmatprep.subr.bf16.mxu0 %v1508
    %1572 = vmatpush1.bf16.msra.mxu0 %v1507
    %1573 = vmatprep.mubr.bf16.mxu0 %v1340
    %1574 = vmatmul.mubr.bf16.gmra.mrb[0].mxu0 %v1339
    %v1575 = vpop.f32.mrb[0].mxu0
    %v1576 = vadd.f32 %v1376, %v1575
    %v1577 = vpop.f32.mrb[0].mxu0
    %v1578 = vadd.f32 %v1380, %v1577
    %v1579 = vpop.f32.mrb[0].mxu0
    %v1580 = vadd.f32 %v1376, %v1579
    %v1581 = vpop.f32.mrb[0].mxu0
    %v1582 = vadd.f32 %v1380, %v1581
    %1583 = vdwg.mxu0
    %v1584 = vmax.f32 %v1576, 0.0
    %v1585 = vmax.f32 %v1578, 0.0
    %v1586 = vmax.f32 %v1580, 0.0
    %v1587 = vmax.f32 %v1582, 0.0
    %v1588 = vpack.c.bf16 %v1586, %v1584
    %v1589 = vpack.c.bf16 %v1587, %v1585
    %v1590 = vld [vmem:[#allocation10] sm:$0xff]
    %v1591 = vld [vmem:[#allocation10 + $0x8] sm:$0xff]
    %v1592 = vld [vmem:[#allocation10 + $0x10] sm:$0xff]
    %v1593 = vld [vmem:[#allocation10 + $0x18] sm:$0xff]
    %v1594 = vld [vmem:[#allocation10 + $0x20] sm:$0xff]
    %v1595 = vld [vmem:[#allocation10 + $0x28] sm:$0xff]
    %v1596 = vld [vmem:[#allocation10 + $0x30] sm:$0xff]
    %v1597 = vld [vmem:[#allocation10 + $0x38] sm:$0xff]
    %v1598 = vld [vmem:[#allocation10 + $0x40] sm:$0xff]
    %v1599 = vld [vmem:[#allocation10 + $0x48] sm:$0xff]
    %v1600 = vld [vmem:[#allocation10 + $0x50] sm:$0xff]
    %v1601 = vld [vmem:[#allocation10 + $0x58] sm:$0xff]
    %v1602 = vld [vmem:[#allocation10 + $0x60] sm:$0xff]
    %v1603 = vld [vmem:[#allocation10 + $0x68] sm:$0xff]
    %v1604 = vld [vmem:[#allocation10 + $0x70] sm:$0xff]
    %v1605 = vld [vmem:[#allocation10 + $0x78] sm:$0xff]
    %v1606 = vld [vmem:[#allocation10 + $0x80] sm:$0xff]
    %v1607 = vld [vmem:[#allocation10 + $0x88] sm:$0xff]
    %v1608 = vld [vmem:[#allocation10 + $0x90] sm:$0xff]
    %v1609 = vld [vmem:[#allocation10 + $0x98] sm:$0xff]
    %v1610 = vld [vmem:[#allocation10 + $0xa0] sm:$0xff]
    %v1611 = vld [vmem:[#allocation10 + $0xa8] sm:$0xff]
    %v1612 = vld [vmem:[#allocation10 + $0xb0] sm:$0xff]
    %v1613 = vld [vmem:[#allocation10 + $0xb8] sm:$0xff]
    %v1614 = vld [vmem:[#allocation10 + $0xc0] sm:$0xff]
    %v1615 = vld [vmem:[#allocation10 + $0xc8] sm:$0xff]
    %v1616 = vld [vmem:[#allocation10 + $0xd0] sm:$0xff]
    %v1617 = vld [vmem:[#allocation10 + $0xd8] sm:$0xff]
    %v1618 = vld [vmem:[#allocation10 + $0xe0] sm:$0xff]
    %v1619 = vld [vmem:[#allocation10 + $0xe8] sm:$0xff]
    %v1620 = vld [vmem:[#allocation10 + $0xf0] sm:$0xff]
    %v1621 = vld [vmem:[#allocation10 + $0xf8] sm:$0xff]
    %v1622 = vlaneseq
    %v1623 = vshrl.u32 %v1622, 7
    %v1624 = vsub.s32 1, %v1623
    %v1625 = vrot.slane %v1337, %v1624
    %v1626 = vlaneseq
    %v1627 = vshrl.u32 %v1626, 7
    %v1628 = vsub.s32 1, %v1627
    %v1629 = vrot.slane %v1338, %v1628
    %v1662 = vunpack.c.l.b16 %v1590
    %v1663 = vunpack.c.h.b16 %v1590
    %v1664 = vunpack.c.l.b16 %v1591
    %v1665 = vunpack.c.h.b16 %v1591
    %v1666 = vunpack.c.l.b16 %v1592
    %v1667 = vunpack.c.h.b16 %v1592
    %v1668 = vunpack.c.l.b16 %v1593
    %v1669 = vunpack.c.h.b16 %v1593
    %v1670 = vunpack.c.l.b16 %v1594
    %v1671 = vunpack.c.h.b16 %v1594
    %v1672 = vunpack.c.l.b16 %v1595
    %v1673 = vunpack.c.h.b16 %v1595
    %v1674 = vunpack.c.l.b16 %v1596
    %v1675 = vunpack.c.h.b16 %v1596
    %v1676 = vunpack.c.l.b16 %v1597
    %v1677 = vunpack.c.h.b16 %v1597
    %v1678 = vunpack.c.l.b16 %v1598
    %v1679 = vunpack.c.h.b16 %v1598
    %v1680 = vunpack.c.l.b16 %v1599
    %v1681 = vunpack.c.h.b16 %v1599
    %v1682 = vunpack.c.l.b16 %v1600
    %v1683 = vunpack.c.h.b16 %v1600
    %v1684 = vunpack.c.l.b16 %v1601
    %v1685 = vunpack.c.h.b16 %v1601
    %v1686 = vunpack.c.l.b16 %v1602
    %v1687 = vunpack.c.h.b16 %v1602
    %v1688 = vunpack.c.l.b16 %v1603
    %v1689 = vunpack.c.h.b16 %v1603
    %v1690 = vunpack.c.l.b16 %v1604
    %v1691 = vunpack.c.h.b16 %v1604
    %v1692 = vunpack.c.l.b16 %v1605
    %v1693 = vunpack.c.h.b16 %v1605
    %v1694 = vunpack.c.l.b16 %v1606
    %v1695 = vunpack.c.h.b16 %v1606
    %v1696 = vunpack.c.l.b16 %v1607
    %v1697 = vunpack.c.h.b16 %v1607
    %v1698 = vunpack.c.l.b16 %v1608
    %v1699 = vunpack.c.h.b16 %v1608
    %v1700 = vunpack.c.l.b16 %v1609
    %v1701 = vunpack.c.h.b16 %v1609
    %v1702 = vunpack.c.l.b16 %v1610
    %v1703 = vunpack.c.h.b16 %v1610
    %v1704 = vunpack.c.l.b16 %v1611
    %v1705 = vunpack.c.h.b16 %v1611
    %v1706 = vunpack.c.l.b16 %v1612
    %v1707 = vunpack.c.h.b16 %v1612
    %v1708 = vunpack.c.l.b16 %v1613
    %v1709 = vunpack.c.h.b16 %v1613
    %v1710 = vunpack.c.l.b16 %v1614
    %v1711 = vunpack.c.h.b16 %v1614
    %v1712 = vunpack.c.l.b16 %v1615
    %v1713 = vunpack.c.h.b16 %v1615
    %v1714 = vunpack.c.l.b16 %v1616
    %v1715 = vunpack.c.h.b16 %v1616
    %v1716 = vunpack.c.l.b16 %v1617
    %v1717 = vunpack.c.h.b16 %v1617
    %v1718 = vunpack.c.l.b16 %v1618
    %v1719 = vunpack.c.h.b16 %v1618
    %v1720 = vunpack.c.l.b16 %v1619
    %v1721 = vunpack.c.h.b16 %v1619
    %v1722 = vunpack.c.l.b16 %v1620
    %v1723 = vunpack.c.h.b16 %v1620
    %v1724 = vunpack.c.l.b16 %v1621
    %v1725 = vunpack.c.h.b16 %v1621
    %v1726 = vpack.c.b16 %v1664, %v1662
    %v1727 = vpack.c.b16 %v1665, %v1663
    %v1728 = vpack.c.b16 %v1668, %v1666
    %v1729 = vpack.c.b16 %v1669, %v1667
    %v1730 = vpack.c.b16 %v1672, %v1670
    %v1731 = vpack.c.b16 %v1673, %v1671
    %v1732 = vpack.c.b16 %v1676, %v1674
    %v1733 = vpack.c.b16 %v1677, %v1675
    %v1734 = vpack.c.b16 %v1680, %v1678
    %v1735 = vpack.c.b16 %v1681, %v1679
    %v1736 = vpack.c.b16 %v1684, %v1682
    %v1737 = vpack.c.b16 %v1685, %v1683
    %v1738 = vpack.c.b16 %v1688, %v1686
    %v1739 = vpack.c.b16 %v1689, %v1687
    %v1740 = vpack.c.b16 %v1692, %v1690
    %v1741 = vpack.c.b16 %v1693, %v1691
    %v1742 = vpack.c.b16 %v1696, %v1694
    %v1743 = vpack.c.b16 %v1697, %v1695
    %v1744 = vpack.c.b16 %v1700, %v1698
    %v1745 = vpack.c.b16 %v1701, %v1699
    %v1746 = vpack.c.b16 %v1704, %v1702
    %v1747 = vpack.c.b16 %v1705, %v1703
    %v1748 = vpack.c.b16 %v1708, %v1706
    %v1749 = vpack.c.b16 %v1709, %v1707
    %v1750 = vpack.c.b16 %v1712, %v1710
    %v1751 = vpack.c.b16 %v1713, %v1711
    %v1752 = vpack.c.b16 %v1716, %v1714
    %v1753 = vpack.c.b16 %v1717, %v1715
    %v1754 = vpack.c.b16 %v1720, %v1718
    %v1755 = vpack.c.b16 %v1721, %v1719
    %v1756 = vpack.c.b16 %v1724, %v1722
    %v1757 = vpack.c.b16 %v1725, %v1723
    %1790 = vmatprep.subr.bf16.mxu0 %v1727
    %1791 = vmatpush1.bf16.msra.mxu0 %v1726
    %1792 = vmatprep.subr.bf16.mxu0 %v1729
    %1793 = vmatpush1.bf16.msra.mxu0 %v1728
    %1794 = vmatprep.subr.bf16.mxu0 %v1731
    %1795 = vmatpush1.bf16.msra.mxu0 %v1730
    %1796 = vmatprep.subr.bf16.mxu0 %v1733
    %1797 = vmatpush1.bf16.msra.mxu0 %v1732
    %1798 = vmatprep.subr.bf16.mxu0 %v1735
    %1799 = vmatpush1.bf16.msra.mxu0 %v1734
    %1800 = vmatprep.subr.bf16.mxu0 %v1737
    %1801 = vmatpush1.bf16.msra.mxu0 %v1736
    %1802 = vmatprep.subr.bf16.mxu0 %v1739
    %1803 = vmatpush1.bf16.msra.mxu0 %v1738
    %1804 = vmatprep.subr.bf16.mxu0 %v1741
    %1805 = vmatpush1.bf16.msra.mxu0 %v1740
    %1806 = vmatprep.subr.bf16.mxu0 %v1743
    %1807 = vmatpush1.bf16.msra.mxu0 %v1742
    %1808 = vmatprep.subr.bf16.mxu0 %v1745
    %1809 = vmatpush1.bf16.msra.mxu0 %v1744
    %1810 = vmatprep.subr.bf16.mxu0 %v1747
    %1811 = vmatpush1.bf16.msra.mxu0 %v1746
    %1812 = vmatprep.subr.bf16.mxu0 %v1749
    %1813 = vmatpush1.bf16.msra.mxu0 %v1748
    %1814 = vmatprep.subr.bf16.mxu0 %v1751
    %1815 = vmatpush1.bf16.msra.mxu0 %v1750
    %1816 = vmatprep.subr.bf16.mxu0 %v1753
    %1817 = vmatpush1.bf16.msra.mxu0 %v1752
    %1818 = vmatprep.subr.bf16.mxu0 %v1755
    %1819 = vmatpush1.bf16.msra.mxu0 %v1754
    %1820 = vmatprep.subr.bf16.mxu0 %v1757
    %1821 = vmatpush1.bf16.msra.mxu0 %v1756
    %1822 = vmatprep.mubr.bf16.mxu0 %v1589
    %1823 = vmatmul.mubr.bf16.gmra.mrb[0].mxu0 %v1588
    %v1824 = vpop.f32.mrb[0].mxu0
    %v1825 = vadd.f32 %v1625, %v1824
    %v1826 = vpop.f32.mrb[0].mxu0
    %v1827 = vadd.f32 %v1629, %v1826
    %v1828 = vpop.f32.mrb[0].mxu0
    %v1829 = vadd.f32 %v1625, %v1828
    %v1830 = vpop.f32.mrb[0].mxu0
    %v1831 = vadd.f32 %v1629, %v1830
    %1832 = vdwg.mxu0
    %v1833 = vmax.f32 %v1825, 0.0
    %v1834 = vmax.f32 %v1827, 0.0
    %v1835 = vmax.f32 %v1829, 0.0
    %v1836 = vmax.f32 %v1831, 0.0
    %v1837 = vpack.c.bf16 %v1835, %v1833
    %v1838 = vpack.c.bf16 %v1836, %v1834
    %v1839 = vld [vmem:[#allocation11] sm:$0xf]
    %v1840 = vld [vmem:[#allocation11 + $0x4] sm:$0xf]
    %v1841 = vld [vmem:[#allocation11 + $0x8] sm:$0xf]
    %v1842 = vld [vmem:[#allocation11 + $0xc] sm:$0xf]
    %v1843 = vld [vmem:[#allocation11 + $0x10] sm:$0xf]
    %v1844 = vld [vmem:[#allocation11 + $0x14] sm:$0xf]
    %v1845 = vld [vmem:[#allocation11 + $0x18] sm:$0xf]
    %v1846 = vld [vmem:[#allocation11 + $0x1c] sm:$0xf]
    %v1847 = vld [vmem:[#allocation11 + $0x20] sm:$0xf]
    %v1848 = vld [vmem:[#allocation11 + $0x24] sm:$0xf]
    %v1849 = vld [vmem:[#allocation11 + $0x28] sm:$0xf]
    %v1850 = vld [vmem:[#allocation11 + $0x2c] sm:$0xf]
    %v1851 = vld [vmem:[#allocation11 + $0x30] sm:$0xf]
    %v1852 = vld [vmem:[#allocation11 + $0x34] sm:$0xf]
    %v1853 = vld [vmem:[#allocation11 + $0x38] sm:$0xf]
    %v1854 = vld [vmem:[#allocation11 + $0x3c] sm:$0xf]
    %v1855 = vld [vmem:[#allocation11 + $0x40] sm:$0xf]
    %v1856 = vld [vmem:[#allocation11 + $0x44] sm:$0xf]
    %v1857 = vld [vmem:[#allocation11 + $0x48] sm:$0xf]
    %v1858 = vld [vmem:[#allocation11 + $0x4c] sm:$0xf]
    %v1859 = vld [vmem:[#allocation11 + $0x50] sm:$0xf]
    %v1860 = vld [vmem:[#allocation11 + $0x54] sm:$0xf]
    %v1861 = vld [vmem:[#allocation11 + $0x58] sm:$0xf]
    %v1862 = vld [vmem:[#allocation11 + $0x5c] sm:$0xf]
    %v1863 = vld [vmem:[#allocation11 + $0x60] sm:$0xf]
    %v1864 = vld [vmem:[#allocation11 + $0x64] sm:$0xf]
    %v1865 = vld [vmem:[#allocation11 + $0x68] sm:$0xf]
    %v1866 = vld [vmem:[#allocation11 + $0x6c] sm:$0xf]
    %v1867 = vld [vmem:[#allocation11 + $0x70] sm:$0xf]
    %v1868 = vld [vmem:[#allocation11 + $0x74] sm:$0xf]
    %v1869 = vld [vmem:[#allocation11 + $0x78] sm:$0xf]
    %v1870 = vld [vmem:[#allocation11 + $0x7c] sm:$0xf]
    %v1871 = vlaneseq
    %v1872 = vshrl.u32 %v1871, 7
    %v1873 = vsub.s32 2, %v1872
    %v1874 = vrot.slane %v1337, %v1873
    %v1907 = vunpack.c.l.b16 %v1839
    %v1908 = vunpack.c.l.b16 %v1840
    %v1909 = vunpack.c.l.b16 %v1841
    %v1910 = vunpack.c.l.b16 %v1842
    %v1911 = vunpack.c.l.b16 %v1843
    %v1912 = vunpack.c.l.b16 %v1844
    %v1913 = vunpack.c.l.b16 %v1845
    %v1914 = vunpack.c.l.b16 %v1846
    %v1915 = vunpack.c.l.b16 %v1847
    %v1916 = vunpack.c.l.b16 %v1848
    %v1917 = vunpack.c.l.b16 %v1849
    %v1918 = vunpack.c.l.b16 %v1850
    %v1919 = vunpack.c.l.b16 %v1851
    %v1920 = vunpack.c.l.b16 %v1852
    %v1921 = vunpack.c.l.b16 %v1853
    %v1922 = vunpack.c.l.b16 %v1854
    %v1923 = vunpack.c.l.b16 %v1855
    %v1924 = vunpack.c.l.b16 %v1856
    %v1925 = vunpack.c.l.b16 %v1857
    %v1926 = vunpack.c.l.b16 %v1858
    %v1927 = vunpack.c.l.b16 %v1859
    %v1928 = vunpack.c.l.b16 %v1860
    %v1929 = vunpack.c.l.b16 %v1861
    %v1930 = vunpack.c.l.b16 %v1862
    %v1931 = vunpack.c.l.b16 %v1863
    %v1932 = vunpack.c.l.b16 %v1864
    %v1933 = vunpack.c.l.b16 %v1865
    %v1934 = vunpack.c.l.b16 %v1866
    %v1935 = vunpack.c.l.b16 %v1867
    %v1936 = vunpack.c.l.b16 %v1868
    %v1937 = vunpack.c.l.b16 %v1869
    %v1938 = vunpack.c.l.b16 %v1870
    %v1939 = vpack.c.b16 %v1908, %v1907
    %v1940 = vpack.c.b16 %v1910, %v1909
    %v1941 = vpack.c.b16 %v1912, %v1911
    %v1942 = vpack.c.b16 %v1914, %v1913
    %v1943 = vpack.c.b16 %v1916, %v1915
    %v1944 = vpack.c.b16 %v1918, %v1917
    %v1945 = vpack.c.b16 %v1920, %v1919
    %v1946 = vpack.c.b16 %v1922, %v1921
    %v1947 = vpack.c.b16 %v1924, %v1923
    %v1948 = vpack.c.b16 %v1926, %v1925
    %v1949 = vpack.c.b16 %v1928, %v1927
    %v1950 = vpack.c.b16 %v1930, %v1929
    %v1951 = vpack.c.b16 %v1932, %v1931
    %v1952 = vpack.c.b16 %v1934, %v1933
    %v1953 = vpack.c.b16 %v1936, %v1935
    %v1954 = vpack.c.b16 %v1938, %v1937
    %1971 = vmatprep.subr.bf16.mxu0 0
    %1972 = vmatpush1.bf16.msra.mxu0 %v1939
    %1973 = vmatprep.subr.bf16.mxu0 0
    %1974 = vmatpush1.bf16.msra.mxu0 %v1940
    %1975 = vmatprep.subr.bf16.mxu0 0
    %1976 = vmatpush1.bf16.msra.mxu0 %v1941
    %1977 = vmatprep.subr.bf16.mxu0 0
    %1978 = vmatpush1.bf16.msra.mxu0 %v1942
    %1979 = vmatprep.subr.bf16.mxu0 0
    %1980 = vmatpush1.bf16.msra.mxu0 %v1943
    %1981 = vmatprep.subr.bf16.mxu0 0
    %1982 = vmatpush1.bf16.msra.mxu0 %v1944
    %1983 = vmatprep.subr.bf16.mxu0 0
    %1984 = vmatpush1.bf16.msra.mxu0 %v1945
    %1985 = vmatprep.subr.bf16.mxu0 0
    %1986 = vmatpush1.bf16.msra.mxu0 %v1946
    %1987 = vmatprep.subr.bf16.mxu0 0
    %1988 = vmatpush1.bf16.msra.mxu0 %v1947
    %1989 = vmatprep.subr.bf16.mxu0 0
    %1990 = vmatpush1.bf16.msra.mxu0 %v1948
    %1991 = vmatprep.subr.bf16.mxu0 0
    %1992 = vmatpush1.bf16.msra.mxu0 %v1949
    %1993 = vmatprep.subr.bf16.mxu0 0
    %1994 = vmatpush1.bf16.msra.mxu0 %v1950
    %1995 = vmatprep.subr.bf16.mxu0 0
    %1996 = vmatpush1.bf16.msra.mxu0 %v1951
    %1997 = vmatprep.subr.bf16.mxu0 0
    %1998 = vmatpush1.bf16.msra.mxu0 %v1952
    %1999 = vmatprep.subr.bf16.mxu0 0
    %2000 = vmatpush1.bf16.msra.mxu0 %v1953
    %2001 = vmatprep.subr.bf16.mxu0 0
    %2002 = vmatpush1.bf16.msra.mxu0 %v1954
    %2003 = vmatprep.mubr.bf16.mxu0 %v1838
    %2004 = vmatmul.mubr.bf16.gmra.mrb[0].mxu0 %v1837
    %v2005 = vpop.f32.mrb[0].mxu0
    %v2006 = vadd.f32 %v1874, %v2005
    %v2007 = vpop.f32.mrb[0].mxu0
    %v2008 = vpop.f32.mrb[0].mxu0
    %v2009 = vadd.f32 %v1874, %v2008
    %v2010 = vpop.f32.mrb[0].mxu0
    %2011 = vdwg.mxu0
    %vm2012 = vcmask 130048
    %v2014 = vsel %vm2012, %v339, 0
    %2016 = vmatprep.subr.mxu0 0.0
    %2017 = vmatpush1.msra.mxu0 %v2006
    %2018 = vmatprep.subr.mxu0 0.0
    %2019 = vmatpush1.msra.mxu0 %v2009
    %2020 = vmatprep.subr.mxu0 0.0
    %2021 = vmatpush1.msra.mxu0 0.0
    %2022 = vmatprep.subr.mxu0 0.0
    %2023 = vmatpush1.msra.mxu0 0.0
    %2024 = vmatprep.subr.mxu0 0.0
    %2025 = vmatpush1.msra.mxu0 0.0
    %2026 = vmatprep.subr.mxu0 0.0
    %2027 = vmatpush1.msra.mxu0 0.0
    %2028 = vmatprep.subr.mxu0 0.0
    %2029 = vmatpush1.msra.mxu0 0.0
    %2030 = vmatprep.subr.mxu0 0.0
    %2031 = vmatpush1.msra.mxu0 0.0
    %2032 = vmatprep.subr.mxu0 0.0
    %2033 = vmatpush1.msra.mxu0 0.0
    %2034 = vmatprep.subr.mxu0 0.0
    %2035 = vmatpush1.msra.mxu0 0.0
    %2036 = vmatprep.subr.mxu0 0.0
    %2037 = vmatpush1.msra.mxu0 0.0
    %2038 = vmatprep.subr.mxu0 0.0
    %2039 = vmatpush1.msra.mxu0 0.0
    %2040 = vmatprep.subr.mxu0 0.0
    %2041 = vmatpush1.msra.mxu0 0.0
    %2042 = vmatprep.subr.mxu0 0.0
    %2043 = vmatpush1.msra.mxu0 0.0
    %2044 = vmatprep.subr.mxu0 0.0
    %2045 = vmatpush1.msra.mxu0 0.0
    %2046 = vmatprep.subr.mxu0 0.0
    %2047 = vmatpush1.msra.mxu0 0.0
    %2048 = vmatprep.subr.mxu0 0.0
    %2049 = vmatpush1.msra.mxu0 0.0
    %2050 = vmatprep.subr.mxu0 0.0
    %2051 = vmatpush1.msra.mxu0 0.0
    %2052 = vmatprep.subr.mxu0 0.0
    %2053 = vmatpush1.msra.mxu0 0.0
    %2054 = vmatprep.subr.mxu0 0.0
    %2055 = vmatpush1.msra.mxu0 0.0
    %2056 = vmatprep.subr.mxu0 0.0
    %2057 = vmatpush1.msra.mxu0 0.0
    %2058 = vmatprep.subr.mxu0 0.0
    %2059 = vmatpush1.msra.mxu0 0.0
    %2060 = vmatprep.subr.mxu0 0.0
    %2061 = vmatpush1.msra.mxu0 0.0
    %2062 = vmatprep.subr.mxu0 0.0
    %2063 = vmatpush1.msra.mxu0 0.0
    %2064 = vmatprep.subr.mxu0 0.0
    %2065 = vmatpush1.msra.mxu0 0.0
    %2066 = vmatprep.subr.mxu0 0.0
    %2067 = vmatpush1.msra.mxu0 0.0
    %2068 = vmatprep.subr.mxu0 0.0
    %2069 = vmatpush1.msra.mxu0 0.0
    %2070 = vmatprep.subr.mxu0 0.0
    %2071 = vmatpush1.msra.mxu0 0.0
    %2072 = vmatprep.subr.mxu0 0.0
    %2073 = vmatpush1.msra.mxu0 0.0
    %2074 = vmatprep.subr.mxu0 0.0
    %2075 = vmatpush1.msra.mxu0 0.0
    %2076 = vmatprep.subr.mxu0 0.0
    %2077 = vmatpush1.msra.mxu0 0.0
    %2078 = vmatprep.subr.mxu0 0.0
    %2079 = vmatpush1.msra.mxu0 0.0
    %2080 = vmatprep.mubr.f32.mxu0 0.0
    %2081 = vmatmul.mubr.f32.gmra.mrb[0].mxu0 %v2014
    %v2082 = vpop.f32.mrb[0].mxu0
    %v2083 = vadd.f32 0.0, %v2082
    %v2084 = vpop.f32.mrb[0].mxu0
    %2085 = vdwg.mxu0
    %v2086 = vmul.f32 %v2083, %v1336
    %v2087 = vpack.c.bf16 %v2086, %v2086
    %v2088 = vld [vmem:[#allocation13] sm:$0xff]
    %v2089 = vld [vmem:[#allocation13 + $0x8] sm:$0xff]
    %v2090 = vld [vmem:[#allocation13 + $0x10] sm:$0xff]
    %v2091 = vld [vmem:[#allocation13 + $0x18] sm:$0xff]
    %v2092 = vld [vmem:[#allocation13 + $0x20] sm:$0xff]
    %v2093 = vld [vmem:[#allocation13 + $0x28] sm:$0xff]
    %v2094 = vld [vmem:[#allocation13 + $0x30] sm:$0xff]
    %v2095 = vld [vmem:[#allocation13 + $0x38] sm:$0xff]
    %v2096 = vld [vmem:[#allocation13 + $0x40] sm:$0xff]
    %v2097 = vld [vmem:[#allocation13 + $0x48] sm:$0xff]
    %v2098 = vld [vmem:[#allocation13 + $0x50] sm:$0xff]
    %v2099 = vld [vmem:[#allocation13 + $0x58] sm:$0xff]
    %v2100 = vld [vmem:[#allocation13 + $0x60] sm:$0xff]
    %v2101 = vld [vmem:[#allocation13 + $0x68] sm:$0xff]
    %v2102 = vld [vmem:[#allocation13 + $0x70] sm:$0xff]
    %v2103 = vld [vmem:[#allocation13 + $0x78] sm:$0xff]
    %v2104 = vlaneseq
    %v2105 = vshrl.u32 %v2104, 7
    %v2106 = vsub.s32 3, %v2105
    %v2107 = vrot.slane %v1337, %v2106
    %v2108 = vlaneseq
    %v2109 = vshrl.u32 %v2108, 7
    %v2110 = vsub.s32 3, %v2109
    %v2111 = vrot.slane %v1338, %v2110
    %v2128 = vunpack.c.l.b16 %v2088
    %v2129 = vunpack.c.h.b16 %v2088
    %v2130 = vunpack.c.l.b16 %v2089
    %v2131 = vunpack.c.h.b16 %v2089
    %v2132 = vunpack.c.l.b16 %v2090
    %v2133 = vunpack.c.h.b16 %v2090
    %v2134 = vunpack.c.l.b16 %v2091
    %v2135 = vunpack.c.h.b16 %v2091
    %v2136 = vunpack.c.l.b16 %v2092
    %v2137 = vunpack.c.h.b16 %v2092
    %v2138 = vunpack.c.l.b16 %v2093
    %v2139 = vunpack.c.h.b16 %v2093
    %v2140 = vunpack.c.l.b16 %v2094
    %v2141 = vunpack.c.h.b16 %v2094
    %v2142 = vunpack.c.l.b16 %v2095
    %v2143 = vunpack.c.h.b16 %v2095
    %v2144 = vunpack.c.l.b16 %v2096
    %v2145 = vunpack.c.h.b16 %v2096
    %v2146 = vunpack.c.l.b16 %v2097
    %v2147 = vunpack.c.h.b16 %v2097
    %v2148 = vunpack.c.l.b16 %v2098
    %v2149 = vunpack.c.h.b16 %v2098
    %v2150 = vunpack.c.l.b16 %v2099
    %v2151 = vunpack.c.h.b16 %v2099
    %v2152 = vunpack.c.l.b16 %v2100
    %v2153 = vunpack.c.h.b16 %v2100
    %v2154 = vunpack.c.l.b16 %v2101
    %v2155 = vunpack.c.h.b16 %v2101
    %v2156 = vunpack.c.l.b16 %v2102
    %v2157 = vunpack.c.h.b16 %v2102
    %v2158 = vunpack.c.l.b16 %v2103
    %v2159 = vunpack.c.h.b16 %v2103
    %v2160 = vpack.c.b16 %v2130, %v2128
    %v2161 = vpack.c.b16 %v2131, %v2129
    %v2162 = vpack.c.b16 %v2134, %v2132
    %v2163 = vpack.c.b16 %v2135, %v2133
    %v2164 = vpack.c.b16 %v2138, %v2136
    %v2165 = vpack.c.b16 %v2139, %v2137
    %v2166 = vpack.c.b16 %v2142, %v2140
    %v2167 = vpack.c.b16 %v2143, %v2141
    %v2168 = vpack.c.b16 %v2146, %v2144
    %v2169 = vpack.c.b16 %v2147, %v2145
    %v2170 = vpack.c.b16 %v2150, %v2148
    %v2171 = vpack.c.b16 %v2151, %v2149
    %v2172 = vpack.c.b16 %v2154, %v2152
    %v2173 = vpack.c.b16 %v2155, %v2153
    %v2174 = vpack.c.b16 %v2158, %v2156
    %v2175 = vpack.c.b16 %v2159, %v2157
    %2192 = vmatprep.subr.bf16.mxu0 %v2161
    %2193 = vmatpush1.bf16.msra.mxu0 %v2160
    %2194 = vmatprep.subr.bf16.mxu0 %v2163
    %2195 = vmatpush1.bf16.msra.mxu0 %v2162
    %2196 = vmatprep.subr.bf16.mxu0 %v2165
    %2197 = vmatpush1.bf16.msra.mxu0 %v2164
    %2198 = vmatprep.subr.bf16.mxu0 %v2167
    %2199 = vmatpush1.bf16.msra.mxu0 %v2166
    %2200 = vmatprep.subr.bf16.mxu0 %v2169
    %2201 = vmatpush1.bf16.msra.mxu0 %v2168
    %2202 = vmatprep.subr.bf16.mxu0 %v2171
    %2203 = vmatpush1.bf16.msra.mxu0 %v2170
    %2204 = vmatprep.subr.bf16.mxu0 %v2173
    %2205 = vmatpush1.bf16.msra.mxu0 %v2172
    %2206 = vmatprep.subr.bf16.mxu0 %v2175
    %2207 = vmatpush1.bf16.msra.mxu0 %v2174
    %2208 = vmatprep.subr.bf16.mxu0 0
    %2209 = vmatpush1.bf16.msra.mxu0 0
    %2210 = vmatprep.subr.bf16.mxu0 0
    %2211 = vmatpush1.bf16.msra.mxu0 0
    %2212 = vmatprep.subr.bf16.mxu0 0
    %2213 = vmatpush1.bf16.msra.mxu0 0
    %2214 = vmatprep.subr.bf16.mxu0 0
    %2215 = vmatpush1.bf16.msra.mxu0 0
    %2216 = vmatprep.subr.bf16.mxu0 0
    %2217 = vmatpush1.bf16.msra.mxu0 0
    %2218 = vmatprep.subr.bf16.mxu0 0
    %2219 = vmatpush1.bf16.msra.mxu0 0
    %2220 = vmatprep.subr.bf16.mxu0 0
    %2221 = vmatpush1.bf16.msra.mxu0 0
    %2222 = vmatprep.subr.bf16.mxu0 0
    %2223 = vmatpush1.bf16.msra.mxu0 0
    %2224 = vmatprep.mubr.bf16.mxu0 0
    %2225 = vmatmul.mubr.bf16.gmra.mrb[0].mxu0 %v2087
    %v2226 = vpop.f32.mrb[0].mxu0
    %v2227 = vadd.f32 %v2107, %v2226
    %v2228 = vpop.f32.mrb[0].mxu0
    %v2229 = vadd.f32 %v2111, %v2228
    %v2230 = vpop.f32.mrb[0].mxu0
    %v2231 = vpop.f32.mrb[0].mxu0
    %2232 = vdwg.mxu0
    %v2233 = vmax.f32 %v2227, 0.0
    %v2234 = vmax.f32 %v2229, 0.0
    %v2235 = vpack.c.bf16 %v2233, %v2233
    %v2236 = vpack.c.bf16 %v2234, %v2234
    %v2237 = vld [vmem:[#allocation14] sm:$0xf]
    %v2238 = vld [vmem:[#allocation14 + $0x4] sm:$0xf]
    %v2239 = vld [vmem:[#allocation14 + $0x8] sm:$0xf]
    %v2240 = vld [vmem:[#allocation14 + $0xc] sm:$0xf]
    %v2241 = vld [vmem:[#allocation14 + $0x10] sm:$0xf]
    %v2242 = vld [vmem:[#allocation14 + $0x14] sm:$0xf]
    %v2243 = vld [vmem:[#allocation14 + $0x18] sm:$0xf]
    %v2244 = vld [vmem:[#allocation14 + $0x1c] sm:$0xf]
    %v2245 = vld [vmem:[#allocation14 + $0x20] sm:$0xf]
    %v2246 = vld [vmem:[#allocation14 + $0x24] sm:$0xf]
    %v2247 = vld [vmem:[#allocation14 + $0x28] sm:$0xf]
    %v2248 = vld [vmem:[#allocation14 + $0x2c] sm:$0xf]
    %v2249 = vld [vmem:[#allocation14 + $0x30] sm:$0xf]
    %v2250 = vld [vmem:[#allocation14 + $0x34] sm:$0xf]
    %v2251 = vld [vmem:[#allocation14 + $0x38] sm:$0xf]
    %v2252 = vld [vmem:[#allocation14 + $0x3c] sm:$0xf]
    %v2253 = vld [vmem:[#allocation14 + $0x40] sm:$0xf]
    %v2254 = vld [vmem:[#allocation14 + $0x44] sm:$0xf]
    %v2255 = vld [vmem:[#allocation14 + $0x48] sm:$0xf]
    %v2256 = vld [vmem:[#allocation14 + $0x4c] sm:$0xf]
    %v2257 = vld [vmem:[#allocation14 + $0x50] sm:$0xf]
    %v2258 = vld [vmem:[#allocation14 + $0x54] sm:$0xf]
    %v2259 = vld [vmem:[#allocation14 + $0x58] sm:$0xf]
    %v2260 = vld [vmem:[#allocation14 + $0x5c] sm:$0xf]
    %v2261 = vld [vmem:[#allocation14 + $0x60] sm:$0xf]
    %v2262 = vld [vmem:[#allocation14 + $0x64] sm:$0xf]
    %v2263 = vld [vmem:[#allocation14 + $0x68] sm:$0xf]
    %v2264 = vld [vmem:[#allocation14 + $0x6c] sm:$0xf]
    %v2265 = vld [vmem:[#allocation14 + $0x70] sm:$0xf]
    %v2266 = vld [vmem:[#allocation14 + $0x74] sm:$0xf]
    %v2267 = vld [vmem:[#allocation14 + $0x78] sm:$0xf]
    %v2268 = vld [vmem:[#allocation14 + $0x7c] sm:$0xf]
    %v2269 = vlaneseq
    %v2270 = vshrl.u32 %v2269, 7
    %v2271 = vsub.s32 4, %v2270
    %v2272 = vrot.slane %v1337, %v2271
    %v2305 = vunpack.c.l.b16 %v2237
    %v2306 = vunpack.c.l.b16 %v2238
    %v2307 = vunpack.c.l.b16 %v2239
    %v2308 = vunpack.c.l.b16 %v2240
    %v2309 = vunpack.c.l.b16 %v2241
    %v2310 = vunpack.c.l.b16 %v2242
    %v2311 = vunpack.c.l.b16 %v2243
    %v2312 = vunpack.c.l.b16 %v2244
    %v2313 = vunpack.c.l.b16 %v2245
    %v2314 = vunpack.c.l.b16 %v2246
    %v2315 = vunpack.c.l.b16 %v2247
    %v2316 = vunpack.c.l.b16 %v2248
    %v2317 = vunpack.c.l.b16 %v2249
    %v2318 = vunpack.c.l.b16 %v2250
    %v2319 = vunpack.c.l.b16 %v2251
    %v2320 = vunpack.c.l.b16 %v2252
    %v2321 = vunpack.c.l.b16 %v2253
    %v2322 = vunpack.c.l.b16 %v2254
    %v2323 = vunpack.c.l.b16 %v2255
    %v2324 = vunpack.c.l.b16 %v2256
    %v2325 = vunpack.c.l.b16 %v2257
    %v2326 = vunpack.c.l.b16 %v2258
    %v2327 = vunpack.c.l.b16 %v2259
    %v2328 = vunpack.c.l.b16 %v2260
    %v2329 = vunpack.c.l.b16 %v2261
    %v2330 = vunpack.c.l.b16 %v2262
    %v2331 = vunpack.c.l.b16 %v2263
    %v2332 = vunpack.c.l.b16 %v2264
    %v2333 = vunpack.c.l.b16 %v2265
    %v2334 = vunpack.c.l.b16 %v2266
    %v2335 = vunpack.c.l.b16 %v2267
    %v2336 = vunpack.c.l.b16 %v2268
    %v2337 = vpack.c.b16 %v2306, %v2305
    %v2338 = vpack.c.b16 %v2308, %v2307
    %v2339 = vpack.c.b16 %v2310, %v2309
    %v2340 = vpack.c.b16 %v2312, %v2311
    %v2341 = vpack.c.b16 %v2314, %v2313
    %v2342 = vpack.c.b16 %v2316, %v2315
    %v2343 = vpack.c.b16 %v2318, %v2317
    %v2344 = vpack.c.b16 %v2320, %v2319
    %v2345 = vpack.c.b16 %v2322, %v2321
    %v2346 = vpack.c.b16 %v2324, %v2323
    %v2347 = vpack.c.b16 %v2326, %v2325
    %v2348 = vpack.c.b16 %v2328, %v2327
    %v2349 = vpack.c.b16 %v2330, %v2329
    %v2350 = vpack.c.b16 %v2332, %v2331
    %v2351 = vpack.c.b16 %v2334, %v2333
    %v2352 = vpack.c.b16 %v2336, %v2335
    %2369 = vmatprep.subr.bf16.mxu0 0
    %2370 = vmatpush1.bf16.msra.mxu0 %v2337
    %2371 = vmatprep.subr.bf16.mxu0 0
    %2372 = vmatpush1.bf16.msra.mxu0 %v2338
    %2373 = vmatprep.subr.bf16.mxu0 0
    %2374 = vmatpush1.bf16.msra.mxu0 %v2339
    %2375 = vmatprep.subr.bf16.mxu0 0
    %2376 = vmatpush1.bf16.msra.mxu0 %v2340
    %2377 = vmatprep.subr.bf16.mxu0 0
    %2378 = vmatpush1.bf16.msra.mxu0 %v2341
    %2379 = vmatprep.subr.bf16.mxu0 0
    %2380 = vmatpush1.bf16.msra.mxu0 %v2342
    %2381 = vmatprep.subr.bf16.mxu0 0
    %2382 = vmatpush1.bf16.msra.mxu0 %v2343
    %2383 = vmatprep.subr.bf16.mxu0 0
    %2384 = vmatpush1.bf16.msra.mxu0 %v2344
    %2385 = vmatprep.subr.bf16.mxu0 0
    %2386 = vmatpush1.bf16.msra.mxu0 %v2345
    %2387 = vmatprep.subr.bf16.mxu0 0
    %2388 = vmatpush1.bf16.msra.mxu0 %v2346
    %2389 = vmatprep.subr.bf16.mxu0 0
    %2390 = vmatpush1.bf16.msra.mxu0 %v2347
    %2391 = vmatprep.subr.bf16.mxu0 0
    %2392 = vmatpush1.bf16.msra.mxu0 %v2348
    %2393 = vmatprep.subr.bf16.mxu0 0
    %2394 = vmatpush1.bf16.msra.mxu0 %v2349
    %2395 = vmatprep.subr.bf16.mxu0 0
    %2396 = vmatpush1.bf16.msra.mxu0 %v2350
    %2397 = vmatprep.subr.bf16.mxu0 0
    %2398 = vmatpush1.bf16.msra.mxu0 %v2351
    %2399 = vmatprep.subr.bf16.mxu0 0
    %2400 = vmatpush1.bf16.msra.mxu0 %v2352
    %2401 = vmatprep.mubr.bf16.mxu0 %v2236
    %2402 = vmatmul.mubr.bf16.gmra.mrb[0].mxu0 %v2235
    %v2403 = vpop.f32.mrb[0].mxu0
    %v2404 = vadd.f32 %v2272, %v2403
    %v2405 = vpop.f32.mrb[0].mxu0
    %v2406 = vpop.f32.mrb[0].mxu0
    %v2407 = vpop.f32.mrb[0].mxu0
    %2408 = vdwg.mxu0
    %v2409 = vmax.f32 %v2404, 0.0
    %v2410 = vld [vmem:[%s21] sm:$0xff]
    %v2411 = vld [vmem:[%s21 + $0x8] sm:$0xff]
    %v2412 = vld [vmem:[%s21 + $0x10] sm:$0xff]
    %v2413 = vld [vmem:[%s21 + $0x18] sm:$0xff]
    %v2414 = vld [vmem:[%s21 + $0x20] sm:$0xff]
    %v2415 = vld [vmem:[%s21 + $0x28] sm:$0xff]
    %v2416 = vld [vmem:[%s21 + $0x30] sm:$0xff]
    %v2417 = vld [vmem:[%s21 + $0x38] sm:$0xff]
    %v2418 = vld [vmem:[%s21 + $0x40] sm:$0xff]
    %v2419 = vld [vmem:[%s21 + $0x48] sm:$0xff]
    %v2420 = vld [vmem:[%s21 + $0x50] sm:$0xff]
    %v2421 = vld [vmem:[%s21 + $0x58] sm:$0xff]
    %v2422 = vld [vmem:[%s21 + $0x60] sm:$0xff]
    %v2423 = vld [vmem:[%s21 + $0x68] sm:$0xff]
    %v2424 = vld [vmem:[%s21 + $0x70] sm:$0xff]
    %v2425 = vld [vmem:[%s21 + $0x78] sm:$0xff]
    %v2426 = vlaneseq
    %v2427 = vshrl.u32 %v2426, 7
    %v2428 = vsub.s32 5, %v2427
    %v2429 = vrot.slane %v1337, %v2428
    %2430 = vmatprep.subr.mxu0 0.0
    %2431 = vmatpush1.msra.mxu0 %v2410
    %2432 = vmatprep.subr.mxu0 0.0
    %2433 = vmatpush1.msra.mxu0 %v2411
    %2434 = vmatprep.subr.mxu0 0.0
    %2435 = vmatpush1.msra.mxu0 %v2412
    %2436 = vmatprep.subr.mxu0 0.0
    %2437 = vmatpush1.msra.mxu0 %v2413
    %2438 = vmatprep.subr.mxu0 0.0
    %2439 = vmatpush1.msra.mxu0 %v2414
    %2440 = vmatprep.subr.mxu0 0.0
    %2441 = vmatpush1.msra.mxu0 %v2415
    %2442 = vmatprep.subr.mxu0 0.0
    %2443 = vmatpush1.msra.mxu0 %v2416
    %2444 = vmatprep.subr.mxu0 0.0
    %2445 = vmatpush1.msra.mxu0 %v2417
    %2446 = vmatprep.subr.mxu0 0.0
    %2447 = vmatpush1.msra.mxu0 %v2418
    %2448 = vmatprep.subr.mxu0 0.0
    %2449 = vmatpush1.msra.mxu0 %v2419
    %2450 = vmatprep.subr.mxu0 0.0
    %2451 = vmatpush1.msra.mxu0 %v2420
    %2452 = vmatprep.subr.mxu0 0.0
    %2453 = vmatpush1.msra.mxu0 %v2421
    %2454 = vmatprep.subr.mxu0 0.0
    %2455 = vmatpush1.msra.mxu0 %v2422
    %2456 = vmatprep.subr.mxu0 0.0
    %2457 = vmatpush1.msra.mxu0 %v2423
    %2458 = vmatprep.subr.mxu0 0.0
    %2459 = vmatpush1.msra.mxu0 %v2424
    %2460 = vmatprep.subr.mxu0 0.0
    %2461 = vmatpush1.msra.mxu0 %v2425
    %2462 = vmatprep.subr.mxu0 0.0
    %2463 = vmatpush1.msra.mxu0 0.0
    %2464 = vmatprep.subr.mxu0 0.0
    %2465 = vmatpush1.msra.mxu0 0.0
    %2466 = vmatprep.subr.mxu0 0.0
    %2467 = vmatpush1.msra.mxu0 0.0
    %2468 = vmatprep.subr.mxu0 0.0
    %2469 = vmatpush1.msra.mxu0 0.0
    %2470 = vmatprep.subr.mxu0 0.0
    %2471 = vmatpush1.msra.mxu0 0.0
    %2472 = vmatprep.subr.mxu0 0.0
    %2473 = vmatpush1.msra.mxu0 0.0
    %2474 = vmatprep.subr.mxu0 0.0
    %2475 = vmatpush1.msra.mxu0 0.0
    %2476 = vmatprep.subr.mxu0 0.0
    %2477 = vmatpush1.msra.mxu0 0.0
    %2478 = vmatprep.subr.mxu0 0.0
    %2479 = vmatpush1.msra.mxu0 0.0
    %2480 = vmatprep.subr.mxu0 0.0
    %2481 = vmatpush1.msra.mxu0 0.0
    %2482 = vmatprep.subr.mxu0 0.0
    %2483 = vmatpush1.msra.mxu0 0.0
    %2484 = vmatprep.subr.mxu0 0.0
    %2485 = vmatpush1.msra.mxu0 0.0
    %2486 = vmatprep.subr.mxu0 0.0
    %2487 = vmatpush1.msra.mxu0 0.0
    %2488 = vmatprep.subr.mxu0 0.0
    %2489 = vmatpush1.msra.mxu0 0.0
    %2490 = vmatprep.subr.mxu0 0.0
    %2491 = vmatpush1.msra.mxu0 0.0
    %2492 = vmatprep.subr.mxu0 0.0
    %2493 = vmatpush1.msra.mxu0 0.0
    %2494 = vmatprep.mubr.f32.mxu0 0.0
    %2495 = vmatmul.mubr.f32.gmra.mrb[0].mxu0 %v2409
    %v2496 = vpop.f32.mrb[0].mxu0
    %v2497 = vadd.f32 %v2429, %v2496
    %v2498 = vpop.f32.mrb[0].mxu0
    %2499 = vdwg.mxu0
    %v2500 = vld [vmem:[#allocation23] sm:$0x3f]
    %v2501 = vld [vmem:[#allocation23 + $0x8] sm:$0x3f]
    %v2502 = vpack.c.bf16 %v1329, %v1325
    %v2503 = vpack.c.bf16 %v1330, %v1326
    %v2504 = vld [vmem:[#allocation17] sm:$0xff]
    %v2505 = vld [vmem:[#allocation17 + $0x8] sm:$0xff]
    %v2506 = vld [vmem:[#allocation17 + $0x10] sm:$0xff]
    %v2507 = vld [vmem:[#allocation17 + $0x18] sm:$0xff]
    %v2508 = vld [vmem:[#allocation17 + $0x20] sm:$0xff]
    %v2509 = vld [vmem:[#allocation17 + $0x28] sm:$0xff]
    %v2510 = vld [vmem:[#allocation17 + $0x30] sm:$0xff]
    %v2511 = vld [vmem:[#allocation17 + $0x38] sm:$0xff]
    %v2512 = vld [vmem:[#allocation17 + $0x40] sm:$0xff]
    %v2513 = vld [vmem:[#allocation17 + $0x48] sm:$0xff]
    %v2514 = vld [vmem:[#allocation17 + $0x50] sm:$0xff]
    %v2515 = vld [vmem:[#allocation17 + $0x58] sm:$0xff]
    %v2516 = vld [vmem:[#allocation17 + $0x60] sm:$0xff]
    %v2517 = vld [vmem:[#allocation17 + $0x68] sm:$0xff]
    %v2518 = vld [vmem:[#allocation17 + $0x70] sm:$0xff]
    %v2519 = vld [vmem:[#allocation17 + $0x78] sm:$0xff]
    %v2520 = vld [vmem:[#allocation17 + $0x80] sm:$0xff]
    %v2521 = vld [vmem:[#allocation17 + $0x88] sm:$0xff]
    %v2522 = vld [vmem:[#allocation17 + $0x90] sm:$0xff]
    %v2523 = vld [vmem:[#allocation17 + $0x98] sm:$0xff]
    %v2524 = vld [vmem:[#allocation17 + $0xa0] sm:$0xff]
    %v2525 = vld [vmem:[#allocation17 + $0xa8] sm:$0xff]
    %v2526 = vld [vmem:[#allocation17 + $0xb0] sm:$0xff]
    %v2527 = vld [vmem:[#allocation17 + $0xb8] sm:$0xff]
    %v2528 = vld [vmem:[#allocation17 + $0xc0] sm:$0xff]
    %v2529 = vld [vmem:[#allocation17 + $0xc8] sm:$0xff]
    %v2530 = vld [vmem:[#allocation17 + $0xd0] sm:$0xff]
    %v2531 = vld [vmem:[#allocation17 + $0xd8] sm:$0xff]
    %v2532 = vld [vmem:[#allocation17 + $0xe0] sm:$0xff]
    %v2533 = vld [vmem:[#allocation17 + $0xe8] sm:$0xff]
    %v2534 = vld [vmem:[#allocation17 + $0xf0] sm:$0xff]
    %v2535 = vld [vmem:[#allocation17 + $0xf8] sm:$0xff]
    %v2536 = vlaneseq
    %v2537 = vshrl.u32 %v2536, 7
    %v2538 = vsub.s32 0, %v2537
    %v2539 = vrot.slane %v2500, %v2538
    %v2540 = vlaneseq
    %v2541 = vshrl.u32 %v2540, 7
    %v2542 = vsub.s32 0, %v2541
    %v2543 = vrot.slane %v2501, %v2542
    %v2576 = vunpack.c.l.b16 %v2504
    %v2577 = vunpack.c.h.b16 %v2504
    %v2578 = vunpack.c.l.b16 %v2505
    %v2579 = vunpack.c.h.b16 %v2505
    %v2580 = vunpack.c.l.b16 %v2506
    %v2581 = vunpack.c.h.b16 %v2506
    %v2582 = vunpack.c.l.b16 %v2507
    %v2583 = vunpack.c.h.b16 %v2507
    %v2584 = vunpack.c.l.b16 %v2508
    %v2585 = vunpack.c.h.b16 %v2508
    %v2586 = vunpack.c.l.b16 %v2509
    %v2587 = vunpack.c.h.b16 %v2509
    %v2588 = vunpack.c.l.b16 %v2510
    %v2589 = vunpack.c.h.b16 %v2510
    %v2590 = vunpack.c.l.b16 %v2511
    %v2591 = vunpack.c.h.b16 %v2511
    %v2592 = vunpack.c.l.b16 %v2512
    %v2593 = vunpack.c.h.b16 %v2512
    %v2594 = vunpack.c.l.b16 %v2513
    %v2595 = vunpack.c.h.b16 %v2513
    %v2596 = vunpack.c.l.b16 %v2514
    %v2597 = vunpack.c.h.b16 %v2514
    %v2598 = vunpack.c.l.b16 %v2515
    %v2599 = vunpack.c.h.b16 %v2515
    %v2600 = vunpack.c.l.b16 %v2516
    %v2601 = vunpack.c.h.b16 %v2516
    %v2602 = vunpack.c.l.b16 %v2517
    %v2603 = vunpack.c.h.b16 %v2517
    %v2604 = vunpack.c.l.b16 %v2518
    %v2605 = vunpack.c.h.b16 %v2518
    %v2606 = vunpack.c.l.b16 %v2519
    %v2607 = vunpack.c.h.b16 %v2519
    %v2608 = vunpack.c.l.b16 %v2520
    %v2609 = vunpack.c.h.b16 %v2520
    %v2610 = vunpack.c.l.b16 %v2521
    %v2611 = vunpack.c.h.b16 %v2521
    %v2612 = vunpack.c.l.b16 %v2522
    %v2613 = vunpack.c.h.b16 %v2522
    %v2614 = vunpack.c.l.b16 %v2523
    %v2615 = vunpack.c.h.b16 %v2523
    %v2616 = vunpack.c.l.b16 %v2524
    %v2617 = vunpack.c.h.b16 %v2524
    %v2618 = vunpack.c.l.b16 %v2525
    %v2619 = vunpack.c.h.b16 %v2525
    %v2620 = vunpack.c.l.b16 %v2526
    %v2621 = vunpack.c.h.b16 %v2526
    %v2622 = vunpack.c.l.b16 %v2527
    %v2623 = vunpack.c.h.b16 %v2527
    %v2624 = vunpack.c.l.b16 %v2528
    %v2625 = vunpack.c.h.b16 %v2528
    %v2626 = vunpack.c.l.b16 %v2529
    %v2627 = vunpack.c.h.b16 %v2529
    %v2628 = vunpack.c.l.b16 %v2530
    %v2629 = vunpack.c.h.b16 %v2530
    %v2630 = vunpack.c.l.b16 %v2531
    %v2631 = vunpack.c.h.b16 %v2531
    %v2632 = vunpack.c.l.b16 %v2532
    %v2633 = vunpack.c.h.b16 %v2532
    %v2634 = vunpack.c.l.b16 %v2533
    %v2635 = vunpack.c.h.b16 %v2533
    %v2636 = vunpack.c.l.b16 %v2534
    %v2637 = vunpack.c.h.b16 %v2534
    %v2638 = vunpack.c.l.b16 %v2535
    %v2639 = vunpack.c.h.b16 %v2535
    %v2640 = vpack.c.b16 %v2578, %v2576
    %v2641 = vpack.c.b16 %v2579, %v2577
    %v2642 = vpack.c.b16 %v2582, %v2580
    %v2643 = vpack.c.b16 %v2583, %v2581
    %v2644 = vpack.c.b16 %v2586, %v2584
    %v2645 = vpack.c.b16 %v2587, %v2585
    %v2646 = vpack.c.b16 %v2590, %v2588
    %v2647 = vpack.c.b16 %v2591, %v2589
    %v2648 = vpack.c.b16 %v2594, %v2592
    %v2649 = vpack.c.b16 %v2595, %v2593
    %v2650 = vpack.c.b16 %v2598, %v2596
    %v2651 = vpack.c.b16 %v2599, %v2597
    %v2652 = vpack.c.b16 %v2602, %v2600
    %v2653 = vpack.c.b16 %v2603, %v2601
    %v2654 = vpack.c.b16 %v2606, %v2604
    %v2655 = vpack.c.b16 %v2607, %v2605
    %v2656 = vpack.c.b16 %v2610, %v2608
    %v2657 = vpack.c.b16 %v2611, %v2609
    %v2658 = vpack.c.b16 %v2614, %v2612
    %v2659 = vpack.c.b16 %v2615, %v2613
    %v2660 = vpack.c.b16 %v2618, %v2616
    %v2661 = vpack.c.b16 %v2619, %v2617
    %v2662 = vpack.c.b16 %v2622, %v2620
    %v2663 = vpack.c.b16 %v2623, %v2621
    %v2664 = vpack.c.b16 %v2626, %v2624
    %v2665 = vpack.c.b16 %v2627, %v2625
    %v2666 = vpack.c.b16 %v2630, %v2628
    %v2667 = vpack.c.b16 %v2631, %v2629
    %v2668 = vpack.c.b16 %v2634, %v2632
    %v2669 = vpack.c.b16 %v2635, %v2633
    %v2670 = vpack.c.b16 %v2638, %v2636
    %v2671 = vpack.c.b16 %v2639, %v2637
    %2704 = vmatprep.subr.bf16.mxu0 %v2641
    %2705 = vmatpush1.bf16.msra.mxu0 %v2640
    %2706 = vmatprep.subr.bf16.mxu0 %v2643
    %2707 = vmatpush1.bf16.msra.mxu0 %v2642
    %2708 = vmatprep.subr.bf16.mxu0 %v2645
    %2709 = vmatpush1.bf16.msra.mxu0 %v2644
    %2710 = vmatprep.subr.bf16.mxu0 %v2647
    %2711 = vmatpush1.bf16.msra.mxu0 %v2646
    %2712 = vmatprep.subr.bf16.mxu0 %v2649
    %2713 = vmatpush1.bf16.msra.mxu0 %v2648
    %2714 = vmatprep.subr.bf16.mxu0 %v2651
    %2715 = vmatpush1.bf16.msra.mxu0 %v2650
    %2716 = vmatprep.subr.bf16.mxu0 %v2653
    %2717 = vmatpush1.bf16.msra.mxu0 %v2652
    %2718 = vmatprep.subr.bf16.mxu0 %v2655
    %2719 = vmatpush1.bf16.msra.mxu0 %v2654
    %2720 = vmatprep.subr.bf16.mxu0 %v2657
    %2721 = vmatpush1.bf16.msra.mxu0 %v2656
    %2722 = vmatprep.subr.bf16.mxu0 %v2659
    %2723 = vmatpush1.bf16.msra.mxu0 %v2658
    %2724 = vmatprep.subr.bf16.mxu0 %v2661
    %2725 = vmatpush1.bf16.msra.mxu0 %v2660
    %2726 = vmatprep.subr.bf16.mxu0 %v2663
    %2727 = vmatpush1.bf16.msra.mxu0 %v2662
    %2728 = vmatprep.subr.bf16.mxu0 %v2665
    %2729 = vmatpush1.bf16.msra.mxu0 %v2664
    %2730 = vmatprep.subr.bf16.mxu0 %v2667
    %2731 = vmatpush1.bf16.msra.mxu0 %v2666
    %2732 = vmatprep.subr.bf16.mxu0 %v2669
    %2733 = vmatpush1.bf16.msra.mxu0 %v2668
    %2734 = vmatprep.subr.bf16.mxu0 %v2671
    %2735 = vmatpush1.bf16.msra.mxu0 %v2670
    %2736 = vmatprep.mubr.bf16.mxu0 %v2503
    %2737 = vmatmul.mubr.bf16.gmra.mrb[0].mxu0 %v2502
    %v2738 = vpop.f32.mrb[0].mxu0
    %v2739 = vadd.f32 %v2539, %v2738
    %v2740 = vpop.f32.mrb[0].mxu0
    %v2741 = vadd.f32 %v2543, %v2740
    %v2742 = vpop.f32.mrb[0].mxu0
    %v2743 = vadd.f32 %v2539, %v2742
    %v2744 = vpop.f32.mrb[0].mxu0
    %v2745 = vadd.f32 %v2543, %v2744
    %2746 = vdwg.mxu0
    %v2747 = vmax.f32 %v2739, 0.0
    %v2748 = vmax.f32 %v2741, 0.0
    %v2749 = vmax.f32 %v2743, 0.0
    %v2750 = vmax.f32 %v2745, 0.0
    %v2751 = vpack.c.bf16 %v2749, %v2747
    %v2752 = vpack.c.bf16 %v2750, %v2748
    %v2753 = vld [vmem:[#allocation19] sm:$0xff]
    %v2754 = vld [vmem:[#allocation19 + $0x8] sm:$0xff]
    %v2755 = vld [vmem:[#allocation19 + $0x10] sm:$0xff]
    %v2756 = vld [vmem:[#allocation19 + $0x18] sm:$0xff]
    %v2757 = vld [vmem:[#allocation19 + $0x20] sm:$0xff]
    %v2758 = vld [vmem:[#allocation19 + $0x28] sm:$0xff]
    %v2759 = vld [vmem:[#allocation19 + $0x30] sm:$0xff]
    %v2760 = vld [vmem:[#allocation19 + $0x38] sm:$0xff]
    %v2761 = vld [vmem:[#allocation19 + $0x40] sm:$0xff]
    %v2762 = vld [vmem:[#allocation19 + $0x48] sm:$0xff]
    %v2763 = vld [vmem:[#allocation19 + $0x50] sm:$0xff]
    %v2764 = vld [vmem:[#allocation19 + $0x58] sm:$0xff]
    %v2765 = vld [vmem:[#allocation19 + $0x60] sm:$0xff]
    %v2766 = vld [vmem:[#allocation19 + $0x68] sm:$0xff]
    %v2767 = vld [vmem:[#allocation19 + $0x70] sm:$0xff]
    %v2768 = vld [vmem:[#allocation19 + $0x78] sm:$0xff]
    %v2769 = vld [vmem:[#allocation19 + $0x80] sm:$0xff]
    %v2770 = vld [vmem:[#allocation19 + $0x88] sm:$0xff]
    %v2771 = vld [vmem:[#allocation19 + $0x90] sm:$0xff]
    %v2772 = vld [vmem:[#allocation19 + $0x98] sm:$0xff]
    %v2773 = vld [vmem:[#allocation19 + $0xa0] sm:$0xff]
    %v2774 = vld [vmem:[#allocation19 + $0xa8] sm:$0xff]
    %v2775 = vld [vmem:[#allocation19 + $0xb0] sm:$0xff]
    %v2776 = vld [vmem:[#allocation19 + $0xb8] sm:$0xff]
    %v2777 = vld [vmem:[#allocation19 + $0xc0] sm:$0xff]
    %v2778 = vld [vmem:[#allocation19 + $0xc8] sm:$0xff]
    %v2779 = vld [vmem:[#allocation19 + $0xd0] sm:$0xff]
    %v2780 = vld [vmem:[#allocation19 + $0xd8] sm:$0xff]
    %v2781 = vld [vmem:[#allocation19 + $0xe0] sm:$0xff]
    %v2782 = vld [vmem:[#allocation19 + $0xe8] sm:$0xff]
    %v2783 = vld [vmem:[#allocation19 + $0xf0] sm:$0xff]
    %v2784 = vld [vmem:[#allocation19 + $0xf8] sm:$0xff]
    %v2785 = vlaneseq
    %v2786 = vshrl.u32 %v2785, 7
    %v2787 = vsub.s32 1, %v2786
    %v2788 = vrot.slane %v2500, %v2787
    %v2789 = vlaneseq
    %v2790 = vshrl.u32 %v2789, 7
    %v2791 = vsub.s32 1, %v2790
    %v2792 = vrot.slane %v2501, %v2791
    %v2825 = vunpack.c.l.b16 %v2753
    %v2826 = vunpack.c.h.b16 %v2753
    %v2827 = vunpack.c.l.b16 %v2754
    %v2828 = vunpack.c.h.b16 %v2754
    %v2829 = vunpack.c.l.b16 %v2755
    %v2830 = vunpack.c.h.b16 %v2755
    %v2831 = vunpack.c.l.b16 %v2756
    %v2832 = vunpack.c.h.b16 %v2756
    %v2833 = vunpack.c.l.b16 %v2757
    %v2834 = vunpack.c.h.b16 %v2757
    %v2835 = vunpack.c.l.b16 %v2758
    %v2836 = vunpack.c.h.b16 %v2758
    %v2837 = vunpack.c.l.b16 %v2759
    %v2838 = vunpack.c.h.b16 %v2759
    %v2839 = vunpack.c.l.b16 %v2760
    %v2840 = vunpack.c.h.b16 %v2760
    %v2841 = vunpack.c.l.b16 %v2761
    %v2842 = vunpack.c.h.b16 %v2761
    %v2843 = vunpack.c.l.b16 %v2762
    %v2844 = vunpack.c.h.b16 %v2762
    %v2845 = vunpack.c.l.b16 %v2763
    %v2846 = vunpack.c.h.b16 %v2763
    %v2847 = vunpack.c.l.b16 %v2764
    %v2848 = vunpack.c.h.b16 %v2764
    %v2849 = vunpack.c.l.b16 %v2765
    %v2850 = vunpack.c.h.b16 %v2765
    %v2851 = vunpack.c.l.b16 %v2766
    %v2852 = vunpack.c.h.b16 %v2766
    %v2853 = vunpack.c.l.b16 %v2767
    %v2854 = vunpack.c.h.b16 %v2767
    %v2855 = vunpack.c.l.b16 %v2768
    %v2856 = vunpack.c.h.b16 %v2768
    %v2857 = vunpack.c.l.b16 %v2769
    %v2858 = vunpack.c.h.b16 %v2769
    %v2859 = vunpack.c.l.b16 %v2770
    %v2860 = vunpack.c.h.b16 %v2770
    %v2861 = vunpack.c.l.b16 %v2771
    %v2862 = vunpack.c.h.b16 %v2771
    %v2863 = vunpack.c.l.b16 %v2772
    %v2864 = vunpack.c.h.b16 %v2772
    %v2865 = vunpack.c.l.b16 %v2773
    %v2866 = vunpack.c.h.b16 %v2773
    %v2867 = vunpack.c.l.b16 %v2774
    %v2868 = vunpack.c.h.b16 %v2774
    %v2869 = vunpack.c.l.b16 %v2775
    %v2870 = vunpack.c.h.b16 %v2775
    %v2871 = vunpack.c.l.b16 %v2776
    %v2872 = vunpack.c.h.b16 %v2776
    %v2873 = vunpack.c.l.b16 %v2777
    %v2874 = vunpack.c.h.b16 %v2777
    %v2875 = vunpack.c.l.b16 %v2778
    %v2876 = vunpack.c.h.b16 %v2778
    %v2877 = vunpack.c.l.b16 %v2779
    %v2878 = vunpack.c.h.b16 %v2779
    %v2879 = vunpack.c.l.b16 %v2780
    %v2880 = vunpack.c.h.b16 %v2780
    %v2881 = vunpack.c.l.b16 %v2781
    %v2882 = vunpack.c.h.b16 %v2781
    %v2883 = vunpack.c.l.b16 %v2782
    %v2884 = vunpack.c.h.b16 %v2782
    %v2885 = vunpack.c.l.b16 %v2783
    %v2886 = vunpack.c.h.b16 %v2783
    %v2887 = vunpack.c.l.b16 %v2784
    %v2888 = vunpack.c.h.b16 %v2784
    %v2889 = vpack.c.b16 %v2827, %v2825
    %v2890 = vpack.c.b16 %v2828, %v2826
    %v2891 = vpack.c.b16 %v2831, %v2829
    %v2892 = vpack.c.b16 %v2832, %v2830
    %v2893 = vpack.c.b16 %v2835, %v2833
    %v2894 = vpack.c.b16 %v2836, %v2834
    %v2895 = vpack.c.b16 %v2839, %v2837
    %v2896 = vpack.c.b16 %v2840, %v2838
    %v2897 = vpack.c.b16 %v2843, %v2841
    %v2898 = vpack.c.b16 %v2844, %v2842
    %v2899 = vpack.c.b16 %v2847, %v2845
    %v2900 = vpack.c.b16 %v2848, %v2846
    %v2901 = vpack.c.b16 %v2851, %v2849
    %v2902 = vpack.c.b16 %v2852, %v2850
    %v2903 = vpack.c.b16 %v2855, %v2853
    %v2904 = vpack.c.b16 %v2856, %v2854
    %v2905 = vpack.c.b16 %v2859, %v2857
    %v2906 = vpack.c.b16 %v2860, %v2858
    %v2907 = vpack.c.b16 %v2863, %v2861
    %v2908 = vpack.c.b16 %v2864, %v2862
    %v2909 = vpack.c.b16 %v2867, %v2865
    %v2910 = vpack.c.b16 %v2868, %v2866
    %v2911 = vpack.c.b16 %v2871, %v2869
    %v2912 = vpack.c.b16 %v2872, %v2870
    %v2913 = vpack.c.b16 %v2875, %v2873
    %v2914 = vpack.c.b16 %v2876, %v2874
    %v2915 = vpack.c.b16 %v2879, %v2877
    %v2916 = vpack.c.b16 %v2880, %v2878
    %v2917 = vpack.c.b16 %v2883, %v2881
    %v2918 = vpack.c.b16 %v2884, %v2882
    %v2919 = vpack.c.b16 %v2887, %v2885
    %v2920 = vpack.c.b16 %v2888, %v2886
    %2953 = vmatprep.subr.bf16.mxu0 %v2890
    %2954 = vmatpush1.bf16.msra.mxu0 %v2889
    %2955 = vmatprep.subr.bf16.mxu0 %v2892
    %2956 = vmatpush1.bf16.msra.mxu0 %v2891
    %2957 = vmatprep.subr.bf16.mxu0 %v2894
    %2958 = vmatpush1.bf16.msra.mxu0 %v2893
    %2959 = vmatprep.subr.bf16.mxu0 %v2896
    %2960 = vmatpush1.bf16.msra.mxu0 %v2895
    %2961 = vmatprep.subr.bf16.mxu0 %v2898
    %2962 = vmatpush1.bf16.msra.mxu0 %v2897
    %2963 = vmatprep.subr.bf16.mxu0 %v2900
    %2964 = vmatpush1.bf16.msra.mxu0 %v2899
    %2965 = vmatprep.subr.bf16.mxu0 %v2902
    %2966 = vmatpush1.bf16.msra.mxu0 %v2901
    %2967 = vmatprep.subr.bf16.mxu0 %v2904
    %2968 = vmatpush1.bf16.msra.mxu0 %v2903
    %2969 = vmatprep.subr.bf16.mxu0 %v2906
    %2970 = vmatpush1.bf16.msra.mxu0 %v2905
    %2971 = vmatprep.subr.bf16.mxu0 %v2908
    %2972 = vmatpush1.bf16.msra.mxu0 %v2907
    %2973 = vmatprep.subr.bf16.mxu0 %v2910
    %2974 = vmatpush1.bf16.msra.mxu0 %v2909
    %2975 = vmatprep.subr.bf16.mxu0 %v2912
    %2976 = vmatpush1.bf16.msra.mxu0 %v2911
    %2977 = vmatprep.subr.bf16.mxu0 %v2914
    %2978 = vmatpush1.bf16.msra.mxu0 %v2913
    %2979 = vmatprep.subr.bf16.mxu0 %v2916
    %2980 = vmatpush1.bf16.msra.mxu0 %v2915
    %2981 = vmatprep.subr.bf16.mxu0 %v2918
    %2982 = vmatpush1.bf16.msra.mxu0 %v2917
    %2983 = vmatprep.subr.bf16.mxu0 %v2920
    %2984 = vmatpush1.bf16.msra.mxu0 %v2919
    %2985 = vmatprep.mubr.bf16.mxu0 %v2752
    %2986 = vmatmul.mubr.bf16.gmra.mrb[0].mxu0 %v2751
    %v2987 = vpop.f32.mrb[0].mxu0
    %v2988 = vadd.f32 %v2788, %v2987
    %v2989 = vpop.f32.mrb[0].mxu0
    %v2990 = vadd.f32 %v2792, %v2989
    %v2991 = vpop.f32.mrb[0].mxu0
    %v2992 = vadd.f32 %v2788, %v2991
    %v2993 = vpop.f32.mrb[0].mxu0
    %v2994 = vadd.f32 %v2792, %v2993
    %2995 = vdwg.mxu0
    %v2996 = vmax.f32 %v2988, 0.0
    %v2997 = vmax.f32 %v2990, 0.0
    %v2998 = vmax.f32 %v2992, 0.0
    %v2999 = vmax.f32 %v2994, 0.0
    %v3000 = vpack.c.bf16 %v2998, %v2996
    %v3001 = vpack.c.bf16 %v2999, %v2997
    %v3002 = vld [vmem:[#allocation20] sm:$0xf]
    %v3003 = vld [vmem:[#allocation20 + $0x4] sm:$0xf]
    %v3004 = vld [vmem:[#allocation20 + $0x8] sm:$0xf]
    %v3005 = vld [vmem:[#allocation20 + $0xc] sm:$0xf]
    %v3006 = vld [vmem:[#allocation20 + $0x10] sm:$0xf]
    %v3007 = vld [vmem:[#allocation20 + $0x14] sm:$0xf]
    %v3008 = vld [vmem:[#allocation20 + $0x18] sm:$0xf]
    %v3009 = vld [vmem:[#allocation20 + $0x1c] sm:$0xf]
    %v3010 = vld [vmem:[#allocation20 + $0x20] sm:$0xf]
    %v3011 = vld [vmem:[#allocation20 + $0x24] sm:$0xf]
    %v3012 = vld [vmem:[#allocation20 + $0x28] sm:$0xf]
    %v3013 = vld [vmem:[#allocation20 + $0x2c] sm:$0xf]
    %v3014 = vld [vmem:[#allocation20 + $0x30] sm:$0xf]
    %v3015 = vld [vmem:[#allocation20 + $0x34] sm:$0xf]
    %v3016 = vld [vmem:[#allocation20 + $0x38] sm:$0xf]
    %v3017 = vld [vmem:[#allocation20 + $0x3c] sm:$0xf]
    %v3018 = vld [vmem:[#allocation20 + $0x40] sm:$0xf]
    %v3019 = vld [vmem:[#allocation20 + $0x44] sm:$0xf]
    %v3020 = vld [vmem:[#allocation20 + $0x48] sm:$0xf]
    %v3021 = vld [vmem:[#allocation20 + $0x4c] sm:$0xf]
    %v3022 = vld [vmem:[#allocation20 + $0x50] sm:$0xf]
    %v3023 = vld [vmem:[#allocation20 + $0x54] sm:$0xf]
    %v3024 = vld [vmem:[#allocation20 + $0x58] sm:$0xf]
    %v3025 = vld [vmem:[#allocation20 + $0x5c] sm:$0xf]
    %v3026 = vld [vmem:[#allocation20 + $0x60] sm:$0xf]
    %v3027 = vld [vmem:[#allocation20 + $0x64] sm:$0xf]
    %v3028 = vld [vmem:[#allocation20 + $0x68] sm:$0xf]
    %v3029 = vld [vmem:[#allocation20 + $0x6c] sm:$0xf]
    %v3030 = vld [vmem:[#allocation20 + $0x70] sm:$0xf]
    %v3031 = vld [vmem:[#allocation20 + $0x74] sm:$0xf]
    %v3032 = vld [vmem:[#allocation20 + $0x78] sm:$0xf]
    %v3033 = vld [vmem:[#allocation20 + $0x7c] sm:$0xf]
    %v3034 = vlaneseq
    %v3035 = vshrl.u32 %v3034, 7
    %v3036 = vsub.s32 2, %v3035
    %v3037 = vrot.slane %v2500, %v3036
    %v3070 = vunpack.c.l.b16 %v3002
    %v3071 = vunpack.c.l.b16 %v3003
    %v3072 = vunpack.c.l.b16 %v3004
    %v3073 = vunpack.c.l.b16 %v3005
    %v3074 = vunpack.c.l.b16 %v3006
    %v3075 = vunpack.c.l.b16 %v3007
    %v3076 = vunpack.c.l.b16 %v3008
    %v3077 = vunpack.c.l.b16 %v3009
    %v3078 = vunpack.c.l.b16 %v3010
    %v3079 = vunpack.c.l.b16 %v3011
    %v3080 = vunpack.c.l.b16 %v3012
    %v3081 = vunpack.c.l.b16 %v3013
    %v3082 = vunpack.c.l.b16 %v3014
    %v3083 = vunpack.c.l.b16 %v3015
    %v3084 = vunpack.c.l.b16 %v3016
    %v3085 = vunpack.c.l.b16 %v3017
    %v3086 = vunpack.c.l.b16 %v3018
    %v3087 = vunpack.c.l.b16 %v3019
    %v3088 = vunpack.c.l.b16 %v3020
    %v3089 = vunpack.c.l.b16 %v3021
    %v3090 = vunpack.c.l.b16 %v3022
    %v3091 = vunpack.c.l.b16 %v3023
    %v3092 = vunpack.c.l.b16 %v3024
    %v3093 = vunpack.c.l.b16 %v3025
    %v3094 = vunpack.c.l.b16 %v3026
    %v3095 = vunpack.c.l.b16 %v3027
    %v3096 = vunpack.c.l.b16 %v3028
    %v3097 = vunpack.c.l.b16 %v3029
    %v3098 = vunpack.c.l.b16 %v3030
    %v3099 = vunpack.c.l.b16 %v3031
    %v3100 = vunpack.c.l.b16 %v3032
    %v3101 = vunpack.c.l.b16 %v3033
    %v3102 = vpack.c.b16 %v3071, %v3070
    %v3103 = vpack.c.b16 %v3073, %v3072
    %v3104 = vpack.c.b16 %v3075, %v3074
    %v3105 = vpack.c.b16 %v3077, %v3076
    %v3106 = vpack.c.b16 %v3079, %v3078
    %v3107 = vpack.c.b16 %v3081, %v3080
    %v3108 = vpack.c.b16 %v3083, %v3082
    %v3109 = vpack.c.b16 %v3085, %v3084
    %v3110 = vpack.c.b16 %v3087, %v3086
    %v3111 = vpack.c.b16 %v3089, %v3088
    %v3112 = vpack.c.b16 %v3091, %v3090
    %v3113 = vpack.c.b16 %v3093, %v3092
    %v3114 = vpack.c.b16 %v3095, %v3094
    %v3115 = vpack.c.b16 %v3097, %v3096
    %v3116 = vpack.c.b16 %v3099, %v3098
    %v3117 = vpack.c.b16 %v3101, %v3100
    %3134 = vmatprep.subr.bf16.mxu0 0
    %3135 = vmatpush1.bf16.msra.mxu0 %v3102
    %3136 = vmatprep.subr.bf16.mxu0 0
    %3137 = vmatpush1.bf16.msra.mxu0 %v3103
    %3138 = vmatprep.subr.bf16.mxu0 0
    %3139 = vmatpush1.bf16.msra.mxu0 %v3104
    %3140 = vmatprep.subr.bf16.mxu0 0
    %3141 = vmatpush1.bf16.msra.mxu0 %v3105
    %3142 = vmatprep.subr.bf16.mxu0 0
    %3143 = vmatpush1.bf16.msra.mxu0 %v3106
    %3144 = vmatprep.subr.bf16.mxu0 0
    %3145 = vmatpush1.bf16.msra.mxu0 %v3107
    %3146 = vmatprep.subr.bf16.mxu0 0
    %3147 = vmatpush1.bf16.msra.mxu0 %v3108
    %3148 = vmatprep.subr.bf16.mxu0 0
    %3149 = vmatpush1.bf16.msra.mxu0 %v3109
    %3150 = vmatprep.subr.bf16.mxu0 0
    %3151 = vmatpush1.bf16.msra.mxu0 %v3110
    %3152 = vmatprep.subr.bf16.mxu0 0
    %3153 = vmatpush1.bf16.msra.mxu0 %v3111
    %3154 = vmatprep.subr.bf16.mxu0 0
    %3155 = vmatpush1.bf16.msra.mxu0 %v3112
    %3156 = vmatprep.subr.bf16.mxu0 0
    %3157 = vmatpush1.bf16.msra.mxu0 %v3113
    %3158 = vmatprep.subr.bf16.mxu0 0
    %3159 = vmatpush1.bf16.msra.mxu0 %v3114
    %3160 = vmatprep.subr.bf16.mxu0 0
    %3161 = vmatpush1.bf16.msra.mxu0 %v3115
    %3162 = vmatprep.subr.bf16.mxu0 0
    %3163 = vmatpush1.bf16.msra.mxu0 %v3116
    %3164 = vmatprep.subr.bf16.mxu0 0
    %3165 = vmatpush1.bf16.msra.mxu0 %v3117
    %3166 = vmatprep.mubr.bf16.mxu0 %v3001
    %3167 = vmatmul.mubr.bf16.gmra.mrb[0].mxu0 %v3000
    %v3168 = vpop.f32.mrb[0].mxu0
    %v3169 = vadd.f32 %v3037, %v3168
    %v3170 = vpop.f32.mrb[0].mxu0
    %v3171 = vpop.f32.mrb[0].mxu0
    %v3172 = vadd.f32 %v3037, %v3171
    %v3173 = vpop.f32.mrb[0].mxu0
    %3174 = vdwg.mxu0
    %3175 = vmatprep.subr.mxu0 0.0
    %3176 = vmatpush1.msra.mxu0 %v3169
    %3177 = vmatprep.subr.mxu0 0.0
    %3178 = vmatpush1.msra.mxu0 %v3172
    %3179 = vmatprep.subr.mxu0 0.0
    %3180 = vmatpush1.msra.mxu0 0.0
    %3181 = vmatprep.subr.mxu0 0.0
    %3182 = vmatpush1.msra.mxu0 0.0
    %3183 = vmatprep.subr.mxu0 0.0
    %3184 = vmatpush1.msra.mxu0 0.0
    %3185 = vmatprep.subr.mxu0 0.0
    %3186 = vmatpush1.msra.mxu0 0.0
    %3187 = vmatprep.subr.mxu0 0.0
    %3188 = vmatpush1.msra.mxu0 0.0
    %3189 = vmatprep.subr.mxu0 0.0
    %3190 = vmatpush1.msra.mxu0 0.0
    %3191 = vmatprep.subr.mxu0 0.0
    %3192 = vmatpush1.msra.mxu0 0.0
    %3193 = vmatprep.subr.mxu0 0.0
    %3194 = vmatpush1.msra.mxu0 0.0
    %3195 = vmatprep.subr.mxu0 0.0
    %3196 = vmatpush1.msra.mxu0 0.0
    %3197 = vmatprep.subr.mxu0 0.0
    %3198 = vmatpush1.msra.mxu0 0.0
    %3199 = vmatprep.subr.mxu0 0.0
    %3200 = vmatpush1.msra.mxu0 0.0
    %3201 = vmatprep.subr.mxu0 0.0
    %3202 = vmatpush1.msra.mxu0 0.0
    %3203 = vmatprep.subr.mxu0 0.0
    %3204 = vmatpush1.msra.mxu0 0.0
    %3205 = vmatprep.subr.mxu0 0.0
    %3206 = vmatpush1.msra.mxu0 0.0
    %3207 = vmatprep.subr.mxu0 0.0
    %3208 = vmatpush1.msra.mxu0 0.0
    %3209 = vmatprep.subr.mxu0 0.0
    %3210 = vmatpush1.msra.mxu0 0.0
    %3211 = vmatprep.subr.mxu0 0.0
    %3212 = vmatpush1.msra.mxu0 0.0
    %3213 = vmatprep.subr.mxu0 0.0
    %3214 = vmatpush1.msra.mxu0 0.0
    %3215 = vmatprep.subr.mxu0 0.0
    %3216 = vmatpush1.msra.mxu0 0.0
    %3217 = vmatprep.subr.mxu0 0.0
    %3218 = vmatpush1.msra.mxu0 0.0
    %3219 = vmatprep.subr.mxu0 0.0
    %3220 = vmatpush1.msra.mxu0 0.0
    %3221 = vmatprep.subr.mxu0 0.0
    %3222 = vmatpush1.msra.mxu0 0.0
    %3223 = vmatprep.subr.mxu0 0.0
    %3224 = vmatpush1.msra.mxu0 0.0
    %3225 = vmatprep.subr.mxu0 0.0
    %3226 = vmatpush1.msra.mxu0 0.0
    %3227 = vmatprep.subr.mxu0 0.0
    %3228 = vmatpush1.msra.mxu0 0.0
    %3229 = vmatprep.subr.mxu0 0.0
    %3230 = vmatpush1.msra.mxu0 0.0
    %3231 = vmatprep.subr.mxu0 0.0
    %3232 = vmatpush1.msra.mxu0 0.0
    %3233 = vmatprep.subr.mxu0 0.0
    %3234 = vmatpush1.msra.mxu0 0.0
    %3235 = vmatprep.subr.mxu0 0.0
    %3236 = vmatpush1.msra.mxu0 0.0
    %3237 = vmatprep.subr.mxu0 0.0
    %3238 = vmatpush1.msra.mxu0 0.0
    %3239 = vmatprep.mubr.f32.mxu0 0.0
    %3240 = vmatmul.mubr.f32.gmra.mrb[0].mxu0 %v2014
    %v3241 = vpop.f32.mrb[0].mxu0
    %v3242 = vadd.f32 0.0, %v3241
    %v3243 = vpop.f32.mrb[0].mxu0
    %3244 = vdwg.mxu0
    %v3245 = vmul.f32 %v3242, %v1336
    %v3246 = vpack.c.bf16 %v3245, %v3245
    %v3247 = vld [vmem:[#allocation22] sm:$0xff]
    %v3248 = vld [vmem:[#allocation22 + $0x8] sm:$0xff]
    %v3249 = vld [vmem:[#allocation22 + $0x10] sm:$0xff]
    %v3250 = vld [vmem:[#allocation22 + $0x18] sm:$0xff]
    %v3251 = vld [vmem:[#allocation22 + $0x20] sm:$0xff]
    %v3252 = vld [vmem:[#allocation22 + $0x28] sm:$0xff]
    %v3253 = vld [vmem:[#allocation22 + $0x30] sm:$0xff]
    %v3254 = vld [vmem:[#allocation22 + $0x38] sm:$0xff]
    %v3255 = vld [vmem:[#allocation22 + $0x40] sm:$0xff]
    %v3256 = vld [vmem:[#allocation22 + $0x48] sm:$0xff]
    %v3257 = vld [vmem:[#allocation22 + $0x50] sm:$0xff]
    %v3258 = vld [vmem:[#allocation22 + $0x58] sm:$0xff]
    %v3259 = vld [vmem:[#allocation22 + $0x60] sm:$0xff]
    %v3260 = vld [vmem:[#allocation22 + $0x68] sm:$0xff]
    %v3261 = vld [vmem:[#allocation22 + $0x70] sm:$0xff]
    %v3262 = vld [vmem:[#allocation22 + $0x78] sm:$0xff]
    %v3263 = vlaneseq
    %v3264 = vshrl.u32 %v3263, 7
    %v3265 = vsub.s32 3, %v3264
    %v3266 = vrot.slane %v2500, %v3265
    %v3267 = vlaneseq
    %v3268 = vshrl.u32 %v3267, 7
    %v3269 = vsub.s32 3, %v3268
    %v3270 = vrot.slane %v2501, %v3269
    %v3287 = vunpack.c.l.b16 %v3247
    %v3288 = vunpack.c.h.b16 %v3247
    %v3289 = vunpack.c.l.b16 %v3248
    %v3290 = vunpack.c.h.b16 %v3248
    %v3291 = vunpack.c.l.b16 %v3249
    %v3292 = vunpack.c.h.b16 %v3249
    %v3293 = vunpack.c.l.b16 %v3250
    %v3294 = vunpack.c.h.b16 %v3250
    %v3295 = vunpack.c.l.b16 %v3251
    %v3296 = vunpack.c.h.b16 %v3251
    %v3297 = vunpack.c.l.b16 %v3252
    %v3298 = vunpack.c.h.b16 %v3252
    %v3299 = vunpack.c.l.b16 %v3253
    %v3300 = vunpack.c.h.b16 %v3253
    %v3301 = vunpack.c.l.b16 %v3254
    %v3302 = vunpack.c.h.b16 %v3254
    %v3303 = vunpack.c.l.b16 %v3255
    %v3304 = vunpack.c.h.b16 %v3255
    %v3305 = vunpack.c.l.b16 %v3256
    %v3306 = vunpack.c.h.b16 %v3256
    %v3307 = vunpack.c.l.b16 %v3257
    %v3308 = vunpack.c.h.b16 %v3257
    %v3309 = vunpack.c.l.b16 %v3258
    %v3310 = vunpack.c.h.b16 %v3258
    %v3311 = vunpack.c.l.b16 %v3259
    %v3312 = vunpack.c.h.b16 %v3259
    %v3313 = vunpack.c.l.b16 %v3260
    %v3314 = vunpack.c.h.b16 %v3260
    %v3315 = vunpack.c.l.b16 %v3261
    %v3316 = vunpack.c.h.b16 %v3261
    %v3317 = vunpack.c.l.b16 %v3262
    %v3318 = vunpack.c.h.b16 %v3262
    %v3319 = vpack.c.b16 %v3289, %v3287
    %v3320 = vpack.c.b16 %v3290, %v3288
    %v3321 = vpack.c.b16 %v3293, %v3291
    %v3322 = vpack.c.b16 %v3294, %v3292
    %v3323 = vpack.c.b16 %v3297, %v3295
    %v3324 = vpack.c.b16 %v3298, %v3296
    %v3325 = vpack.c.b16 %v3301, %v3299
    %v3326 = vpack.c.b16 %v3302, %v3300
    %v3327 = vpack.c.b16 %v3305, %v3303
    %v3328 = vpack.c.b16 %v3306, %v3304
    %v3329 = vpack.c.b16 %v3309, %v3307
    %v3330 = vpack.c.b16 %v3310, %v3308
    %v3331 = vpack.c.b16 %v3313, %v3311
    %v3332 = vpack.c.b16 %v3314, %v3312
    %v3333 = vpack.c.b16 %v3317, %v3315
    %v3334 = vpack.c.b16 %v3318, %v3316
    %3351 = vmatprep.subr.bf16.mxu0 %v3320
    %3352 = vmatpush1.bf16.msra.mxu0 %v3319
    %3353 = vmatprep.subr.bf16.mxu0 %v3322
    %3354 = vmatpush1.bf16.msra.mxu0 %v3321
    %3355 = vmatprep.subr.bf16.mxu0 %v3324
    %3356 = vmatpush1.bf16.msra.mxu0 %v3323
    %3357 = vmatprep.subr.bf16.mxu0 %v3326
    %3358 = vmatpush1.bf16.msra.mxu0 %v3325
    %3359 = vmatprep.subr.bf16.mxu0 %v3328
    %3360 = vmatpush1.bf16.msra.mxu0 %v3327
    %3361 = vmatprep.subr.bf16.mxu0 %v3330
    %3362 = vmatpush1.bf16.msra.mxu0 %v3329
    %3363 = vmatprep.subr.bf16.mxu0 %v3332
    %3364 = vmatpush1.bf16.msra.mxu0 %v3331
    %3365 = vmatprep.subr.bf16.mxu0 %v3334
    %3366 = vmatpush1.bf16.msra.mxu0 %v3333
    %3367 = vmatprep.subr.bf16.mxu0 0
    %3368 = vmatpush1.bf16.msra.mxu0 0
    %3369 = vmatprep.subr.bf16.mxu0 0
    %3370 = vmatpush1.bf16.msra.mxu0 0
    %3371 = vmatprep.subr.bf16.mxu0 0
    %3372 = vmatpush1.bf16.msra.mxu0 0
    %3373 = vmatprep.subr.bf16.mxu0 0
    %3374 = vmatpush1.bf16.msra.mxu0 0
    %3375 = vmatprep.subr.bf16.mxu0 0
    %3376 = vmatpush1.bf16.msra.mxu0 0
    %3377 = vmatprep.subr.bf16.mxu0 0
    %3378 = vmatpush1.bf16.msra.mxu0 0
    %3379 = vmatprep.subr.bf16.mxu0 0
    %3380 = vmatpush1.bf16.msra.mxu0 0
    %3381 = vmatprep.subr.bf16.mxu0 0
    %3382 = vmatpush1.bf16.msra.mxu0 0
    %3383 = vmatprep.mubr.bf16.mxu0 0
    %3384 = vmatmul.mubr.bf16.gmra.mrb[0].mxu0 %v3246
    %v3385 = vpop.f32.mrb[0].mxu0
    %v3386 = vadd.f32 %v3266, %v3385
    %v3387 = vpop.f32.mrb[0].mxu0
    %v3388 = vadd.f32 %v3270, %v3387
    %v3389 = vpop.f32.mrb[0].mxu0
    %v3390 = vpop.f32.mrb[0].mxu0
    %3391 = vdwg.mxu0
    %v3392 = vmax.f32 %v3386, 0.0
    %v3393 = vmax.f32 %v3388, 0.0
    %v3394 = vpack.c.bf16 %v3392, %v3392
    %v3395 = vpack.c.bf16 %v3393, %v3393
    %v3396 = vld [vmem:[%s33] sm:$0xf]
    %v3397 = vld [vmem:[%s33 + $0x4] sm:$0xf]
    %v3398 = vld [vmem:[%s33 + $0x8] sm:$0xf]
    %v3399 = vld [vmem:[%s33 + $0xc] sm:$0xf]
    %v3400 = vld [vmem:[%s33 + $0x10] sm:$0xf]
    %v3401 = vld [vmem:[%s33 + $0x14] sm:$0xf]
    %v3402 = vld [vmem:[%s33 + $0x18] sm:$0xf]
    %v3403 = vld [vmem:[%s33 + $0x1c] sm:$0xf]
    %v3404 = vld [vmem:[%s33 + $0x20] sm:$0xf]
    %v3405 = vld [vmem:[%s33 + $0x24] sm:$0xf]
    %v3406 = vld [vmem:[%s33 + $0x28] sm:$0xf]
    %v3407 = vld [vmem:[%s33 + $0x2c] sm:$0xf]
    %v3408 = vld [vmem:[%s33 + $0x30] sm:$0xf]
    %v3409 = vld [vmem:[%s33 + $0x34] sm:$0xf]
    %v3410 = vld [vmem:[%s33 + $0x38] sm:$0xf]
    %v3411 = vld [vmem:[%s33 + $0x3c] sm:$0xf]
    %v3412 = vld [vmem:[%s33 + $0x40] sm:$0xf]
    %v3413 = vld [vmem:[%s33 + $0x44] sm:$0xf]
    %v3414 = vld [vmem:[%s33 + $0x48] sm:$0xf]
    %v3415 = vld [vmem:[%s33 + $0x4c] sm:$0xf]
    %v3416 = vld [vmem:[%s33 + $0x50] sm:$0xf]
    %v3417 = vld [vmem:[%s33 + $0x54] sm:$0xf]
    %v3418 = vld [vmem:[%s33 + $0x58] sm:$0xf]
    %v3419 = vld [vmem:[%s33 + $0x5c] sm:$0xf]
    %v3420 = vld [vmem:[%s33 + $0x60] sm:$0xf]
    %v3421 = vld [vmem:[%s33 + $0x64] sm:$0xf]
    %v3422 = vld [vmem:[%s33 + $0x68] sm:$0xf]
    %v3423 = vld [vmem:[%s33 + $0x6c] sm:$0xf]
    %v3424 = vld [vmem:[%s33 + $0x70] sm:$0xf]
    %v3425 = vld [vmem:[%s33 + $0x74] sm:$0xf]
    %v3426 = vld [vmem:[%s33 + $0x78] sm:$0xf]
    %v3427 = vld [vmem:[%s33 + $0x7c] sm:$0xf]
    %v3428 = vlaneseq
    %v3429 = vshrl.u32 %v3428, 7
    %v3430 = vsub.s32 4, %v3429
    %v3431 = vrot.slane %v2500, %v3430
    %v3464 = vunpack.c.l.b16 %v3396
    %v3465 = vunpack.c.l.b16 %v3397
    %v3466 = vunpack.c.l.b16 %v3398
    %v3467 = vunpack.c.l.b16 %v3399
    %v3468 = vunpack.c.l.b16 %v3400
    %v3469 = vunpack.c.l.b16 %v3401
    %v3470 = vunpack.c.l.b16 %v3402
    %v3471 = vunpack.c.l.b16 %v3403
    %v3472 = vunpack.c.l.b16 %v3404
    %v3473 = vunpack.c.l.b16 %v3405
    %v3474 = vunpack.c.l.b16 %v3406
    %v3475 = vunpack.c.l.b16 %v3407
    %v3476 = vunpack.c.l.b16 %v3408
    %v3477 = vunpack.c.l.b16 %v3409
    %v3478 = vunpack.c.l.b16 %v3410
    %v3479 = vunpack.c.l.b16 %v3411
    %v3480 = vunpack.c.l.b16 %v3412
    %v3481 = vunpack.c.l.b16 %v3413
    %v3482 = vunpack.c.l.b16 %v3414
    %v3483 = vunpack.c.l.b16 %v3415
    %v3484 = vunpack.c.l.b16 %v3416
    %v3485 = vunpack.c.l.b16 %v3417
    %v3486 = vunpack.c.l.b16 %v3418
    %v3487 = vunpack.c.l.b16 %v3419
    %v3488 = vunpack.c.l.b16 %v3420
    %v3489 = vunpack.c.l.b16 %v3421
    %v3490 = vunpack.c.l.b16 %v3422
    %v3491 = vunpack.c.l.b16 %v3423
    %v3492 = vunpack.c.l.b16 %v3424
    %v3493 = vunpack.c.l.b16 %v3425
    %v3494 = vunpack.c.l.b16 %v3426
    %v3495 = vunpack.c.l.b16 %v3427
    %v3496 = vpack.c.b16 %v3465, %v3464
    %v3497 = vpack.c.b16 %v3467, %v3466
    %v3498 = vpack.c.b16 %v3469, %v3468
    %v3499 = vpack.c.b16 %v3471, %v3470
    %v3500 = vpack.c.b16 %v3473, %v3472
    %v3501 = vpack.c.b16 %v3475, %v3474
    %v3502 = vpack.c.b16 %v3477, %v3476
    %v3503 = vpack.c.b16 %v3479, %v3478
    %v3504 = vpack.c.b16 %v3481, %v3480
    %v3505 = vpack.c.b16 %v3483, %v3482
    %v3506 = vpack.c.b16 %v3485, %v3484
    %v3507 = vpack.c.b16 %v3487, %v3486
    %v3508 = vpack.c.b16 %v3489, %v3488
    %v3509 = vpack.c.b16 %v3491, %v3490
    %v3510 = vpack.c.b16 %v3493, %v3492
    %v3511 = vpack.c.b16 %v3495, %v3494
    %3528 = vmatprep.subr.bf16.mxu0 0
    %3529 = vmatpush1.bf16.msra.mxu0 %v3496
    %3530 = vmatprep.subr.bf16.mxu0 0
    %3531 = vmatpush1.bf16.msra.mxu0 %v3497
    %3532 = vmatprep.subr.bf16.mxu0 0
    %3533 = vmatpush1.bf16.msra.mxu0 %v3498
    %3534 = vmatprep.subr.bf16.mxu0 0
    %3535 = vmatpush1.bf16.msra.mxu0 %v3499
    %3536 = vmatprep.subr.bf16.mxu0 0
    %3537 = vmatpush1.bf16.msra.mxu0 %v3500
    %3538 = vmatprep.subr.bf16.mxu0 0
    %3539 = vmatpush1.bf16.msra.mxu0 %v3501
    %3540 = vmatprep.subr.bf16.mxu0 0
    %3541 = vmatpush1.bf16.msra.mxu0 %v3502
    %3542 = vmatprep.subr.bf16.mxu0 0
    %3543 = vmatpush1.bf16.msra.mxu0 %v3503
    %3544 = vmatprep.subr.bf16.mxu0 0
    %3545 = vmatpush1.bf16.msra.mxu0 %v3504
    %3546 = vmatprep.subr.bf16.mxu0 0
    %3547 = vmatpush1.bf16.msra.mxu0 %v3505
    %3548 = vmatprep.subr.bf16.mxu0 0
    %3549 = vmatpush1.bf16.msra.mxu0 %v3506
    %3550 = vmatprep.subr.bf16.mxu0 0
    %3551 = vmatpush1.bf16.msra.mxu0 %v3507
    %3552 = vmatprep.subr.bf16.mxu0 0
    %3553 = vmatpush1.bf16.msra.mxu0 %v3508
    %3554 = vmatprep.subr.bf16.mxu0 0
    %3555 = vmatpush1.bf16.msra.mxu0 %v3509
    %3556 = vmatprep.subr.bf16.mxu0 0
    %3557 = vmatpush1.bf16.msra.mxu0 %v3510
    %3558 = vmatprep.subr.bf16.mxu0 0
    %3559 = vmatpush1.bf16.msra.mxu0 %v3511
    %3560 = vmatprep.mubr.bf16.mxu0 %v3395
    %3561 = vmatmul.mubr.bf16.gmra.mrb[0].mxu0 %v3394
    %v3562 = vpop.f32.mrb[0].mxu0
    %v3563 = vadd.f32 %v3431, %v3562
    %v3564 = vpop.f32.mrb[0].mxu0
    %v3565 = vpop.f32.mrb[0].mxu0
    %v3566 = vpop.f32.mrb[0].mxu0
    %3567 = vdwg.mxu0
    %v3568 = vmax.f32 %v3563, 0.0
    %v3569 = vld [vmem:[%s35] sm:$0xff]
    %v3570 = vld [vmem:[%s35 + $0x8] sm:$0xff]
    %v3571 = vld [vmem:[%s35 + $0x10] sm:$0xff]
    %v3572 = vld [vmem:[%s35 + $0x18] sm:$0xff]
    %v3573 = vld [vmem:[%s35 + $0x20] sm:$0xff]
    %v3574 = vld [vmem:[%s35 + $0x28] sm:$0xff]
    %v3575 = vld [vmem:[%s35 + $0x30] sm:$0xff]
    %v3576 = vld [vmem:[%s35 + $0x38] sm:$0xff]
    %v3577 = vld [vmem:[%s35 + $0x40] sm:$0xff]
    %v3578 = vld [vmem:[%s35 + $0x48] sm:$0xff]
    %v3579 = vld [vmem:[%s35 + $0x50] sm:$0xff]
    %v3580 = vld [vmem:[%s35 + $0x58] sm:$0xff]
    %v3581 = vld [vmem:[%s35 + $0x60] sm:$0xff]
    %v3582 = vld [vmem:[%s35 + $0x68] sm:$0xff]
    %v3583 = vld [vmem:[%s35 + $0x70] sm:$0xff]
    %v3584 = vld [vmem:[%s35 + $0x78] sm:$0xff]
    %v3585 = vlaneseq
    %v3586 = vshrl.u32 %v3585, 7
    %v3587 = vsub.s32 5, %v3586
    %v3588 = vrot.slane %v2500, %v3587
    %3589 = vmatprep.subr.mxu0 0.0
    %3590 = vmatpush1.msra.mxu0 %v3569
    %3591 = vmatprep.subr.mxu0 0.0
    %3592 = vmatpush1.msra.mxu0 %v3570
    %3593 = vmatprep.subr.mxu0 0.0
    %3594 = vmatpush1.msra.mxu0 %v3571
    %3595 = vmatprep.subr.mxu0 0.0
    %3596 = vmatpush1.msra.mxu0 %v3572
    %3597 = vmatprep.subr.mxu0 0.0
    %3598 = vmatpush1.msra.mxu0 %v3573
    %3599 = vmatprep.subr.mxu0 0.0
    %3600 = vmatpush1.msra.mxu0 %v3574
    %3601 = vmatprep.subr.mxu0 0.0
    %3602 = vmatpush1.msra.mxu0 %v3575
    %3603 = vmatprep.subr.mxu0 0.0
    %3604 = vmatpush1.msra.mxu0 %v3576
    %3605 = vmatprep.subr.mxu0 0.0
    %3606 = vmatpush1.msra.mxu0 %v3577
    %3607 = vmatprep.subr.mxu0 0.0
    %3608 = vmatpush1.msra.mxu0 %v3578
    %3609 = vmatprep.subr.mxu0 0.0
    %3610 = vmatpush1.msra.mxu0 %v3579
    %3611 = vmatprep.subr.mxu0 0.0
    %3612 = vmatpush1.msra.mxu0 %v3580
    %3613 = vmatprep.subr.mxu0 0.0
    %3614 = vmatpush1.msra.mxu0 %v3581
    %3615 = vmatprep.subr.mxu0 0.0
    %3616 = vmatpush1.msra.mxu0 %v3582
    %3617 = vmatprep.subr.mxu0 0.0
    %3618 = vmatpush1.msra.mxu0 %v3583
    %3619 = vmatprep.subr.mxu0 0.0
    %3620 = vmatpush1.msra.mxu0 %v3584
    %3621 = vmatprep.subr.mxu0 0.0
    %3622 = vmatpush1.msra.mxu0 0.0
    %3623 = vmatprep.subr.mxu0 0.0
    %3624 = vmatpush1.msra.mxu0 0.0
    %3625 = vmatprep.subr.mxu0 0.0
    %3626 = vmatpush1.msra.mxu0 0.0
    %3627 = vmatprep.subr.mxu0 0.0
    %3628 = vmatpush1.msra.mxu0 0.0
    %3629 = vmatprep.subr.mxu0 0.0
    %3630 = vmatpush1.msra.mxu0 0.0
    %3631 = vmatprep.subr.mxu0 0.0
    %3632 = vmatpush1.msra.mxu0 0.0
    %3633 = vmatprep.subr.mxu0 0.0
    %3634 = vmatpush1.msra.mxu0 0.0
    %3635 = vmatprep.subr.mxu0 0.0
    %3636 = vmatpush1.msra.mxu0 0.0
    %3637 = vmatprep.subr.mxu0 0.0
    %3638 = vmatpush1.msra.mxu0 0.0
    %3639 = vmatprep.subr.mxu0 0.0
    %3640 = vmatpush1.msra.mxu0 0.0
    %3641 = vmatprep.subr.mxu0 0.0
    %3642 = vmatpush1.msra.mxu0 0.0
    %3643 = vmatprep.subr.mxu0 0.0
    %3644 = vmatpush1.msra.mxu0 0.0
    %3645 = vmatprep.subr.mxu0 0.0
    %3646 = vmatpush1.msra.mxu0 0.0
    %3647 = vmatprep.subr.mxu0 0.0
    %3648 = vmatpush1.msra.mxu0 0.0
    %3649 = vmatprep.subr.mxu0 0.0
    %3650 = vmatpush1.msra.mxu0 0.0
    %3651 = vmatprep.subr.mxu0 0.0
    %3652 = vmatpush1.msra.mxu0 0.0
    %3653 = vmatprep.mubr.f32.mxu0 0.0
    %3654 = vmatmul.mubr.f32.gmra.mrb[0].mxu0 %v3568
    %v3655 = vpop.f32.mrb[0].mxu0
    %v3656 = vadd.f32 %v3588, %v3655
    %v3657 = vpop.f32.mrb[0].mxu0
    %3658 = vdwg.mxu0
    %v3659 = vxor.u32 %v2497, 2147483648
    %v3660 = vmul.f32 %v3659, 1.442695
    %v3661 = vpow.pop %v3660
    %v3662 = vadd.f32 %v3661, 1.0
    %v3663 = vrcp.pop %v3662
    %v3664 = vmul.f32 1.0, %v3663
    %v3665 = vtanh.pop %v3656
    %vm3666 = vcmask 41984
    %3667 = vst.msk [vmem:[#allocation28] sm:$0x3] %vm3666, %v3664
    %vm3668 = vcmask 33792
    %3669 = vst.msk [vmem:[#allocation29] sm:$0x3] %vm3668, %v3665
    %v3670 = vld [vmem:[%s55] sm:$0x3f]
    %v3671 = vld [vmem:[%s39] sm:$0x1f]
    %v3672 = vlaneseq
    %v3673 = vshrl.u32 %v3672, 7
    %v3674 = vsub.s32 0, %v3673
    %v3675 = vrot.slane %v3670, %v3674
    %vm3676 = vcmask 39936
    %v3678 = vsel %vm3676, %v3665, 0
    %vm3680 = vcmask 1044480
    %v3682 = vsel %vm3680, %v3671, 0
    %3684 = vmatprep.subr.mxu0 0.0
    %3685 = vmatpush1.msra.mxu0 %v3682
    %3686 = vmatprep.subr.mxu0 0.0
    %3687 = vmatpush1.msra.mxu0 0.0
    %3688 = vmatprep.subr.mxu0 0.0
    %3689 = vmatpush1.msra.mxu0 0.0
    %3690 = vmatprep.subr.mxu0 0.0
    %3691 = vmatpush1.msra.mxu0 0.0
    %3692 = vmatprep.subr.mxu0 0.0
    %3693 = vmatpush1.msra.mxu0 0.0
    %3694 = vmatprep.subr.mxu0 0.0
    %3695 = vmatpush1.msra.mxu0 0.0
    %3696 = vmatprep.subr.mxu0 0.0
    %3697 = vmatpush1.msra.mxu0 0.0
    %3698 = vmatprep.subr.mxu0 0.0
    %3699 = vmatpush1.msra.mxu0 0.0
    %3700 = vmatprep.subr.mxu0 0.0
    %3701 = vmatpush1.msra.mxu0 0.0
    %3702 = vmatprep.subr.mxu0 0.0
    %3703 = vmatpush1.msra.mxu0 0.0
    %3704 = vmatprep.subr.mxu0 0.0
    %3705 = vmatpush1.msra.mxu0 0.0
    %3706 = vmatprep.subr.mxu0 0.0
    %3707 = vmatpush1.msra.mxu0 0.0
    %3708 = vmatprep.subr.mxu0 0.0
    %3709 = vmatpush1.msra.mxu0 0.0
    %3710 = vmatprep.subr.mxu0 0.0
    %3711 = vmatpush1.msra.mxu0 0.0
    %3712 = vmatprep.subr.mxu0 0.0
    %3713 = vmatpush1.msra.mxu0 0.0
    %3714 = vmatprep.subr.mxu0 0.0
    %3715 = vmatpush1.msra.mxu0 0.0
    %3716 = vmatprep.subr.mxu0 0.0
    %3717 = vmatpush1.msra.mxu0 0.0
    %3718 = vmatprep.subr.mxu0 0.0
    %3719 = vmatpush1.msra.mxu0 0.0
    %3720 = vmatprep.subr.mxu0 0.0
    %3721 = vmatpush1.msra.mxu0 0.0
    %3722 = vmatprep.subr.mxu0 0.0
    %3723 = vmatpush1.msra.mxu0 0.0
    %3724 = vmatprep.subr.mxu0 0.0
    %3725 = vmatpush1.msra.mxu0 0.0
    %3726 = vmatprep.subr.mxu0 0.0
    %3727 = vmatpush1.msra.mxu0 0.0
    %3728 = vmatprep.subr.mxu0 0.0
    %3729 = vmatpush1.msra.mxu0 0.0
    %3730 = vmatprep.subr.mxu0 0.0
    %3731 = vmatpush1.msra.mxu0 0.0
    %3732 = vmatprep.subr.mxu0 0.0
    %3733 = vmatpush1.msra.mxu0 0.0
    %3734 = vmatprep.subr.mxu0 0.0
    %3735 = vmatpush1.msra.mxu0 0.0
    %3736 = vmatprep.subr.mxu0 0.0
    %3737 = vmatpush1.msra.mxu0 0.0
    %3738 = vmatprep.subr.mxu0 0.0
    %3739 = vmatpush1.msra.mxu0 0.0
    %3740 = vmatprep.subr.mxu0 0.0
    %3741 = vmatpush1.msra.mxu0 0.0
    %3742 = vmatprep.subr.mxu0 0.0
    %3743 = vmatpush1.msra.mxu0 0.0
    %3744 = vmatprep.subr.mxu0 0.0
    %3745 = vmatpush1.msra.mxu0 0.0
    %3746 = vmatprep.subr.mxu0 0.0
    %3747 = vmatpush1.msra.mxu0 0.0
    %3748 = vmatprep.mubr.f32.mxu0 0.0
    %3749 = vmatmul.mubr.f32.gmra.mrb[0].mxu0 %v3678
    %v3750 = vpop.f32.mrb[0].mxu0
    %v3751 = vadd.f32 %v3675, %v3750
    %v3752 = vpop.f32.mrb[0].mxu0
    %3753 = vdwg.mxu0
    %v3754 = vmax.f32 %v3751, 0.0
    %v3755 = vld [vmem:[%s41] sm:$0xff]
    %v3756 = vlaneseq
    %v3757 = vshrl.u32 %v3756, 7
    %v3758 = vsub.s32 1, %v3757
    %v3759 = vrot.slane %v3670, %v3758
    %vm3760 = vcmask 64512
    %v3762 = vsel %vm3760, %v3754, 0
    %3764 = vmatprep.subr.mxu0 0.0
    %3765 = vmatpush1.msra.mxu0 %v3755
    %3766 = vmatprep.subr.mxu0 0.0
    %3767 = vmatpush1.msra.mxu0 0.0
    %3768 = vmatprep.subr.mxu0 0.0
    %3769 = vmatpush1.msra.mxu0 0.0
    %3770 = vmatprep.subr.mxu0 0.0
    %3771 = vmatpush1.msra.mxu0 0.0
    %3772 = vmatprep.subr.mxu0 0.0
    %3773 = vmatpush1.msra.mxu0 0.0
    %3774 = vmatprep.subr.mxu0 0.0
    %3775 = vmatpush1.msra.mxu0 0.0
    %3776 = vmatprep.subr.mxu0 0.0
    %3777 = vmatpush1.msra.mxu0 0.0
    %3778 = vmatprep.subr.mxu0 0.0
    %3779 = vmatpush1.msra.mxu0 0.0
    %3780 = vmatprep.subr.mxu0 0.0
    %3781 = vmatpush1.msra.mxu0 0.0
    %3782 = vmatprep.subr.mxu0 0.0
    %3783 = vmatpush1.msra.mxu0 0.0
    %3784 = vmatprep.subr.mxu0 0.0
    %3785 = vmatpush1.msra.mxu0 0.0
    %3786 = vmatprep.subr.mxu0 0.0
    %3787 = vmatpush1.msra.mxu0 0.0
    %3788 = vmatprep.subr.mxu0 0.0
    %3789 = vmatpush1.msra.mxu0 0.0
    %3790 = vmatprep.subr.mxu0 0.0
    %3791 = vmatpush1.msra.mxu0 0.0
    %3792 = vmatprep.subr.mxu0 0.0
    %3793 = vmatpush1.msra.mxu0 0.0
    %3794 = vmatprep.subr.mxu0 0.0
    %3795 = vmatpush1.msra.mxu0 0.0
    %3796 = vmatprep.subr.mxu0 0.0
    %3797 = vmatpush1.msra.mxu0 0.0
    %3798 = vmatprep.subr.mxu0 0.0
    %3799 = vmatpush1.msra.mxu0 0.0
    %3800 = vmatprep.subr.mxu0 0.0
    %3801 = vmatpush1.msra.mxu0 0.0
    %3802 = vmatprep.subr.mxu0 0.0
    %3803 = vmatpush1.msra.mxu0 0.0
    %3804 = vmatprep.subr.mxu0 0.0
    %3805 = vmatpush1.msra.mxu0 0.0
    %3806 = vmatprep.subr.mxu0 0.0
    %3807 = vmatpush1.msra.mxu0 0.0
    %3808 = vmatprep.subr.mxu0 0.0
    %3809 = vmatpush1.msra.mxu0 0.0
    %3810 = vmatprep.subr.mxu0 0.0
    %3811 = vmatpush1.msra.mxu0 0.0
    %3812 = vmatprep.subr.mxu0 0.0
    %3813 = vmatpush1.msra.mxu0 0.0
    %3814 = vmatprep.subr.mxu0 0.0
    %3815 = vmatpush1.msra.mxu0 0.0
    %3816 = vmatprep.subr.mxu0 0.0
    %3817 = vmatpush1.msra.mxu0 0.0
    %3818 = vmatprep.subr.mxu0 0.0
    %3819 = vmatpush1.msra.mxu0 0.0
    %3820 = vmatprep.subr.mxu0 0.0
    %3821 = vmatpush1.msra.mxu0 0.0
    %3822 = vmatprep.subr.mxu0 0.0
    %3823 = vmatpush1.msra.mxu0 0.0
    %3824 = vmatprep.subr.mxu0 0.0
    %3825 = vmatpush1.msra.mxu0 0.0
    %3826 = vmatprep.subr.mxu0 0.0
    %3827 = vmatpush1.msra.mxu0 0.0
    %3828 = vmatprep.mubr.f32.mxu0 0.0
    %3829 = vmatmul.mubr.f32.gmra.mrb[0].mxu0 %v3762
    %v3830 = vpop.f32.mrb[0].mxu0
    %v3831 = vadd.f32 %v3759, %v3830
    %v3832 = vpop.f32.mrb[0].mxu0
    %3833 = vdwg.mxu0
    %v3834 = vmax.f32 %v3831, 0.0
    %v3835 = vld [vmem:[%s43] sm:$0xff]
    %v3836 = vld [vmem:[%s43 + $0x8] sm:$0xf]
    %v3837 = vlaneseq
    %v3838 = vshrl.u32 %v3837, 7
    %v3839 = vsub.s32 2, %v3838
    %v3840 = vrot.slane %v3670, %v3839
    %vm3841 = vcmask 97280
    %v3843 = vsel %vm3841, %v3834, 0
    %vm3845 = vcmask 1043456
    %v3847 = vsel %vm3845, %v3836, 0
    %3849 = vmatprep.subr.mxu0 0.0
    %3850 = vmatpush1.msra.mxu0 %v3835
    %3851 = vmatprep.subr.mxu0 0.0
    %3852 = vmatpush1.msra.mxu0 %v3847
    %3853 = vmatprep.subr.mxu0 0.0
    %3854 = vmatpush1.msra.mxu0 0.0
    %3855 = vmatprep.subr.mxu0 0.0
    %3856 = vmatpush1.msra.mxu0 0.0
    %3857 = vmatprep.subr.mxu0 0.0
    %3858 = vmatpush1.msra.mxu0 0.0
    %3859 = vmatprep.subr.mxu0 0.0
    %3860 = vmatpush1.msra.mxu0 0.0
    %3861 = vmatprep.subr.mxu0 0.0
    %3862 = vmatpush1.msra.mxu0 0.0
    %3863 = vmatprep.subr.mxu0 0.0
    %3864 = vmatpush1.msra.mxu0 0.0
    %3865 = vmatprep.subr.mxu0 0.0
    %3866 = vmatpush1.msra.mxu0 0.0
    %3867 = vmatprep.subr.mxu0 0.0
    %3868 = vmatpush1.msra.mxu0 0.0
    %3869 = vmatprep.subr.mxu0 0.0
    %3870 = vmatpush1.msra.mxu0 0.0
    %3871 = vmatprep.subr.mxu0 0.0
    %3872 = vmatpush1.msra.mxu0 0.0
    %3873 = vmatprep.subr.mxu0 0.0
    %3874 = vmatpush1.msra.mxu0 0.0
    %3875 = vmatprep.subr.mxu0 0.0
    %3876 = vmatpush1.msra.mxu0 0.0
    %3877 = vmatprep.subr.mxu0 0.0
    %3878 = vmatpush1.msra.mxu0 0.0
    %3879 = vmatprep.subr.mxu0 0.0
    %3880 = vmatpush1.msra.mxu0 0.0
    %3881 = vmatprep.subr.mxu0 0.0
    %3882 = vmatpush1.msra.mxu0 0.0
    %3883 = vmatprep.subr.mxu0 0.0
    %3884 = vmatpush1.msra.mxu0 0.0
    %3885 = vmatprep.subr.mxu0 0.0
    %3886 = vmatpush1.msra.mxu0 0.0
    %3887 = vmatprep.subr.mxu0 0.0
    %3888 = vmatpush1.msra.mxu0 0.0
    %3889 = vmatprep.subr.mxu0 0.0
    %3890 = vmatpush1.msra.mxu0 0.0
    %3891 = vmatprep.subr.mxu0 0.0
    %3892 = vmatpush1.msra.mxu0 0.0
    %3893 = vmatprep.subr.mxu0 0.0
    %3894 = vmatpush1.msra.mxu0 0.0
    %3895 = vmatprep.subr.mxu0 0.0
    %3896 = vmatpush1.msra.mxu0 0.0
    %3897 = vmatprep.subr.mxu0 0.0
    %3898 = vmatpush1.msra.mxu0 0.0
    %3899 = vmatprep.subr.mxu0 0.0
    %3900 = vmatpush1.msra.mxu0 0.0
    %3901 = vmatprep.subr.mxu0 0.0
    %3902 = vmatpush1.msra.mxu0 0.0
    %3903 = vmatprep.subr.mxu0 0.0
    %3904 = vmatpush1.msra.mxu0 0.0
    %3905 = vmatprep.subr.mxu0 0.0
    %3906 = vmatpush1.msra.mxu0 0.0
    %3907 = vmatprep.subr.mxu0 0.0
    %3908 = vmatpush1.msra.mxu0 0.0
    %3909 = vmatprep.subr.mxu0 0.0
    %3910 = vmatpush1.msra.mxu0 0.0
    %3911 = vmatprep.subr.mxu0 0.0
    %3912 = vmatpush1.msra.mxu0 0.0
    %3913 = vmatprep.mubr.f32.mxu0 0.0
    %3914 = vmatmul.mubr.f32.gmra.mrb[0].mxu0 %v3843
    %v3915 = vpop.f32.mrb[0].mxu0
    %v3916 = vadd.f32 %v3840, %v3915
    %v3917 = vpop.f32.mrb[0].mxu0
    %3918 = vdwg.mxu0
    %v3919 = vmax.f32 %v3916, 0.0
    %v3920 = vld [vmem:[%s45] sm:$0xff]
    %v3921 = vlaneseq
    %v3922 = vshrl.u32 %v3921, 7
    %v3923 = vsub.s32 3, %v3922
    %v3924 = vrot.slane %v3670, %v3923
    %v3926 = vsel %vm3760, %v3919, 0
    %3928 = vmatprep.subr.mxu0 0.0
    %3929 = vmatpush1.msra.mxu0 %v3920
    %3930 = vmatprep.subr.mxu0 0.0
    %3931 = vmatpush1.msra.mxu0 0.0
    %3932 = vmatprep.subr.mxu0 0.0
    %3933 = vmatpush1.msra.mxu0 0.0
    %3934 = vmatprep.subr.mxu0 0.0
    %3935 = vmatpush1.msra.mxu0 0.0
    %3936 = vmatprep.subr.mxu0 0.0
    %3937 = vmatpush1.msra.mxu0 0.0
    %3938 = vmatprep.subr.mxu0 0.0
    %3939 = vmatpush1.msra.mxu0 0.0
    %3940 = vmatprep.subr.mxu0 0.0
    %3941 = vmatpush1.msra.mxu0 0.0
    %3942 = vmatprep.subr.mxu0 0.0
    %3943 = vmatpush1.msra.mxu0 0.0
    %3944 = vmatprep.subr.mxu0 0.0
    %3945 = vmatpush1.msra.mxu0 0.0
    %3946 = vmatprep.subr.mxu0 0.0
    %3947 = vmatpush1.msra.mxu0 0.0
    %3948 = vmatprep.subr.mxu0 0.0
    %3949 = vmatpush1.msra.mxu0 0.0
    %3950 = vmatprep.subr.mxu0 0.0
    %3951 = vmatpush1.msra.mxu0 0.0
    %3952 = vmatprep.subr.mxu0 0.0
    %3953 = vmatpush1.msra.mxu0 0.0
    %3954 = vmatprep.subr.mxu0 0.0
    %3955 = vmatpush1.msra.mxu0 0.0
    %3956 = vmatprep.subr.mxu0 0.0
    %3957 = vmatpush1.msra.mxu0 0.0
    %3958 = vmatprep.subr.mxu0 0.0
    %3959 = vmatpush1.msra.mxu0 0.0
    %3960 = vmatprep.subr.mxu0 0.0
    %3961 = vmatpush1.msra.mxu0 0.0
    %3962 = vmatprep.subr.mxu0 0.0
    %3963 = vmatpush1.msra.mxu0 0.0
    %3964 = vmatprep.subr.mxu0 0.0
    %3965 = vmatpush1.msra.mxu0 0.0
    %3966 = vmatprep.subr.mxu0 0.0
    %3967 = vmatpush1.msra.mxu0 0.0
    %3968 = vmatprep.subr.mxu0 0.0
    %3969 = vmatpush1.msra.mxu0 0.0
    %3970 = vmatprep.subr.mxu0 0.0
    %3971 = vmatpush1.msra.mxu0 0.0
    %3972 = vmatprep.subr.mxu0 0.0
    %3973 = vmatpush1.msra.mxu0 0.0
    %3974 = vmatprep.subr.mxu0 0.0
    %3975 = vmatpush1.msra.mxu0 0.0
    %3976 = vmatprep.subr.mxu0 0.0
    %3977 = vmatpush1.msra.mxu0 0.0
    %3978 = vmatprep.subr.mxu0 0.0
    %3979 = vmatpush1.msra.mxu0 0.0
    %3980 = vmatprep.subr.mxu0 0.0
    %3981 = vmatpush1.msra.mxu0 0.0
    %3982 = vmatprep.subr.mxu0 0.0
    %3983 = vmatpush1.msra.mxu0 0.0
    %3984 = vmatprep.subr.mxu0 0.0
    %3985 = vmatpush1.msra.mxu0 0.0
    %3986 = vmatprep.subr.mxu0 0.0
    %3987 = vmatpush1.msra.mxu0 0.0
    %3988 = vmatprep.subr.mxu0 0.0
    %3989 = vmatpush1.msra.mxu0 0.0
    %3990 = vmatprep.subr.mxu0 0.0
    %3991 = vmatpush1.msra.mxu0 0.0
    %3992 = vmatprep.mubr.f32.mxu0 0.0
    %3993 = vmatmul.mubr.f32.gmra.mrb[0].mxu0 %v3926
    %v3994 = vpop.f32.mrb[0].mxu0
    %v3995 = vadd.f32 %v3924, %v3994
    %v3996 = vpop.f32.mrb[0].mxu0
    %3997 = vdwg.mxu0
    %v3998 = vxor.u32 %v3995, 2147483648
    %v3999 = vmul.f32 %v3998, 1.442695
    %v4000 = vpow.pop %v3999
    %v4001 = vadd.f32 %v4000, 1.0
    %v4002 = vrcp.pop %v4001
    %v4003 = vmul.f32 1.0, %v4002
    %4004 = vst.msk [vmem:[#allocation31] sm:$0x3] %vm3666, %v4003
    %v4005 = vld [vmem:[#allocation25] sm:$0x3f]
    %v4006 = vld [vmem:[%s49] sm:$0x1f]
    %v4008 = vsel %vm3680, %v4006, 0
    %4010 = vmatprep.subr.mxu0 0.0
    %4011 = vmatpush1.msra.mxu0 %v4008
    %4012 = vmatprep.subr.mxu0 0.0
    %4013 = vmatpush1.msra.mxu0 0.0
    %4014 = vmatprep.subr.mxu0 0.0
    %4015 = vmatpush1.msra.mxu0 0.0
    %4016 = vmatprep.subr.mxu0 0.0
    %4017 = vmatpush1.msra.mxu0 0.0
    %4018 = vmatprep.subr.mxu0 0.0
    %4019 = vmatpush1.msra.mxu0 0.0
    %4020 = vmatprep.subr.mxu0 0.0
    %4021 = vmatpush1.msra.mxu0 0.0
    %4022 = vmatprep.subr.mxu0 0.0
    %4023 = vmatpush1.msra.mxu0 0.0
    %4024 = vmatprep.subr.mxu0 0.0
    %4025 = vmatpush1.msra.mxu0 0.0
    %4026 = vmatprep.subr.mxu0 0.0
    %4027 = vmatpush1.msra.mxu0 0.0
    %4028 = vmatprep.subr.mxu0 0.0
    %4029 = vmatpush1.msra.mxu0 0.0
    %4030 = vmatprep.subr.mxu0 0.0
    %4031 = vmatpush1.msra.mxu0 0.0
    %4032 = vmatprep.subr.mxu0 0.0
    %4033 = vmatpush1.msra.mxu0 0.0
    %4034 = vmatprep.subr.mxu0 0.0
    %4035 = vmatpush1.msra.mxu0 0.0
    %4036 = vmatprep.subr.mxu0 0.0
    %4037 = vmatpush1.msra.mxu0 0.0
    %4038 = vmatprep.subr.mxu0 0.0
    %4039 = vmatpush1.msra.mxu0 0.0
    %4040 = vmatprep.subr.mxu0 0.0
    %4041 = vmatpush1.msra.mxu0 0.0
    %4042 = vmatprep.subr.mxu0 0.0
    %4043 = vmatpush1.msra.mxu0 0.0
    %4044 = vmatprep.subr.mxu0 0.0
    %4045 = vmatpush1.msra.mxu0 0.0
    %4046 = vmatprep.subr.mxu0 0.0
    %4047 = vmatpush1.msra.mxu0 0.0
    %4048 = vmatprep.subr.mxu0 0.0
    %4049 = vmatpush1.msra.mxu0 0.0
    %4050 = vmatprep.subr.mxu0 0.0
    %4051 = vmatpush1.msra.mxu0 0.0
    %4052 = vmatprep.subr.mxu0 0.0
    %4053 = vmatpush1.msra.mxu0 0.0
    %4054 = vmatprep.subr.mxu0 0.0
    %4055 = vmatpush1.msra.mxu0 0.0
    %4056 = vmatprep.subr.mxu0 0.0
    %4057 = vmatpush1.msra.mxu0 0.0
    %4058 = vmatprep.subr.mxu0 0.0
    %4059 = vmatpush1.msra.mxu0 0.0
    %4060 = vmatprep.subr.mxu0 0.0
    %4061 = vmatpush1.msra.mxu0 0.0
    %4062 = vmatprep.subr.mxu0 0.0
    %4063 = vmatpush1.msra.mxu0 0.0
    %4064 = vmatprep.subr.mxu0 0.0
    %4065 = vmatpush1.msra.mxu0 0.0
    %4066 = vmatprep.subr.mxu0 0.0
    %4067 = vmatpush1.msra.mxu0 0.0
    %4068 = vmatprep.subr.mxu0 0.0
    %4069 = vmatpush1.msra.mxu0 0.0
    %4070 = vmatprep.subr.mxu0 0.0
    %4071 = vmatpush1.msra.mxu0 0.0
    %4072 = vmatprep.subr.mxu0 0.0
    %4073 = vmatpush1.msra.mxu0 0.0
    %4074 = vmatprep.mubr.f32.mxu0 0.0
    %4075 = vmatmul.mubr.f32.gmra.mrb[0].mxu0 %v3678
    %v4076 = vpop.f32.mrb[0].mxu0
    %v4077 = vadd.f32 0.0, %v4076
    %v4078 = vpop.f32.mrb[0].mxu0
    %4079 = vdwg.mxu0
    %vm4080 = vcmask 48128
    %v4082 = vsel %vm4080, %v3664, 0
    %vm4084 = vcmask 1045504
    %v4086 = vsel %vm4084, %v4005, 0
    %4088 = vmatprep.subr.mxu0 0.0
    %4089 = vmatpush1.msra.mxu0 %v4086
    %4090 = vmatprep.subr.mxu0 0.0
    %4091 = vmatpush1.msra.mxu0 0.0
    %4092 = vmatprep.subr.mxu0 0.0
    %4093 = vmatpush1.msra.mxu0 0.0
    %4094 = vmatprep.subr.mxu0 0.0
    %4095 = vmatpush1.msra.mxu0 0.0
    %4096 = vmatprep.subr.mxu0 0.0
    %4097 = vmatpush1.msra.mxu0 0.0
    %4098 = vmatprep.subr.mxu0 0.0
    %4099 = vmatpush1.msra.mxu0 0.0
    %4100 = vmatprep.subr.mxu0 0.0
    %4101 = vmatpush1.msra.mxu0 0.0
    %4102 = vmatprep.subr.mxu0 0.0
    %4103 = vmatpush1.msra.mxu0 0.0
    %4104 = vmatprep.subr.mxu0 0.0
    %4105 = vmatpush1.msra.mxu0 0.0
    %4106 = vmatprep.subr.mxu0 0.0
    %4107 = vmatpush1.msra.mxu0 0.0
    %4108 = vmatprep.subr.mxu0 0.0
    %4109 = vmatpush1.msra.mxu0 0.0
    %4110 = vmatprep.subr.mxu0 0.0
    %4111 = vmatpush1.msra.mxu0 0.0
    %4112 = vmatprep.subr.mxu0 0.0
    %4113 = vmatpush1.msra.mxu0 0.0
    %4114 = vmatprep.subr.mxu0 0.0
    %4115 = vmatpush1.msra.mxu0 0.0
    %4116 = vmatprep.subr.mxu0 0.0
    %4117 = vmatpush1.msra.mxu0 0.0
    %4118 = vmatprep.subr.mxu0 0.0
    %4119 = vmatpush1.msra.mxu0 0.0
    %4120 = vmatprep.subr.mxu0 0.0
    %4121 = vmatpush1.msra.mxu0 0.0
    %4122 = vmatprep.subr.mxu0 0.0
    %4123 = vmatpush1.msra.mxu0 0.0
    %4124 = vmatprep.subr.mxu0 0.0
    %4125 = vmatpush1.msra.mxu0 0.0
    %4126 = vmatprep.subr.mxu0 0.0
    %4127 = vmatpush1.msra.mxu0 0.0
    %4128 = vmatprep.subr.mxu0 0.0
    %4129 = vmatpush1.msra.mxu0 0.0
    %4130 = vmatprep.subr.mxu0 0.0
    %4131 = vmatpush1.msra.mxu0 0.0
    %4132 = vmatprep.subr.mxu0 0.0
    %4133 = vmatpush1.msra.mxu0 0.0
    %4134 = vmatprep.subr.mxu0 0.0
    %4135 = vmatpush1.msra.mxu0 0.0
    %4136 = vmatprep.subr.mxu0 0.0
    %4137 = vmatpush1.msra.mxu0 0.0
    %4138 = vmatprep.subr.mxu0 0.0
    %4139 = vmatpush1.msra.mxu0 0.0
    %4140 = vmatprep.subr.mxu0 0.0
    %4141 = vmatpush1.msra.mxu0 0.0
    %4142 = vmatprep.subr.mxu0 0.0
    %4143 = vmatpush1.msra.mxu0 0.0
    %4144 = vmatprep.subr.mxu0 0.0
    %4145 = vmatpush1.msra.mxu0 0.0
    %4146 = vmatprep.subr.mxu0 0.0
    %4147 = vmatpush1.msra.mxu0 0.0
    %4148 = vmatprep.subr.mxu0 0.0
    %4149 = vmatpush1.msra.mxu0 0.0
    %4150 = vmatprep.subr.mxu0 0.0
    %4151 = vmatpush1.msra.mxu0 0.0
    %4152 = vmatprep.mubr.f32.mxu0 0.0
    %4153 = vmatmul.mubr.f32.gmra.mrb[0].mxu0 %v4082
    %v4154 = vpop.f32.mrb[0].mxu0
    %v4155 = vadd.f32 %v4077, %v4154
    %v4156 = vpop.f32.mrb[0].mxu0
    %4157 = vdwg.mxu0
    %v4158 = vld [vmem:[#allocation26] sm:$0x7]
    %vm4159 = vcmask 23552
    %v4161 = vsel %vm4159, %v340, 0
    %vm4163 = vcmask 1042432
    %v4165 = vsel %vm4163, %v4158, 0
    %4167 = vmatprep.subr.mxu0 0.0
    %4168 = vmatpush1.msra.mxu0 %v4165
    %4169 = vmatprep.subr.mxu0 0.0
    %4170 = vmatpush1.msra.mxu0 0.0
    %4171 = vmatprep.subr.mxu0 0.0
    %4172 = vmatpush1.msra.mxu0 0.0
    %4173 = vmatprep.subr.mxu0 0.0
    %4174 = vmatpush1.msra.mxu0 0.0
    %4175 = vmatprep.subr.mxu0 0.0
    %4176 = vmatpush1.msra.mxu0 0.0
    %4177 = vmatprep.subr.mxu0 0.0
    %4178 = vmatpush1.msra.mxu0 0.0
    %4179 = vmatprep.subr.mxu0 0.0
    %4180 = vmatpush1.msra.mxu0 0.0
    %4181 = vmatprep.subr.mxu0 0.0
    %4182 = vmatpush1.msra.mxu0 0.0
    %4183 = vmatprep.subr.mxu0 0.0
    %4184 = vmatpush1.msra.mxu0 0.0
    %4185 = vmatprep.subr.mxu0 0.0
    %4186 = vmatpush1.msra.mxu0 0.0
    %4187 = vmatprep.subr.mxu0 0.0
    %4188 = vmatpush1.msra.mxu0 0.0
    %4189 = vmatprep.subr.mxu0 0.0
    %4190 = vmatpush1.msra.mxu0 0.0
    %4191 = vmatprep.subr.mxu0 0.0
    %4192 = vmatpush1.msra.mxu0 0.0
    %4193 = vmatprep.subr.mxu0 0.0
    %4194 = vmatpush1.msra.mxu0 0.0
    %4195 = vmatprep.subr.mxu0 0.0
    %4196 = vmatpush1.msra.mxu0 0.0
    %4197 = vmatprep.subr.mxu0 0.0
    %4198 = vmatpush1.msra.mxu0 0.0
    %4199 = vmatprep.subr.mxu0 0.0
    %4200 = vmatpush1.msra.mxu0 0.0
    %4201 = vmatprep.subr.mxu0 0.0
    %4202 = vmatpush1.msra.mxu0 0.0
    %4203 = vmatprep.subr.mxu0 0.0
    %4204 = vmatpush1.msra.mxu0 0.0
    %4205 = vmatprep.subr.mxu0 0.0
    %4206 = vmatpush1.msra.mxu0 0.0
    %4207 = vmatprep.subr.mxu0 0.0
    %4208 = vmatpush1.msra.mxu0 0.0
    %4209 = vmatprep.subr.mxu0 0.0
    %4210 = vmatpush1.msra.mxu0 0.0
    %4211 = vmatprep.subr.mxu0 0.0
    %4212 = vmatpush1.msra.mxu0 0.0
    %4213 = vmatprep.subr.mxu0 0.0
    %4214 = vmatpush1.msra.mxu0 0.0
    %4215 = vmatprep.subr.mxu0 0.0
    %4216 = vmatpush1.msra.mxu0 0.0
    %4217 = vmatprep.subr.mxu0 0.0
    %4218 = vmatpush1.msra.mxu0 0.0
    %4219 = vmatprep.subr.mxu0 0.0
    %4220 = vmatpush1.msra.mxu0 0.0
    %4221 = vmatprep.subr.mxu0 0.0
    %4222 = vmatpush1.msra.mxu0 0.0
    %4223 = vmatprep.subr.mxu0 0.0
    %4224 = vmatpush1.msra.mxu0 0.0
    %4225 = vmatprep.subr.mxu0 0.0
    %4226 = vmatpush1.msra.mxu0 0.0
    %4227 = vmatprep.subr.mxu0 0.0
    %4228 = vmatpush1.msra.mxu0 0.0
    %4229 = vmatprep.subr.mxu0 0.0
    %4230 = vmatpush1.msra.mxu0 0.0
    %4231 = vmatprep.mubr.f32.mxu0 0.0
    %4232 = vmatmul.mubr.f32.gmra.mrb[0].mxu0 %v4161
    %v4233 = vpop.f32.mrb[0].mxu0
    %v4234 = vadd.f32 0.0, %v4233
    %v4235 = vpop.f32.mrb[0].mxu0
    %4236 = vdwg.mxu0
    %v4237 = vadd.f32 %v4155, %v4234
    %v4238 = vlaneseq
    %v4239 = vshrl.u32 %v4238, 7
    %v4240 = vsub.s32 4, %v4239
    %v4241 = vrot.slane %v3670, %v4240
    %v4242 = vadd.f32 %v4237, %v4241
    %v4243 = vmax.f32 %v4242, 0.0
    %v4244 = vld [vmem:[%s53] sm:$0xff]
    %v4245 = vld [vmem:[%s53 + $0x8] sm:$0xff]
    %v4246 = vld [vmem:[%s53 + $0x10] sm:$0xff]
    %v4247 = vld [vmem:[%s53 + $0x18] sm:$0xff]
    %v4248 = vlaneseq
    %v4249 = vshrl.u32 %v4248, 7
    %v4250 = vsub.s32 5, %v4249
    %v4251 = vrot.slane %v3670, %v4250
    %vm4252 = vcmask 261120
    %v4254 = vsel %vm4252, %v4243, 0
    %4256 = vmatprep.subr.mxu0 0.0
    %4257 = vmatpush1.msra.mxu0 %v4244
    %4258 = vmatprep.subr.mxu0 0.0
    %4259 = vmatpush1.msra.mxu0 %v4245
    %4260 = vmatprep.subr.mxu0 0.0
    %4261 = vmatpush1.msra.mxu0 %v4246
    %4262 = vmatprep.subr.mxu0 0.0
    %4263 = vmatpush1.msra.mxu0 %v4247
    %4264 = vmatprep.subr.mxu0 0.0
    %4265 = vmatpush1.msra.mxu0 0.0
    %4266 = vmatprep.subr.mxu0 0.0
    %4267 = vmatpush1.msra.mxu0 0.0
    %4268 = vmatprep.subr.mxu0 0.0
    %4269 = vmatpush1.msra.mxu0 0.0
    %4270 = vmatprep.subr.mxu0 0.0
    %4271 = vmatpush1.msra.mxu0 0.0
    %4272 = vmatprep.subr.mxu0 0.0
    %4273 = vmatpush1.msra.mxu0 0.0
    %4274 = vmatprep.subr.mxu0 0.0
    %4275 = vmatpush1.msra.mxu0 0.0
    %4276 = vmatprep.subr.mxu0 0.0
    %4277 = vmatpush1.msra.mxu0 0.0
    %4278 = vmatprep.subr.mxu0 0.0
    %4279 = vmatpush1.msra.mxu0 0.0
    %4280 = vmatprep.subr.mxu0 0.0
    %4281 = vmatpush1.msra.mxu0 0.0
    %4282 = vmatprep.subr.mxu0 0.0
    %4283 = vmatpush1.msra.mxu0 0.0
    %4284 = vmatprep.subr.mxu0 0.0
    %4285 = vmatpush1.msra.mxu0 0.0
    %4286 = vmatprep.subr.mxu0 0.0
    %4287 = vmatpush1.msra.mxu0 0.0
    %4288 = vmatprep.subr.mxu0 0.0
    %4289 = vmatpush1.msra.mxu0 0.0
    %4290 = vmatprep.subr.mxu0 0.0
    %4291 = vmatpush1.msra.mxu0 0.0
    %4292 = vmatprep.subr.mxu0 0.0
    %4293 = vmatpush1.msra.mxu0 0.0
    %4294 = vmatprep.subr.mxu0 0.0
    %4295 = vmatpush1.msra.mxu0 0.0
    %4296 = vmatprep.subr.mxu0 0.0
    %4297 = vmatpush1.msra.mxu0 0.0
    %4298 = vmatprep.subr.mxu0 0.0
    %4299 = vmatpush1.msra.mxu0 0.0
    %4300 = vmatprep.subr.mxu0 0.0
    %4301 = vmatpush1.msra.mxu0 0.0
    %4302 = vmatprep.subr.mxu0 0.0
    %4303 = vmatpush1.msra.mxu0 0.0
    %4304 = vmatprep.subr.mxu0 0.0
    %4305 = vmatpush1.msra.mxu0 0.0
    %4306 = vmatprep.subr.mxu0 0.0
    %4307 = vmatpush1.msra.mxu0 0.0
    %4308 = vmatprep.subr.mxu0 0.0
    %4309 = vmatpush1.msra.mxu0 0.0
    %4310 = vmatprep.subr.mxu0 0.0
    %4311 = vmatpush1.msra.mxu0 0.0
    %4312 = vmatprep.subr.mxu0 0.0
    %4313 = vmatpush1.msra.mxu0 0.0
    %4314 = vmatprep.subr.mxu0 0.0
    %4315 = vmatpush1.msra.mxu0 0.0
    %4316 = vmatprep.subr.mxu0 0.0
    %4317 = vmatpush1.msra.mxu0 0.0
    %4318 = vmatprep.subr.mxu0 0.0
    %4319 = vmatpush1.msra.mxu0 0.0
    %4320 = vmatprep.mubr.f32.mxu0 0.0
    %4321 = vmatmul.mubr.f32.gmra.mrb[0].mxu0 %v4254
    %v4322 = vpop.f32.mrb[0].mxu0
    %v4323 = vadd.f32 %v4251, %v4322
    %v4324 = vpop.f32.mrb[0].mxu0
    %4325 = vdwg.mxu0
    %vm4326 = vcmask 1024
    %4327 = vst.msk [vmem:[%s65] sm:$0x3] %vm4326, %v4323
    %v4328 = vxor.u32 %v4323, 2147483648
    %v4329 = vmul.f32 %v4328, 1.442695
    %v4330 = vpow.pop %v4329
    %v4331 = vadd.f32 %v4330, 1.0
    %v4332 = vrcp.pop %v4331
    %v4333 = vmul.f32 1.0, %v4332
    %4334 = vst.msk [vmem:[%s63] sm:$0x3] %vm4326, %v4333
    // Predicated region
    $region178: #{tpu_custom_call.1} parent=1 // pred_check
      _
    $region179: #{tpu_custom_call.1} parent=1 // pred_check_branch
      %4336 = sbr.rel (0) target = $region181
    $region180: #{tpu_custom_call.1} parent=1 // pred_region
      %s4338 = ssub.s32 32, 32
      %4339 = vsyncadd [#allocation4], %s4338
      %s4341 = sshll.u32 [#allocation28], 4
      %s4342 = int_to_ptr.vmem [resolvable:$true] %s4341
      %4344 = dma.vmem_to_hbm [thread:$0]  %s4342, 32, %s57, [#allocation4]
    $region181: #{tpu_custom_call.1} parent=1 // pred_fallthru
      _
    // Predicated region
    $region182: #{tpu_custom_call.1} parent=1 // pred_check
      _
    $region183: #{tpu_custom_call.1} parent=1 // pred_check_branch
      %4346 = sbr.rel (0) target = $region185
    $region184: #{tpu_custom_call.1} parent=1 // pred_region
      %s4348 = ssub.s32 32, 32
      %4349 = vsyncadd [#allocation30], %s4348
      %s4351 = sshll.u32 [#allocation29], 4
      %s4352 = int_to_ptr.vmem [resolvable:$true] %s4351
      %4354 = dma.vmem_to_hbm [thread:$0]  %s4352, 32, %s59, [#allocation30]
    $region185: #{tpu_custom_call.1} parent=1 // pred_fallthru
      _
    // Predicated region
    $region186: #{tpu_custom_call.1} parent=1 // pred_check
      _
    $region187: #{tpu_custom_call.1} parent=1 // pred_check_branch
      %4356 = sbr.rel (0) target = $region189
    $region188: #{tpu_custom_call.1} parent=1 // pred_region
      %s4358 = ssub.s32 32, 32
      %4359 = vsyncadd [#allocation30], %s4358
      %s4361 = sshll.u32 [#allocation31], 4
      %s4362 = int_to_ptr.vmem [resolvable:$true] %s4361
      %4364 = dma.vmem_to_hbm [thread:$0]  %s4362, 32, %s61, [#allocation30]
    $region189: #{tpu_custom_call.1} parent=1 // pred_fallthru
      _
    // Predicated region
    $region190: #{tpu_custom_call.1} parent=1 // pred_check
      _
    $region191: #{tpu_custom_call.1} parent=1 // pred_check_branch
      %4366 = sbr.rel (0) target = $region193
    $region192: #{tpu_custom_call.1} parent=1 // pred_region
      _
    $region193: #{tpu_custom_call.1} parent=1 // pred_fallthru
      _
    // Predicated region
    $region194: #{tpu_custom_call.1} parent=1 // pred_check
      _
    $region195: #{tpu_custom_call.1} parent=1 // pred_check_branch
      %4368 = sbr.rel (0) target = $region197
    $region196: #{tpu_custom_call.1} parent=1 // pred_region
      _
    $region197: #{tpu_custom_call.1} parent=1 // pred_fallthru
      _
    // Predicated region
    $region198: #{tpu_custom_call.1} parent=1 // pred_check
      _
    $region199: #{tpu_custom_call.1} parent=1 // pred_check_branch
      %4370 = sbr.rel (0) target = $region201
    $region200: #{tpu_custom_call.1} parent=1 // pred_region
      %4371 = dma.done [#allocation4], 32
    $region201: #{tpu_custom_call.1} parent=1 // pred_fallthru
      _
    // Predicated region
    $region202: #{tpu_custom_call.1} parent=1 // pred_check
      _
    $region203: #{tpu_custom_call.1} parent=1 // pred_check_branch
      %4373 = sbr.rel (0) target = $region205
    $region204: #{tpu_custom_call.1} parent=1 // pred_region
      %4374 = dma.done [#allocation30], 32
    $region205: #{tpu_custom_call.1} parent=1 // pred_fallthru
      _
    // Predicated region
    $region206: #{tpu_custom_call.1} parent=1 // pred_check
      _
    $region207: #{tpu_custom_call.1} parent=1 // pred_check_branch
      %4376 = sbr.rel (0) target = $region209
    $region208: #{tpu_custom_call.1} parent=1 // pred_region
      %4377 = dma.done [#allocation30], 32
    $region209: #{tpu_custom_call.1} parent=1 // pred_fallthru
      _
    // Predicated region
    $region210: #{tpu_custom_call.1} parent=1 // pred_check
      _
    $region211: #{tpu_custom_call.1} parent=1 // pred_check_branch
      %4379 = sbr.rel (0) target = $region213
    $region212: #{tpu_custom_call.1} parent=1 // pred_region
      _
    $region213: #{tpu_custom_call.1} parent=1 // pred_fallthru
      _
    // Predicated region
    $region214: #{tpu_custom_call.1} parent=1 // pred_check
      _
    $region215: #{tpu_custom_call.1} parent=1 // pred_check_branch
      %4381 = sbr.rel (0) target = $region217
    $region216: #{tpu_custom_call.1} parent=1 // pred_region
      _
    $region217: #{tpu_custom_call.1} parent=1 // pred_fallthru
      _
    %4382 = vsyncpa [#allocation3], 1
    %4383 = vsyncpa [#allocation6], 1
    %4384 = vsyncpa [#allocation9], 1
    %4385 = vsyncpa [#allocation12], 1
    %4386 = vsyncpa [#allocation15], 1
    %4387 = vsyncpa [#allocation18], 1
    %4388 = vsyncpa [#allocation21], 1
    %4389 = vsyncpa [#allocation24], 1
    %4390 = vsyncpa [#allocation27], 1
    %4391 = vsyncpa [#allocation4], 1
    %4392 = vsyncpa [#allocation30], 1

</llo_original>
